<compile_context>
chip_gen: v7x
topology: tpu7x:2x2x1
jax: 0.10.0
libtpu: 0.0.40
codegen_flags: <defaults>
</compile_context>

<pallas_src>
import functools

import jax
import jax.numpy as jnp
from jax.experimental import pallas as pl
from jax.experimental.pallas import tpu as pltpu


# Set to jnp.bfloat16 on v6e/v7x for ~2x MXU throughput (accumulation stays
# f32).  Kept f32 here so the strict numerical check below passes everywhere.
COMPUTE_DTYPE = jnp.float32

TM_MAX = 512   # rows of output per tile (sublane axis)
TK_MAX = 512   # reduction tile (K axis)


def _round_up(x, m):
    return (x + m - 1) // m * m


def _pick_tm(m):
    return TM_MAX if m >= TM_MAX else _round_up(m, 8)


def _pick_tk(k_pad):
    for tk in (512, 384, 256, 128):
        if k_pad % tk == 0:
            return tk
    return 128  # unreachable: k_pad is always a multiple of 128


# ----------------------------------------------------------------------------
# Pallas kernels
# ----------------------------------------------------------------------------
def _conv_mm_kernel(*refs, has_bias, with_stats, negative_slope):
    """Tiled matmul over grid=(M_tiles, K_tiles).

    acc += x_tile @ w_tile ; on the last K step the epilogue adds bias,
    applies LeakyReLU (if fused) and writes the (tm, Cpad) output tile plus
    (optionally) the per-tile sum / sum-of-squares used for BatchNorm stats.
    """
    i = 0
    x_ref = refs[i]; i += 1
    w_ref = refs[i]; i += 1
    b_ref = None
    if has_bias:
        b_ref = refs[i]; i += 1
    o_ref = refs[i]; i += 1
    stats_ref = None
    if with_stats:
        stats_ref = refs[i]; i += 1
    acc_ref = refs[i]

    k = pl.program_id(1)

    @pl.when(k == 0)
    def _():
        acc_ref[...] = jnp.zeros_like(acc_ref)

    acc_ref[...] += jnp.dot(x_ref[...], w_ref[...],
                            preferred_element_type=jnp.float32)

    @pl.when(k == pl.num_programs(1) - 1)
    def _():
        y = acc_ref[...]
        if has_bias:
            y = y + b_ref[...]
        if negative_slope is not None:
            y = jnp.where(y >= 0.0, y, negative_slope * y)
        o_ref[...] = y
        if with_stats:
            s1 = jnp.sum(y, axis=0, keepdims=True)        # (1, Cpad)
            s2 = jnp.sum(y * y, axis=0, keepdims=True)    # (1, Cpad)
            stats = jnp.concatenate([s1, s2], axis=0)     # (2, Cpad)
            stats_ref[...] = stats.reshape(stats_ref.shape)


def _bn_apply_lrelu_kernel(x_ref, scale_ref, shift_ref, o_ref, *, negative_slope):
    """y = x * scale + shift ; LeakyReLU.  scale/shift fold gamma, beta, mean,
    rsqrt(var+eps) (computed from the fused-stats output)."""
    y = x_ref[...] * scale_ref[...] + shift_ref[...]
    o_ref[...] = jnp.where(y >= 0.0, y, negative_slope * y)


# ----------------------------------------------------------------------------
# Pallas wrappers
# ----------------------------------------------------------------------------
def pallas_conv_matmul(patches, w_flat, bias, *, negative_slope, with_stats,
                       tm, tk):
    m_pad, k_pad = patches.shape
    c_pad = w_flat.shape[1]
    nm, nk = m_pad // tm, k_pad // tk

    kernel = functools.partial(_conv_mm_kernel,
                               has_bias=bias is not None,
                               with_stats=with_stats,
                               negative_slope=negative_slope)

    in_specs = [pl.BlockSpec((tm, tk), lambda m, k: (m, k)),
                pl.BlockSpec((tk, c_pad), lambda m, k: (k, 0))]
    args = [patches, w_flat]
    if bias is not None:
        in_specs.append(pl.BlockSpec((1, c_pad), lambda m, k: (0, 0)))
        args.append(bias)

    out_shape = [jax.ShapeDtypeStruct((m_pad, c_pad), jnp.float32)]
    out_specs = [pl.BlockSpec((tm, c_pad), lambda m, k: (m, 0))]
    if with_stats:
        out_shape.append(jax.ShapeDtypeStruct((nm, 2, c_pad), jnp.float32))
        out_specs.append(pl.BlockSpec((1, 2, c_pad), lambda m, k: (m, 0, 0)))

    return pl.pallas_call(
        kernel,
        grid=(nm, nk),
        in_specs=in_specs,
        out_specs=out_specs,
        out_shape=out_shape,
        scratch_shapes=[pltpu.VMEM((tm, c_pad), jnp.float32)],
        compiler_params=pltpu.CompilerParams(
            dimension_semantics=("parallel", "arbitrary")),
    )(*args)


def pallas_bn_lrelu_apply(x_flat, scale, shift, *, tm, negative_slope):
    m_pad, c_pad = x_flat.shape
    nm = m_pad // tm
    kernel = functools.partial(_bn_apply_lrelu_kernel,
                               negative_slope=negative_slope)
    return pl.pallas_call(
        kernel,
        grid=(nm,),
        in_specs=[pl.BlockSpec((tm, c_pad), lambda m: (m, 0)),
                  pl.BlockSpec((1, c_pad), lambda m: (0, 0)),
                  pl.BlockSpec((1, c_pad), lambda m: (0, 0))],
        out_specs=pl.BlockSpec((tm, c_pad), lambda m: (m, 0)),
        out_shape=jax.ShapeDtypeStruct((m_pad, c_pad), jnp.float32),
        compiler_params=pltpu.CompilerParams(
            dimension_semantics=("parallel",)),
    )(x_flat, scale, shift)


# ----------------------------------------------------------------------------
# Layer forward (channels-last activations)
# ----------------------------------------------------------------------------
def conv_layer_forward(x_nhwc, lp, *, negative_slope=0.2, eps=1e-5):
    n, h, w, c = x_nhwc.shape
    s = lp["stride"]
    kh = kw = 4
    pad = 1
    ho = (h + 2 * pad - kh) // s + 1
    wo = (w + 2 * pad - kw) // s + 1
    m = n * ho * wo
    k = kh * kw * c
    k_pad, c_pad = lp["w_flat"].shape
    cout = lp["cout"]

    # Channels-last, tap-major im2col (feature order = (kh, kw, cin), matching
    # the pre-flattened weight).  No NCHW transposes of the activation.
    xp = jnp.pad(x_nhwc, ((0, 0), (pad, pad), (pad, pad), (0, 0)))
    cols = [xp[:, i:i + s * ho:s, j:j + s * wo:s, :]
            for i in range(kh) for j in range(kw)]
    patches = jnp.concatenate(cols, axis=-1).reshape(m, k)
    # TODO(synk): the im2col matrix is still materialized by XLA; folding the
    # 16 taps into the matmul's K grid axis (stride-phase-decomposed input +
    # data-dependent index_map) would remove this residual HBM blowup.

    tm = _pick_tm(m)
    tk = _pick_tk(k_pad)
    m_pad = _round_up(m, tm)
    patches = jnp.pad(patches, ((0, m_pad - m), (0, k_pad - k)))
    patches = patches.astype(COMPUTE_DTYPE)

    with_stats = lp["gamma"] is not None
    fused_slope = negative_slope if (lp["has_act"] and not with_stats) else None

    outs = pallas_conv_matmul(patches, lp["w_flat"], lp["bias"],
                              negative_slope=fused_slope,
                              with_stats=with_stats, tm=tm, tk=tk)

    if with_stats:
        out_flat, part_stats = outs[0], outs[1]
        sums = jnp.sum(part_stats, axis=0)                       # (2, Cpad)
        mean = sums[0] / m                                       # zero-padded
        var = jnp.maximum(sums[1] / m - mean * mean, 0.0)        # rows add 0
        scale = lp["gamma"] * jax.lax.rsqrt(var + eps)
        shift = lp["beta"] - mean * scale
        out_flat = pallas_bn_lrelu_apply(out_flat,
                                         scale.reshape(1, c_pad),
                                         shift.reshape(1, c_pad),
                                         tm=tm, negative_slope=negative_slope)
    else:
        out_flat = outs[0]

    return out_flat[:m, :cout].reshape(n, ho, wo, cout)


def discriminator_forward(x_nchw, pallas_params, negative_slope=0.2, eps=1e-5):
    # Single layout change at each boundary; activations stay channels-last.
    x = jnp.transpose(x_nchw, (0, 2, 3, 1))
    for lp in pallas_params:
        x = conv_layer_forward(x, lp, negative_slope=negative_slope, eps=eps)
    return jnp.transpose(x, (0, 3, 1, 2))
    # TODO(synk): use_sigmoid / gpu_ids data_parallel branches are off by default.


# ----------------------------------------------------------------------------
# Parameters
# ----------------------------------------------------------------------------
def build_params(key, input_nc, ndf=64, n_layers=3):
    """Mirror NLayerDiscriminator.__init__ (BatchNorm => use_bias=False)."""
    cfg = [(input_nc, ndf, 2, True, False, True)]                # conv + LReLU
    nf_mult = 1
    for n in range(1, n_layers):
        nf_mult_prev, nf_mult = nf_mult, min(2 ** n, 8)
        cfg.append((ndf * nf_mult_prev, ndf * nf_mult, 2, False, True, True))
    nf_mult_prev, nf_mult = nf_mult, min(2 ** n_layers, 8)
    cfg.append((ndf * nf_mult_prev, ndf * nf_mult, 1, False, True, True))
    cfg.append((ndf * nf_mult, 1, 1, True, False, False))        # final conv

    params = []
    for (cin, cout, stride, has_bias, has_norm, has_act) in cfg:
        key, k1, k2, k3, k4 = jax.random.split(key, 5)
        fan_in = cin * 4 * 4
        bound = 1.0 / (fan_in ** 0.5)
        w = jax.random.uniform(k1, (cout, cin, 4, 4), jnp.float32, -bound, bound)
        b = (jax.random.uniform(k2, (cout,), jnp.float32, -bound, bound)
             if has_bias else None)
        gamma = (1.0 + 0.1 * jax.random.normal(k3, (cout,), jnp.float32)
                 if has_norm else None)
        beta = (0.1 * jax.random.normal(k4, (cout,), jnp.float32)
                if has_norm else None)
        params.append(dict(w=w, b=b, gamma=gamma, beta=beta, stride=stride,
                           has_norm=has_norm, has_act=has_act,
                           cin=cin, cout=cout))
    return params


def prepare_pallas_params(params):
    """Hoist per-layer weight flattening out of the forward path and pad Cout
    (and K) to multiples of 128 for lane-dense MXU tiles / stores."""
    prepped = []
    for p in params:
        cout, cin = p["cout"], p["cin"]
        k = 16 * cin
        k_pad = _round_up(k, 128)
        c_pad = _round_up(cout, 128)
        # (Cout, Cin, kh, kw) -> (kh, kw, Cin, Cout) -> (K, Cout): matches the
        # tap-major, channels-last im2col feature ordering.
        w_flat = jnp.transpose(p["w"], (2, 3, 1, 0)).reshape(k, cout)
        w_flat = jnp.pad(w_flat, ((0, k_pad - k), (0, c_pad - cout)))
        w_flat = w_flat.astype(COMPUTE_DTYPE)
        bias = (jnp.pad(p["b"], (0, c_pad - cout)).reshape(1, c_pad)
                if p["b"] is not None else None)
        gamma = (jnp.pad(p["gamma"], (0, c_pad - cout))
                 if p["gamma"] is not None else None)
        beta = (jnp.pad(p["beta"], (0, c_pad - cout))
                if p["beta"] is not None else None)
        prepped.append(dict(w_flat=w_flat, bias=bias, gamma=gamma, beta=beta,
                            stride=p["stride"], has_act=p["has_act"],
                            cout=cout))
    return prepped


# ----------------------------------------------------------------------------
# Pure-JAX reference (for correctness check)
# ----------------------------------------------------------------------------
def reference_forward(x, params, negative_slope=0.2, eps=1e-5):
    def conv(x, w, b, stride):
        y = jax.lax.conv_general_dilated(
            x, w, window_strides=(stride, stride), padding=[(1, 1), (1, 1)],
            dimension_numbers=("NCHW", "OIHW", "NCHW"),
            precision=jax.lax.Precision.HIGHEST)
        if b is not None:
            y = y + b.reshape(1, -1, 1, 1)
        return y

    def lrelu(v):
        return jnp.where(v >= 0, v, negative_slope * v)

    def bn(v, gamma, beta):
        mean = jnp.mean(v, axis=(0, 2, 3), keepdims=True)
        var = jnp.mean(jnp.square(v - mean), axis=(0, 2, 3), keepdims=True)
        return (gamma.reshape(1, -1, 1, 1) * (v - mean) * jax.lax.rsqrt(var + eps)
                + beta.reshape(1, -1, 1, 1))

    for p in params:
        x = conv(x, p["w"], p["b"], p["stride"])
        if p["has_norm"]:
            x = bn(x, p["gamma"], p["beta"])
        if p["has_act"]:
            x = lrelu(x)
    return x


# ----------------------------------------------------------------------------
if __name__ == "__main__":
    key = jax.random.PRNGKey(0)
    k_x, k_p = jax.random.split(key)

    input_nc, ndf, n_layers = 3, 8, 3
    x = jax.random.normal(k_x, (2, input_nc, 32, 32), jnp.float32)   # NCHW

    params = build_params(k_p, input_nc, ndf=ndf, n_layers=n_layers)
    pallas_params = prepare_pallas_params(params)

    fwd = jax.jit(lambda inp: discriminator_forward(inp, pallas_params))
    out = jax.block_until_ready(fwd(x))

    ref = reference_forward(x, params)
    assert out.shape == ref.shape == (2, 1, 2, 2), out.shape
    max_err = float(jnp.max(jnp.abs(out - ref)))
    assert jnp.allclose(out, ref, atol=2e-2, rtol=2e-2), max_err

    print("KERNEL_OK")
</pallas_src>

<mosaic_0001>
module attributes {stable_mosaic.version = 11 : i64} {
  func.func @_conv_mm_kernel(%arg0: i32, %arg1: i32, %arg2: memref<512x128xf32, #tpu.memory_space<vmem>>, %arg3: memref<128x128xf32, #tpu.memory_space<vmem>>, %arg4: memref<1x128xf32, #tpu.memory_space<vmem>>, %arg5: memref<512x128xf32, #tpu.memory_space<vmem>>, %arg6: memref<512x128xf32, #tpu.memory_space<vmem>>) attributes {dimension_semantics = [#tpu.dimension_semantics<parallel>, #tpu.dimension_semantics<arbitrary>], iteration_bounds = array<i64: 1, 1>, scalar_prefetch = 0 : i64, scratch_operands = 1 : i64, tpu.core_type = #tpu.core_type<tc>, window_params = [{transform_indices = @transform_0, window_bounds = array<i64: 512, 128>}, {transform_indices = @transform_1, window_bounds = array<i64: 128, 128>}, {pipeline_mode = #tpu.pipeline_mode<synchronous>, transform_indices = @transform_2, window_bounds = array<i64: 1, 128>}, {transform_indices = @transform_3, window_bounds = array<i64: 512, 128>}]} {
    %c0_i32 = arith.constant 0 : i32
    %0 = arith.cmpi eq, %arg1, %c0_i32 : i32
    %1 = arith.extui %0 : i1 to i32
    %c0_i32_0 = arith.constant 0 : i32
    %2 = arith.cmpi ne, %1, %c0_i32_0 : i32
    scf.if %2 {
      %cst_10 = arith.constant 0.000000e+00 : f32
      %12 = vector.broadcast %cst_10 : f32 to vector<512x128xf32>
      %c0_11 = arith.constant 0 : index
      %c0_12 = arith.constant 0 : index
      %13 = vector.load %arg6[%c0_11, %c0_12] : memref<512x128xf32, #tpu.memory_space<vmem>>, vector<512x128xf32>
      tpu.vector_store %arg6[%c0_11, %c0_12], %12 {strides = array<i32>} : memref<512x128xf32, #tpu.memory_space<vmem>>, vector<512x128xf32>,
    } else {
    }
    %c0 = arith.constant 0 : index
    %c0_1 = arith.constant 0 : index
    %3 = vector.load %arg6[%c0, %c0_1] : memref<512x128xf32, #tpu.memory_space<vmem>>, vector<512x128xf32>
    %c0_2 = arith.constant 0 : index
    %c0_3 = arith.constant 0 : index
    %4 = vector.load %arg2[%c0_2, %c0_3] : memref<512x128xf32, #tpu.memory_space<vmem>>, vector<512x128xf32>
    %c0_4 = arith.constant 0 : index
    %c0_5 = arith.constant 0 : index
    %5 = vector.load %arg3[%c0_4, %c0_5] : memref<128x128xf32, #tpu.memory_space<vmem>>, vector<128x128xf32>
    %cst = arith.constant dense<0.000000e+00> : vector<512x128xf32>
    %6 = tpu.matmul %4, %5, %cst {dimension_numbers = #tpu.dot_dimension_numbers<[1], [0], [0], [1], [0, 0, 1, 1], [], []>} : vector<512x128xf32>, vector<128x128xf32>, vector<512x128xf32> -> vector<512x128xf32>
    %7 = arith.addf %3, %6 : vector<512x128xf32>
    %c0_6 = arith.constant 0 : index
    %c0_7 = arith.constant 0 : index
    %8 = vector.load %arg6[%c0_6, %c0_7] : memref<512x128xf32, #tpu.memory_space<vmem>>, vector<512x128xf32>
    tpu.vector_store %arg6[%c0_6, %c0_7], %7 {strides = array<i32>} : memref<512x128xf32, #tpu.memory_space<vmem>>, vector<512x128xf32>,
    %c0_i32_8 = arith.constant 0 : i32
    %9 = arith.cmpi eq, %arg1, %c0_i32_8 : i32
    %10 = arith.extui %9 : i1 to i32
    %c0_i32_9 = arith.constant 0 : i32
    %11 = arith.cmpi ne, %10, %c0_i32_9 : i32
    scf.if %11 {
      %c0_10 = arith.constant 0 : index
      %c0_11 = arith.constant 0 : index
      %12 = vector.load %arg6[%c0_10, %c0_11] : memref<512x128xf32, #tpu.memory_space<vmem>>, vector<512x128xf32>
      %c0_12 = arith.constant 0 : index
      %c0_13 = arith.constant 0 : index
      %13 = vector.load %arg4[%c0_12, %c0_13] : memref<1x128xf32, #tpu.memory_space<vmem>>, vector<1x128xf32>
      %14 = vector.broadcast %13 : vector<1x128xf32> to vector<512x128xf32>
      %15 = arith.addf %12, %14 : vector<512x128xf32>
      %cst_14 = arith.constant 0.000000e+00 : f32
      %16 = vector.broadcast %cst_14 : f32 to vector<512x128xf32>
      %17 = arith.cmpf oge, %15, %16 : vector<512x128xf32>
      %cst_15 = arith.constant 2.000000e-01 : f32
      %18 = vector.broadcast %cst_15 : f32 to vector<512x128xf32>
      %19 = arith.mulf %18, %15 : vector<512x128xf32>
      %20 = arith.select %17, %15, %19 : vector<512x128xi1>, vector<512x128xf32>
      %c0_16 = arith.constant 0 : index
      %c0_17 = arith.constant 0 : index
      %21 = vector.load %arg5[%c0_16, %c0_17] : memref<512x128xf32, #tpu.memory_space<vmem>>, vector<512x128xf32>
      tpu.vector_store %arg5[%c0_16, %c0_17], %20 {strides = array<i32>} : memref<512x128xf32, #tpu.memory_space<vmem>>, vector<512x128xf32>,
    } else {
    }
    return
  }
  func.func @transform_0(%arg0: i32, %arg1: i32) -> (i32, i32) {
    %c0_i32 = arith.constant 0 : i32
    return %arg0, %arg1 : i32, i32
  }
  func.func @transform_1(%arg0: i32, %arg1: i32) -> (i32, i32) {
    %c0_i32 = arith.constant 0 : i32
    %c0_i32_0 = arith.constant 0 : i32
    return %arg1, %c0_i32 : i32, i32
  }
  func.func @transform_2(%arg0: i32, %arg1: i32) -> (i32, i32) {
    %c0_i32 = arith.constant 0 : i32
    %c0_i32_0 = arith.constant 0 : i32
    %c0_i32_1 = arith.constant 0 : i32
    return %c0_i32, %c0_i32_0 : i32, i32
  }
  func.func @transform_3(%arg0: i32, %arg1: i32) -> (i32, i32) {
    %c0_i32 = arith.constant 0 : i32
    %c0_i32_0 = arith.constant 0 : i32
    return %arg0, %c0_i32 : i32, i32
  }
}

module attributes {stable_mosaic.version = 11 : i64} {
  func.func @_conv_mm_kernel(%arg0: i32, %arg1: i32, %arg2: memref<128x128xf32, #tpu.memory_space<vmem>>, %arg3: memref<128x128xf32, #tpu.memory_space<vmem>>, %arg4: memref<128x128xf32, #tpu.memory_space<vmem>>, %arg5: memref<1x2x128xf32, #tpu.memory_space<vmem>>, %arg6: memref<128x128xf32, #tpu.memory_space<vmem>>) attributes {dimension_semantics = [#tpu.dimension_semantics<parallel>, #tpu.dimension_semantics<arbitrary>], iteration_bounds = array<i64: 1, 1>, scalar_prefetch = 0 : i64, scratch_operands = 1 : i64, tpu.core_type = #tpu.core_type<tc>, window_params = [{transform_indices = @transform_0, window_bounds = array<i64: 128, 128>}, {transform_indices = @transform_1, window_bounds = array<i64: 128, 128>}, {transform_indices = @transform_2, window_bounds = array<i64: 128, 128>}, {transform_indices = @transform_3, window_bounds = array<i64: 1, 2, 128>}]} {
    %c0_i32 = arith.constant 0 : i32
    %0 = arith.cmpi eq, %arg1, %c0_i32 : i32
    %1 = arith.extui %0 : i1 to i32
    %c0_i32_0 = arith.constant 0 : i32
    %2 = arith.cmpi ne, %1, %c0_i32_0 : i32
    scf.if %2 {
      %cst_10 = arith.constant 0.000000e+00 : f32
      %12 = vector.broadcast %cst_10 : f32 to vector<128x128xf32>
      %c0_11 = arith.constant 0 : index
      %c0_12 = arith.constant 0 : index
      %13 = vector.load %arg6[%c0_11, %c0_12] : memref<128x128xf32, #tpu.memory_space<vmem>>, vector<128x128xf32>
      tpu.vector_store %arg6[%c0_11, %c0_12], %12 {strides = array<i32>} : memref<128x128xf32, #tpu.memory_space<vmem>>, vector<128x128xf32>,
    } else {
    }
    %c0 = arith.constant 0 : index
    %c0_1 = arith.constant 0 : index
    %3 = vector.load %arg6[%c0, %c0_1] : memref<128x128xf32, #tpu.memory_space<vmem>>, vector<128x128xf32>
    %c0_2 = arith.constant 0 : index
    %c0_3 = arith.constant 0 : index
    %4 = vector.load %arg2[%c0_2, %c0_3] : memref<128x128xf32, #tpu.memory_space<vmem>>, vector<128x128xf32>
    %c0_4 = arith.constant 0 : index
    %c0_5 = arith.constant 0 : index
    %5 = vector.load %arg3[%c0_4, %c0_5] : memref<128x128xf32, #tpu.memory_space<vmem>>, vector<128x128xf32>
    %cst = arith.constant dense<0.000000e+00> : vector<128x128xf32>
    %6 = tpu.matmul %4, %5, %cst {dimension_numbers = #tpu.dot_dimension_numbers<[1], [0], [0], [1], [0, 0, 1, 1], [], []>} : vector<128x128xf32>, vector<128x128xf32>, vector<128x128xf32> -> vector<128x128xf32>
    %7 = arith.addf %3, %6 : vector<128x128xf32>
    %c0_6 = arith.constant 0 : index
    %c0_7 = arith.constant 0 : index
    %8 = vector.load %arg6[%c0_6, %c0_7] : memref<128x128xf32, #tpu.memory_space<vmem>>, vector<128x128xf32>
    tpu.vector_store %arg6[%c0_6, %c0_7], %7 {strides = array<i32>} : memref<128x128xf32, #tpu.memory_space<vmem>>, vector<128x128xf32>,
    %c0_i32_8 = arith.constant 0 : i32
    %9 = arith.cmpi eq, %arg1, %c0_i32_8 : i32
    %10 = arith.extui %9 : i1 to i32
    %c0_i32_9 = arith.constant 0 : i32
    %11 = arith.cmpi ne, %10, %c0_i32_9 : i32
    scf.if %11 {
      %c0_10 = arith.constant 0 : index
      %c0_11 = arith.constant 0 : index
      %12 = vector.load %arg6[%c0_10, %c0_11] : memref<128x128xf32, #tpu.memory_space<vmem>>, vector<128x128xf32>
      %c0_12 = arith.constant 0 : index
      %c0_13 = arith.constant 0 : index
      %13 = vector.load %arg4[%c0_12, %c0_13] : memref<128x128xf32, #tpu.memory_space<vmem>>, vector<128x128xf32>
      tpu.vector_store %arg4[%c0_12, %c0_13], %12 {strides = array<i32>} : memref<128x128xf32, #tpu.memory_space<vmem>>, vector<128x128xf32>,
      %cst_14 = arith.constant dense<0.000000e+00> : vector<128xf32>
      %14 = vector.multi_reduction <add>, %12, %cst_14 [0] : vector<128x128xf32> to vector<128xf32>
      %15 = vector.shape_cast %14 : vector<128xf32> to vector<1x128xf32>
      %16 = arith.mulf %12, %12 : vector<128x128xf32>
      %cst_15 = arith.constant dense<0.000000e+00> : vector<128xf32>
      %17 = vector.multi_reduction <add>, %16, %cst_15 [0] : vector<128x128xf32> to vector<128xf32>
      %18 = vector.shape_cast %17 : vector<128xf32> to vector<1x128xf32>
      %19 = tpu.concatenate %15, %18 in 0 : vector<1x128xf32>, vector<1x128xf32> -> vector<2x128xf32>
      %20 = vector.shape_cast %19 : vector<2x128xf32> to vector<1x2x128xf32>
      %c0_16 = arith.constant 0 : index
      %c0_17 = arith.constant 0 : index
      %c0_18 = arith.constant 0 : index
      %21 = vector.load %arg5[%c0_16, %c0_17, %c0_18] : memref<1x2x128xf32, #tpu.memory_space<vmem>>, vector<1x2x128xf32>
      tpu.vector_store %arg5[%c0_16, %c0_17, %c0_18], %20 {strides = array<i32>} : memref<1x2x128xf32, #tpu.memory_space<vmem>>, vector<1x2x128xf32>,
    } else {
    }
    return
  }
  func.func @transform_0(%arg0: i32, %arg1: i32) -> (i32, i32) {
    %c0_i32 = arith.constant 0 : i32
    return %arg0, %arg1 : i32, i32
  }
  func.func @transform_1(%arg0: i32, %arg1: i32) -> (i32, i32) {
    %c0_i32 = arith.constant 0 : i32
    %c0_i32_0 = arith.constant 0 : i32
    return %arg1, %c0_i32 : i32, i32
  }
  func.func @transform_2(%arg0: i32, %arg1: i32) -> (i32, i32) {
    %c0_i32 = arith.constant 0 : i32
    %c0_i32_0 = arith.constant 0 : i32
    return %arg0, %c0_i32 : i32, i32
  }
  func.func @transform_3(%arg0: i32, %arg1: i32) -> (i32, i32, i32) {
    %c0_i32 = arith.constant 0 : i32
    %c0_i32_0 = arith.constant 0 : i32
    %c0_i32_1 = arith.constant 0 : i32
    return %arg0, %c0_i32, %c0_i32_0 : i32, i32, i32
  }
}

module attributes {stable_mosaic.version = 11 : i64} {
  func.func @_bn_apply_lrelu_kernel(%arg0: i32, %arg1: memref<128x128xf32, #tpu.memory_space<vmem>>, %arg2: memref<1x128xf32, #tpu.memory_space<vmem>>, %arg3: memref<1x128xf32, #tpu.memory_space<vmem>>, %arg4: memref<128x128xf32, #tpu.memory_space<vmem>>) attributes {dimension_semantics = [#tpu.dimension_semantics<parallel>], iteration_bounds = array<i64: 1>, scalar_prefetch = 0 : i64, scratch_operands = 0 : i64, tpu.core_type = #tpu.core_type<tc>, window_params = [{transform_indices = @transform_0, window_bounds = array<i64: 128, 128>}, {pipeline_mode = #tpu.pipeline_mode<synchronous>, transform_indices = @transform_1, window_bounds = array<i64: 1, 128>}, {pipeline_mode = #tpu.pipeline_mode<synchronous>, transform_indices = @transform_2, window_bounds = array<i64: 1, 128>}, {transform_indices = @transform_3, window_bounds = array<i64: 128, 128>}]} {
    %c0 = arith.constant 0 : index
    %c0_0 = arith.constant 0 : index
    %0 = vector.load %arg1[%c0, %c0_0] : memref<128x128xf32, #tpu.memory_space<vmem>>, vector<128x128xf32>
    %c0_1 = arith.constant 0 : index
    %c0_2 = arith.constant 0 : index
    %1 = vector.load %arg2[%c0_1, %c0_2] : memref<1x128xf32, #tpu.memory_space<vmem>>, vector<1x128xf32>
    %2 = vector.broadcast %1 : vector<1x128xf32> to vector<128x128xf32>
    %3 = arith.mulf %0, %2 : vector<128x128xf32>
    %c0_3 = arith.constant 0 : index
    %c0_4 = arith.constant 0 : index
    %4 = vector.load %arg3[%c0_3, %c0_4] : memref<1x128xf32, #tpu.memory_space<vmem>>, vector<1x128xf32>
    %5 = vector.broadcast %4 : vector<1x128xf32> to vector<128x128xf32>
    %6 = arith.addf %3, %5 : vector<128x128xf32>
    %cst = arith.constant 0.000000e+00 : f32
    %7 = vector.broadcast %cst : f32 to vector<128x128xf32>
    %8 = arith.cmpf oge, %6, %7 : vector<128x128xf32>
    %cst_5 = arith.constant 2.000000e-01 : f32
    %9 = vector.broadcast %cst_5 : f32 to vector<128x128xf32>
    %10 = arith.mulf %9, %6 : vector<128x128xf32>
    %11 = arith.select %8, %6, %10 : vector<128x128xi1>, vector<128x128xf32>
    %c0_6 = arith.constant 0 : index
    %c0_7 = arith.constant 0 : index
    %12 = vector.load %arg4[%c0_6, %c0_7] : memref<128x128xf32, #tpu.memory_space<vmem>>, vector<128x128xf32>
    tpu.vector_store %arg4[%c0_6, %c0_7], %11 {strides = array<i32>} : memref<128x128xf32, #tpu.memory_space<vmem>>, vector<128x128xf32>,
    return
  }
  func.func @transform_0(%arg0: i32) -> (i32, i32) {
    %c0_i32 = arith.constant 0 : i32
    %c0_i32_0 = arith.constant 0 : i32
    return %arg0, %c0_i32 : i32, i32
  }
  func.func @transform_1(%arg0: i32) -> (i32, i32) {
    %c0_i32 = arith.constant 0 : i32
    %c0_i32_0 = arith.constant 0 : i32
    %c0_i32_1 = arith.constant 0 : i32
    return %c0_i32, %c0_i32_0 : i32, i32
  }
  func.func @transform_2(%arg0: i32) -> (i32, i32) {
    %c0_i32 = arith.constant 0 : i32
    %c0_i32_0 = arith.constant 0 : i32
    %c0_i32_1 = arith.constant 0 : i32
    return %c0_i32, %c0_i32_0 : i32, i32
  }
  func.func @transform_3(%arg0: i32) -> (i32, i32) {
    %c0_i32 = arith.constant 0 : i32
    %c0_i32_0 = arith.constant 0 : i32
    return %arg0, %c0_i32 : i32, i32
  }
}

module attributes {stable_mosaic.version = 11 : i64} {
  func.func @_bn_apply_lrelu_kernel(%arg0: i32, %arg1: memref<32x128xf32, #tpu.memory_space<vmem>>, %arg2: memref<1x128xf32, #tpu.memory_space<vmem>>, %arg3: memref<1x128xf32, #tpu.memory_space<vmem>>, %arg4: memref<32x128xf32, #tpu.memory_space<vmem>>) attributes {dimension_semantics = [#tpu.dimension_semantics<parallel>], iteration_bounds = array<i64: 1>, scalar_prefetch = 0 : i64, scratch_operands = 0 : i64, tpu.core_type = #tpu.core_type<tc>, window_params = [{transform_indices = @transform_0, window_bounds = array<i64: 32, 128>}, {pipeline_mode = #tpu.pipeline_mode<synchronous>, transform_indices = @transform_1, window_bounds = array<i64: 1, 128>}, {pipeline_mode = #tpu.pipeline_mode<synchronous>, transform_indices = @transform_2, window_bounds = array<i64: 1, 128>}, {transform_indices = @transform_3, window_bounds = array<i64: 32, 128>}]} {
    %c0 = arith.constant 0 : index
    %c0_0 = arith.constant 0 : index
    %0 = vector.load %arg1[%c0, %c0_0] : memref<32x128xf32, #tpu.memory_space<vmem>>, vector<32x128xf32>
    %c0_1 = arith.constant 0 : index
    %c0_2 = arith.constant 0 : index
    %1 = vector.load %arg2[%c0_1, %c0_2] : memref<1x128xf32, #tpu.memory_space<vmem>>, vector<1x128xf32>
    %2 = vector.broadcast %1 : vector<1x128xf32> to vector<32x128xf32>
    %3 = arith.mulf %0, %2 : vector<32x128xf32>
    %c0_3 = arith.constant 0 : index
    %c0_4 = arith.constant 0 : index
    %4 = vector.load %arg3[%c0_3, %c0_4] : memref<1x128xf32, #tpu.memory_space<vmem>>, vector<1x128xf32>
    %5 = vector.broadcast %4 : vector<1x128xf32> to vector<32x128xf32>
    %6 = arith.addf %3, %5 : vector<32x128xf32>
    %cst = arith.constant 0.000000e+00 : f32
    %7 = vector.broadcast %cst : f32 to vector<32x128xf32>
    %8 = arith.cmpf oge, %6, %7 : vector<32x128xf32>
    %cst_5 = arith.constant 2.000000e-01 : f32
    %9 = vector.broadcast %cst_5 : f32 to vector<32x128xf32>
    %10 = arith.mulf %9, %6 : vector<32x128xf32>
    %11 = arith.select %8, %6, %10 : vector<32x128xi1>, vector<32x128xf32>
    %c0_6 = arith.constant 0 : index
    %c0_7 = arith.constant 0 : index
    %12 = vector.load %arg4[%c0_6, %c0_7] : memref<32x128xf32, #tpu.memory_space<vmem>>, vector<32x128xf32>
    tpu.vector_store %arg4[%c0_6, %c0_7], %11 {strides = array<i32>} : memref<32x128xf32, #tpu.memory_space<vmem>>, vector<32x128xf32>,
    return
  }
  func.func @transform_0(%arg0: i32) -> (i32, i32) {
    %c0_i32 = arith.constant 0 : i32
    %c0_i32_0 = arith.constant 0 : i32
    return %arg0, %c0_i32 : i32, i32
  }
  func.func @transform_1(%arg0: i32) -> (i32, i32) {
    %c0_i32 = arith.constant 0 : i32
    %c0_i32_0 = arith.constant 0 : i32
    %c0_i32_1 = arith.constant 0 : i32
    return %c0_i32, %c0_i32_0 : i32, i32
  }
  func.func @transform_2(%arg0: i32) -> (i32, i32) {
    %c0_i32 = arith.constant 0 : i32
    %c0_i32_0 = arith.constant 0 : i32
    %c0_i32_1 = arith.constant 0 : i32
    return %c0_i32, %c0_i32_0 : i32, i32
  }
  func.func @transform_3(%arg0: i32) -> (i32, i32) {
    %c0_i32 = arith.constant 0 : i32
    %c0_i32_0 = arith.constant 0 : i32
    return %arg0, %c0_i32 : i32, i32
  }
}

module attributes {stable_mosaic.version = 11 : i64} {
  func.func @_conv_mm_kernel(%arg0: i32, %arg1: i32, %arg2: memref<32x256xf32, #tpu.memory_space<vmem>>, %arg3: memref<256x128xf32, #tpu.memory_space<vmem>>, %arg4: memref<32x128xf32, #tpu.memory_space<vmem>>, %arg5: memref<1x2x128xf32, #tpu.memory_space<vmem>>, %arg6: memref<32x128xf32, #tpu.memory_space<vmem>>) attributes {dimension_semantics = [#tpu.dimension_semantics<parallel>, #tpu.dimension_semantics<arbitrary>], iteration_bounds = array<i64: 1, 1>, scalar_prefetch = 0 : i64, scratch_operands = 1 : i64, tpu.core_type = #tpu.core_type<tc>, window_params = [{transform_indices = @transform_0, window_bounds = array<i64: 32, 256>}, {transform_indices = @transform_1, window_bounds = array<i64: 256, 128>}, {transform_indices = @transform_2, window_bounds = array<i64: 32, 128>}, {transform_indices = @transform_3, window_bounds = array<i64: 1, 2, 128>}]} {
    %c0_i32 = arith.constant 0 : i32
    %0 = arith.cmpi eq, %arg1, %c0_i32 : i32
    %1 = arith.extui %0 : i1 to i32
    %c0_i32_0 = arith.constant 0 : i32
    %2 = arith.cmpi ne, %1, %c0_i32_0 : i32
    scf.if %2 {
      %cst_10 = arith.constant 0.000000e+00 : f32
      %12 = vector.broadcast %cst_10 : f32 to vector<32x128xf32>
      %c0_11 = arith.constant 0 : index
      %c0_12 = arith.constant 0 : index
      %13 = vector.load %arg6[%c0_11, %c0_12] : memref<32x128xf32, #tpu.memory_space<vmem>>, vector<32x128xf32>
      tpu.vector_store %arg6[%c0_11, %c0_12], %12 {strides = array<i32>} : memref<32x128xf32, #tpu.memory_space<vmem>>, vector<32x128xf32>,
    } else {
    }
    %c0 = arith.constant 0 : index
    %c0_1 = arith.constant 0 : index
    %3 = vector.load %arg6[%c0, %c0_1] : memref<32x128xf32, #tpu.memory_space<vmem>>, vector<32x128xf32>
    %c0_2 = arith.constant 0 : index
    %c0_3 = arith.constant 0 : index
    %4 = vector.load %arg2[%c0_2, %c0_3] : memref<32x256xf32, #tpu.memory_space<vmem>>, vector<32x256xf32>
    %c0_4 = arith.constant 0 : index
    %c0_5 = arith.constant 0 : index
    %5 = vector.load %arg3[%c0_4, %c0_5] : memref<256x128xf32, #tpu.memory_space<vmem>>, vector<256x128xf32>
    %cst = arith.constant dense<0.000000e+00> : vector<32x128xf32>
    %6 = tpu.matmul %4, %5, %cst {dimension_numbers = #tpu.dot_dimension_numbers<[1], [0], [0], [1], [0, 0, 1, 1], [], []>} : vector<32x256xf32>, vector<256x128xf32>, vector<32x128xf32> -> vector<32x128xf32>
    %7 = arith.addf %3, %6 : vector<32x128xf32>
    %c0_6 = arith.constant 0 : index
    %c0_7 = arith.constant 0 : index
    %8 = vector.load %arg6[%c0_6, %c0_7] : memref<32x128xf32, #tpu.memory_space<vmem>>, vector<32x128xf32>
    tpu.vector_store %arg6[%c0_6, %c0_7], %7 {strides = array<i32>} : memref<32x128xf32, #tpu.memory_space<vmem>>, vector<32x128xf32>,
    %c0_i32_8 = arith.constant 0 : i32
    %9 = arith.cmpi eq, %arg1, %c0_i32_8 : i32
    %10 = arith.extui %9 : i1 to i32
    %c0_i32_9 = arith.constant 0 : i32
    %11 = arith.cmpi ne, %10, %c0_i32_9 : i32
    scf.if %11 {
      %c0_10 = arith.constant 0 : index
      %c0_11 = arith.constant 0 : index
      %12 = vector.load %arg6[%c0_10, %c0_11] : memref<32x128xf32, #tpu.memory_space<vmem>>, vector<32x128xf32>
      %c0_12 = arith.constant 0 : index
      %c0_13 = arith.constant 0 : index
      %13 = vector.load %arg4[%c0_12, %c0_13] : memref<32x128xf32, #tpu.memory_space<vmem>>, vector<32x128xf32>
      tpu.vector_store %arg4[%c0_12, %c0_13], %12 {strides = array<i32>} : memref<32x128xf32, #tpu.memory_space<vmem>>, vector<32x128xf32>,
      %cst_14 = arith.constant dense<0.000000e+00> : vector<128xf32>
      %14 = vector.multi_reduction <add>, %12, %cst_14 [0] : vector<32x128xf32> to vector<128xf32>
      %15 = vector.shape_cast %14 : vector<128xf32> to vector<1x128xf32>
      %16 = arith.mulf %12, %12 : vector<32x128xf32>
      %cst_15 = arith.constant dense<0.000000e+00> : vector<128xf32>
      %17 = vector.multi_reduction <add>, %16, %cst_15 [0] : vector<32x128xf32> to vector<128xf32>
      %18 = vector.shape_cast %17 : vector<128xf32> to vector<1x128xf32>
      %19 = tpu.concatenate %15, %18 in 0 : vector<1x128xf32>, vector<1x128xf32> -> vector<2x128xf32>
      %20 = vector.shape_cast %19 : vector<2x128xf32> to vector<1x2x128xf32>
      %c0_16 = arith.constant 0 : index
      %c0_17 = arith.constant 0 : index
      %c0_18 = arith.constant 0 : index
      %21 = vector.load %arg5[%c0_16, %c0_17, %c0_18] : memref<1x2x128xf32, #tpu.memory_space<vmem>>, vector<1x2x128xf32>
      tpu.vector_store %arg5[%c0_16, %c0_17, %c0_18], %20 {strides = array<i32>} : memref<1x2x128xf32, #tpu.memory_space<vmem>>, vector<1x2x128xf32>,
    } else {
    }
    return
  }
  func.func @transform_0(%arg0: i32, %arg1: i32) -> (i32, i32) {
    %c0_i32 = arith.constant 0 : i32
    return %arg0, %arg1 : i32, i32
  }
  func.func @transform_1(%arg0: i32, %arg1: i32) -> (i32, i32) {
    %c0_i32 = arith.constant 0 : i32
    %c0_i32_0 = arith.constant 0 : i32
    return %arg1, %c0_i32 : i32, i32
  }
  func.func @transform_2(%arg0: i32, %arg1: i32) -> (i32, i32) {
    %c0_i32 = arith.constant 0 : i32
    %c0_i32_0 = arith.constant 0 : i32
    return %arg0, %c0_i32 : i32, i32
  }
  func.func @transform_3(%arg0: i32, %arg1: i32) -> (i32, i32, i32) {
    %c0_i32 = arith.constant 0 : i32
    %c0_i32_0 = arith.constant 0 : i32
    %c0_i32_1 = arith.constant 0 : i32
    return %arg0, %c0_i32, %c0_i32_0 : i32, i32, i32
  }
}

module attributes {stable_mosaic.version = 11 : i64} {
  func.func @_bn_apply_lrelu_kernel(%arg0: i32, %arg1: memref<24x128xf32, #tpu.memory_space<vmem>>, %arg2: memref<1x128xf32, #tpu.memory_space<vmem>>, %arg3: memref<1x128xf32, #tpu.memory_space<vmem>>, %arg4: memref<24x128xf32, #tpu.memory_space<vmem>>) attributes {dimension_semantics = [#tpu.dimension_semantics<parallel>], iteration_bounds = array<i64: 1>, scalar_prefetch = 0 : i64, scratch_operands = 0 : i64, tpu.core_type = #tpu.core_type<tc>, window_params = [{transform_indices = @transform_0, window_bounds = array<i64: 24, 128>}, {pipeline_mode = #tpu.pipeline_mode<synchronous>, transform_indices = @transform_1, window_bounds = array<i64: 1, 128>}, {pipeline_mode = #tpu.pipeline_mode<synchronous>, transform_indices = @transform_2, window_bounds = array<i64: 1, 128>}, {transform_indices = @transform_3, window_bounds = array<i64: 24, 128>}]} {
    %c0 = arith.constant 0 : index
    %c0_0 = arith.constant 0 : index
    %0 = vector.load %arg1[%c0, %c0_0] : memref<24x128xf32, #tpu.memory_space<vmem>>, vector<24x128xf32>
    %c0_1 = arith.constant 0 : index
    %c0_2 = arith.constant 0 : index
    %1 = vector.load %arg2[%c0_1, %c0_2] : memref<1x128xf32, #tpu.memory_space<vmem>>, vector<1x128xf32>
    %2 = vector.broadcast %1 : vector<1x128xf32> to vector<24x128xf32>
    %3 = arith.mulf %0, %2 : vector<24x128xf32>
    %c0_3 = arith.constant 0 : index
    %c0_4 = arith.constant 0 : index
    %4 = vector.load %arg3[%c0_3, %c0_4] : memref<1x128xf32, #tpu.memory_space<vmem>>, vector<1x128xf32>
    %5 = vector.broadcast %4 : vector<1x128xf32> to vector<24x128xf32>
    %6 = arith.addf %3, %5 : vector<24x128xf32>
    %cst = arith.constant 0.000000e+00 : f32
    %7 = vector.broadcast %cst : f32 to vector<24x128xf32>
    %8 = arith.cmpf oge, %6, %7 : vector<24x128xf32>
    %cst_5 = arith.constant 2.000000e-01 : f32
    %9 = vector.broadcast %cst_5 : f32 to vector<24x128xf32>
    %10 = arith.mulf %9, %6 : vector<24x128xf32>
    %11 = arith.select %8, %6, %10 : vector<24x128xi1>, vector<24x128xf32>
    %c0_6 = arith.constant 0 : index
    %c0_7 = arith.constant 0 : index
    %12 = vector.load %arg4[%c0_6, %c0_7] : memref<24x128xf32, #tpu.memory_space<vmem>>, vector<24x128xf32>
    tpu.vector_store %arg4[%c0_6, %c0_7], %11 {strides = array<i32>} : memref<24x128xf32, #tpu.memory_space<vmem>>, vector<24x128xf32>,
    return
  }
  func.func @transform_0(%arg0: i32) -> (i32, i32) {
    %c0_i32 = arith.constant 0 : i32
    %c0_i32_0 = arith.constant 0 : i32
    return %arg0, %c0_i32 : i32, i32
  }
  func.func @transform_1(%arg0: i32) -> (i32, i32) {
    %c0_i32 = arith.constant 0 : i32
    %c0_i32_0 = arith.constant 0 : i32
    %c0_i32_1 = arith.constant 0 : i32
    return %c0_i32, %c0_i32_0 : i32, i32
  }
  func.func @transform_2(%arg0: i32) -> (i32, i32) {
    %c0_i32 = arith.constant 0 : i32
    %c0_i32_0 = arith.constant 0 : i32
    %c0_i32_1 = arith.constant 0 : i32
    return %c0_i32, %c0_i32_0 : i32, i32
  }
  func.func @transform_3(%arg0: i32) -> (i32, i32) {
    %c0_i32 = arith.constant 0 : i32
    %c0_i32_0 = arith.constant 0 : i32
    return %arg0, %c0_i32 : i32, i32
  }
}

module attributes {stable_mosaic.version = 11 : i64} {
  func.func @_conv_mm_kernel(%arg0: i32, %arg1: i32, %arg2: memref<24x512xf32, #tpu.memory_space<vmem>>, %arg3: memref<512x128xf32, #tpu.memory_space<vmem>>, %arg4: memref<24x128xf32, #tpu.memory_space<vmem>>, %arg5: memref<1x2x128xf32, #tpu.memory_space<vmem>>, %arg6: memref<24x128xf32, #tpu.memory_space<vmem>>) attributes {dimension_semantics = [#tpu.dimension_semantics<parallel>, #tpu.dimension_semantics<arbitrary>], iteration_bounds = array<i64: 1, 1>, scalar_prefetch = 0 : i64, scratch_operands = 1 : i64, tpu.core_type = #tpu.core_type<tc>, window_params = [{transform_indices = @transform_0, window_bounds = array<i64: 24, 512>}, {transform_indices = @transform_1, window_bounds = array<i64: 512, 128>}, {transform_indices = @transform_2, window_bounds = array<i64: 24, 128>}, {transform_indices = @transform_3, window_bounds = array<i64: 1, 2, 128>}]} {
    %c0_i32 = arith.constant 0 : i32
    %0 = arith.cmpi eq, %arg1, %c0_i32 : i32
    %1 = arith.extui %0 : i1 to i32
    %c0_i32_0 = arith.constant 0 : i32
    %2 = arith.cmpi ne, %1, %c0_i32_0 : i32
    scf.if %2 {
      %cst_10 = arith.constant 0.000000e+00 : f32
      %12 = vector.broadcast %cst_10 : f32 to vector<24x128xf32>
      %c0_11 = arith.constant 0 : index
      %c0_12 = arith.constant 0 : index
      %13 = vector.load %arg6[%c0_11, %c0_12] : memref<24x128xf32, #tpu.memory_space<vmem>>, vector<24x128xf32>
      tpu.vector_store %arg6[%c0_11, %c0_12], %12 {strides = array<i32>} : memref<24x128xf32, #tpu.memory_space<vmem>>, vector<24x128xf32>,
    } else {
    }
    %c0 = arith.constant 0 : index
    %c0_1 = arith.constant 0 : index
    %3 = vector.load %arg6[%c0, %c0_1] : memref<24x128xf32, #tpu.memory_space<vmem>>, vector<24x128xf32>
    %c0_2 = arith.constant 0 : index
    %c0_3 = arith.constant 0 : index
    %4 = vector.load %arg2[%c0_2, %c0_3] : memref<24x512xf32, #tpu.memory_space<vmem>>, vector<24x512xf32>
    %c0_4 = arith.constant 0 : index
    %c0_5 = arith.constant 0 : index
    %5 = vector.load %arg3[%c0_4, %c0_5] : memref<512x128xf32, #tpu.memory_space<vmem>>, vector<512x128xf32>
    %cst = arith.constant dense<0.000000e+00> : vector<24x128xf32>
    %6 = tpu.matmul %4, %5, %cst {dimension_numbers = #tpu.dot_dimension_numbers<[1], [0], [0], [1], [0, 0, 1, 1], [], []>} : vector<24x512xf32>, vector<512x128xf32>, vector<24x128xf32> -> vector<24x128xf32>
    %7 = arith.addf %3, %6 : vector<24x128xf32>
    %c0_6 = arith.constant 0 : index
    %c0_7 = arith.constant 0 : index
    %8 = vector.load %arg6[%c0_6, %c0_7] : memref<24x128xf32, #tpu.memory_space<vmem>>, vector<24x128xf32>
    tpu.vector_store %arg6[%c0_6, %c0_7], %7 {strides = array<i32>} : memref<24x128xf32, #tpu.memory_space<vmem>>, vector<24x128xf32>,
    %c0_i32_8 = arith.constant 0 : i32
    %9 = arith.cmpi eq, %arg1, %c0_i32_8 : i32
    %10 = arith.extui %9 : i1 to i32
    %c0_i32_9 = arith.constant 0 : i32
    %11 = arith.cmpi ne, %10, %c0_i32_9 : i32
    scf.if %11 {
      %c0_10 = arith.constant 0 : index
      %c0_11 = arith.constant 0 : index
      %12 = vector.load %arg6[%c0_10, %c0_11] : memref<24x128xf32, #tpu.memory_space<vmem>>, vector<24x128xf32>
      %c0_12 = arith.constant 0 : index
      %c0_13 = arith.constant 0 : index
      %13 = vector.load %arg4[%c0_12, %c0_13] : memref<24x128xf32, #tpu.memory_space<vmem>>, vector<24x128xf32>
      tpu.vector_store %arg4[%c0_12, %c0_13], %12 {strides = array<i32>} : memref<24x128xf32, #tpu.memory_space<vmem>>, vector<24x128xf32>,
      %cst_14 = arith.constant dense<0.000000e+00> : vector<128xf32>
      %14 = vector.multi_reduction <add>, %12, %cst_14 [0] : vector<24x128xf32> to vector<128xf32>
      %15 = vector.shape_cast %14 : vector<128xf32> to vector<1x128xf32>
      %16 = arith.mulf %12, %12 : vector<24x128xf32>
      %cst_15 = arith.constant dense<0.000000e+00> : vector<128xf32>
      %17 = vector.multi_reduction <add>, %16, %cst_15 [0] : vector<24x128xf32> to vector<128xf32>
      %18 = vector.shape_cast %17 : vector<128xf32> to vector<1x128xf32>
      %19 = tpu.concatenate %15, %18 in 0 : vector<1x128xf32>, vector<1x128xf32> -> vector<2x128xf32>
      %20 = vector.shape_cast %19 : vector<2x128xf32> to vector<1x2x128xf32>
      %c0_16 = arith.constant 0 : index
      %c0_17 = arith.constant 0 : index
      %c0_18 = arith.constant 0 : index
      %21 = vector.load %arg5[%c0_16, %c0_17, %c0_18] : memref<1x2x128xf32, #tpu.memory_space<vmem>>, vector<1x2x128xf32>
      tpu.vector_store %arg5[%c0_16, %c0_17, %c0_18], %20 {strides = array<i32>} : memref<1x2x128xf32, #tpu.memory_space<vmem>>, vector<1x2x128xf32>,
    } else {
    }
    return
  }
  func.func @transform_0(%arg0: i32, %arg1: i32) -> (i32, i32) {
    %c0_i32 = arith.constant 0 : i32
    return %arg0, %arg1 : i32, i32
  }
  func.func @transform_1(%arg0: i32, %arg1: i32) -> (i32, i32) {
    %c0_i32 = arith.constant 0 : i32
    %c0_i32_0 = arith.constant 0 : i32
    return %arg1, %c0_i32 : i32, i32
  }
  func.func @transform_2(%arg0: i32, %arg1: i32) -> (i32, i32) {
    %c0_i32 = arith.constant 0 : i32
    %c0_i32_0 = arith.constant 0 : i32
    return %arg0, %c0_i32 : i32, i32
  }
  func.func @transform_3(%arg0: i32, %arg1: i32) -> (i32, i32, i32) {
    %c0_i32 = arith.constant 0 : i32
    %c0_i32_0 = arith.constant 0 : i32
    %c0_i32_1 = arith.constant 0 : i32
    return %arg0, %c0_i32, %c0_i32_0 : i32, i32, i32
  }
}

module attributes {stable_mosaic.version = 11 : i64} {
  func.func @_conv_mm_kernel(%arg0: i32, %arg1: i32, %arg2: memref<8x512xf32, #tpu.memory_space<vmem>>, %arg3: memref<512x128xf32, #tpu.memory_space<vmem>>, %arg4: memref<1x128xf32, #tpu.memory_space<vmem>>, %arg5: memref<8x128xf32, #tpu.memory_space<vmem>>, %arg6: memref<8x128xf32, #tpu.memory_space<vmem>>) attributes {dimension_semantics = [#tpu.dimension_semantics<parallel>, #tpu.dimension_semantics<arbitrary>], iteration_bounds = array<i64: 1, 2>, scalar_prefetch = 0 : i64, scratch_operands = 1 : i64, tpu.core_type = #tpu.core_type<tc>, window_params = [{transform_indices = @transform_0, window_bounds = array<i64: 8, 512>}, {transform_indices = @transform_1, window_bounds = array<i64: 512, 128>}, {pipeline_mode = #tpu.pipeline_mode<synchronous>, transform_indices = @transform_2, window_bounds = array<i64: 1, 128>}, {transform_indices = @transform_3, window_bounds = array<i64: 8, 128>}]} {
    %c0_i32 = arith.constant 0 : i32
    %0 = arith.cmpi eq, %arg1, %c0_i32 : i32
    %1 = arith.extui %0 : i1 to i32
    %c0_i32_0 = arith.constant 0 : i32
    %2 = arith.cmpi ne, %1, %c0_i32_0 : i32
    scf.if %2 {
      %cst_9 = arith.constant 0.000000e+00 : f32
      %12 = vector.broadcast %cst_9 : f32 to vector<8x128xf32>
      %c0_10 = arith.constant 0 : index
      %c0_11 = arith.constant 0 : index
      %13 = vector.load %arg6[%c0_10, %c0_11] : memref<8x128xf32, #tpu.memory_space<vmem>>, vector<8x128xf32>
      tpu.vector_store %arg6[%c0_10, %c0_11], %12 {strides = array<i32>} : memref<8x128xf32, #tpu.memory_space<vmem>>, vector<8x128xf32>,
    } else {
    }
    %c0 = arith.constant 0 : index
    %c0_1 = arith.constant 0 : index
    %3 = vector.load %arg6[%c0, %c0_1] : memref<8x128xf32, #tpu.memory_space<vmem>>, vector<8x128xf32>
    %c0_2 = arith.constant 0 : index
    %c0_3 = arith.constant 0 : index
    %4 = vector.load %arg2[%c0_2, %c0_3] : memref<8x512xf32, #tpu.memory_space<vmem>>, vector<8x512xf32>
    %c0_4 = arith.constant 0 : index
    %c0_5 = arith.constant 0 : index
    %5 = vector.load %arg3[%c0_4, %c0_5] : memref<512x128xf32, #tpu.memory_space<vmem>>, vector<512x128xf32>
    %cst = arith.constant dense<0.000000e+00> : vector<8x128xf32>
    %6 = tpu.matmul %4, %5, %cst {dimension_numbers = #tpu.dot_dimension_numbers<[1], [0], [0], [1], [0, 0, 1, 1], [], []>} : vector<8x512xf32>, vector<512x128xf32>, vector<8x128xf32> -> vector<8x128xf32>
    %7 = arith.addf %3, %6 : vector<8x128xf32>
    %c0_6 = arith.constant 0 : index
    %c0_7 = arith.constant 0 : index
    %8 = vector.load %arg6[%c0_6, %c0_7] : memref<8x128xf32, #tpu.memory_space<vmem>>, vector<8x128xf32>
    tpu.vector_store %arg6[%c0_6, %c0_7], %7 {strides = array<i32>} : memref<8x128xf32, #tpu.memory_space<vmem>>, vector<8x128xf32>,
    %c1_i32 = arith.constant 1 : i32
    %9 = arith.cmpi eq, %arg1, %c1_i32 : i32
    %10 = arith.extui %9 : i1 to i32
    %c0_i32_8 = arith.constant 0 : i32
    %11 = arith.cmpi ne, %10, %c0_i32_8 : i32
    scf.if %11 {
      %c0_9 = arith.constant 0 : index
      %c0_10 = arith.constant 0 : index
      %12 = vector.load %arg6[%c0_9, %c0_10] : memref<8x128xf32, #tpu.memory_space<vmem>>, vector<8x128xf32>
      %c0_11 = arith.constant 0 : index
      %c0_12 = arith.constant 0 : index
      %13 = vector.load %arg4[%c0_11, %c0_12] : memref<1x128xf32, #tpu.memory_space<vmem>>, vector<1x128xf32>
      %14 = vector.broadcast %13 : vector<1x128xf32> to vector<8x128xf32>
      %15 = arith.addf %12, %14 : vector<8x128xf32>
      %c0_13 = arith.constant 0 : index
      %c0_14 = arith.constant 0 : index
      %16 = vector.load %arg5[%c0_13, %c0_14] : memref<8x128xf32, #tpu.memory_space<vmem>>, vector<8x128xf32>
      tpu.vector_store %arg5[%c0_13, %c0_14], %15 {strides = array<i32>} : memref<8x128xf32, #tpu.memory_space<vmem>>, vector<8x128xf32>,
    } else {
    }
    return
  }
  func.func @transform_0(%arg0: i32, %arg1: i32) -> (i32, i32) {
    %c0_i32 = arith.constant 0 : i32
    return %arg0, %arg1 : i32, i32
  }
  func.func @transform_1(%arg0: i32, %arg1: i32) -> (i32, i32) {
    %c0_i32 = arith.constant 0 : i32
    %c0_i32_0 = arith.constant 0 : i32
    return %arg1, %c0_i32 : i32, i32
  }
  func.func @transform_2(%arg0: i32, %arg1: i32) -> (i32, i32) {
    %c0_i32 = arith.constant 0 : i32
    %c0_i32_0 = arith.constant 0 : i32
    %c0_i32_1 = arith.constant 0 : i32
    return %c0_i32, %c0_i32_0 : i32, i32
  }
  func.func @transform_3(%arg0: i32, %arg1: i32) -> (i32, i32) {
    %c0_i32 = arith.constant 0 : i32
    %c0_i32_0 = arith.constant 0 : i32
    return %arg0, %c0_i32 : i32, i32
  }
}

</mosaic_0001>

<llo_original>
// kernel: _lambda_.8
$region0: #{_lambda_.8}
  #allocation0 [shape = 'u32[]', space=smem, size = 0x4, offset = 0x4, fixed_abs, tag = 'smem constant byte address 0x4 - core index']
  #allocation1 [shape = 'u32[144,128]{1,0:T(1,128)}', space=vmem, size = 0x12000, scoped, tag = 'internal scratch']
  #allocation2 [shape = 'f32[512,128]{1,0:T(8,128)}', space=vmem, size = 0x40000, scoped, tag = 'scratch operand']
  %s0 = inlined_call_operand.vmem [shape: f32[512,128], index: 0, kind: input, shape index: {}]
  %s1 = inlined_call_operand.vmem [shape: f32[128,128], index: 1, kind: input, shape index: {}]
  %s2 = inlined_call_operand.vmem [shape: f32[1,128], index: 2, kind: input, shape index: {}]
  %s3 = inlined_call_operand.vmem [shape: f32[512,128], index: 3, kind: output, shape index: {}]
  %s4 = sld [smem:[#allocation0]]
  $region30: #{_lambda_.8} parent=0
    _
  %s6 = ssub.s32 1, %s4
  %s7 = scalar_select 0, %s6, %s4
  // Predicated region
  $region2: #{_lambda_.8} parent=0 // pred_check
    _
  $region3: #{_lambda_.8} parent=0 // pred_check_branch
    %9 = sbr.rel (0) target = $region5
  $region4: #{_lambda_.8} parent=0 // pred_region
    _
  $region5: #{_lambda_.8} parent=0 // pred_fallthru
    _
  // Predicated region
  $region6: #{_lambda_.8} parent=0 // pred_check
    _
  $region7: #{_lambda_.8} parent=0 // pred_check_branch
    %11 = sbr.rel (0) target = $region9
  $region8: #{_lambda_.8} parent=0 // pred_region
    _
  $region9: #{_lambda_.8} parent=0 // pred_fallthru
    _
  // Predicated region
  $region10: #{_lambda_.8} parent=0 // pred_check
    _
  $region11: #{_lambda_.8} parent=0 // pred_check_branch
    %13 = sbr.rel (0) target = $region13
  $region12: #{_lambda_.8} parent=0 // pred_region
    _
  $region13: #{_lambda_.8} parent=0 // pred_fallthru
    _
  %p14 = scmp.eq.s32.totalorder 0, 0
  // Predicated region
  $region14: #{_lambda_.8} parent=0 // pred_check
    %p15 = pneg %p14
  $region15: #{_lambda_.8} parent=0 // pred_check_branch
    %17 = sbr.rel (%p15) target = $region17
  $region16: #{_lambda_.8} parent=0 // pred_region
    %18 = vst [vmem:[#allocation2] sm:$0xff] 0.0
    %19 = vst [vmem:[#allocation2 + $0x8] sm:$0xff] 0.0
    %20 = vst [vmem:[#allocation2 + $0x10] sm:$0xff] 0.0
    %21 = vst [vmem:[#allocation2 + $0x18] sm:$0xff] 0.0
    %22 = vst [vmem:[#allocation2 + $0x20] sm:$0xff] 0.0
    %23 = vst [vmem:[#allocation2 + $0x28] sm:$0xff] 0.0
    %24 = vst [vmem:[#allocation2 + $0x30] sm:$0xff] 0.0
    %25 = vst [vmem:[#allocation2 + $0x38] sm:$0xff] 0.0
    %26 = vst [vmem:[#allocation2 + $0x40] sm:$0xff] 0.0
    %27 = vst [vmem:[#allocation2 + $0x48] sm:$0xff] 0.0
    %28 = vst [vmem:[#allocation2 + $0x50] sm:$0xff] 0.0
    %29 = vst [vmem:[#allocation2 + $0x58] sm:$0xff] 0.0
    %30 = vst [vmem:[#allocation2 + $0x60] sm:$0xff] 0.0
    %31 = vst [vmem:[#allocation2 + $0x68] sm:$0xff] 0.0
    %32 = vst [vmem:[#allocation2 + $0x70] sm:$0xff] 0.0
    %33 = vst [vmem:[#allocation2 + $0x78] sm:$0xff] 0.0
    %34 = vst [vmem:[#allocation2 + $0x80] sm:$0xff] 0.0
    %35 = vst [vmem:[#allocation2 + $0x88] sm:$0xff] 0.0
    %36 = vst [vmem:[#allocation2 + $0x90] sm:$0xff] 0.0
    %37 = vst [vmem:[#allocation2 + $0x98] sm:$0xff] 0.0
    %38 = vst [vmem:[#allocation2 + $0xa0] sm:$0xff] 0.0
    %39 = vst [vmem:[#allocation2 + $0xa8] sm:$0xff] 0.0
    %40 = vst [vmem:[#allocation2 + $0xb0] sm:$0xff] 0.0
    %41 = vst [vmem:[#allocation2 + $0xb8] sm:$0xff] 0.0
    %42 = vst [vmem:[#allocation2 + $0xc0] sm:$0xff] 0.0
    %43 = vst [vmem:[#allocation2 + $0xc8] sm:$0xff] 0.0
    %44 = vst [vmem:[#allocation2 + $0xd0] sm:$0xff] 0.0
    %45 = vst [vmem:[#allocation2 + $0xd8] sm:$0xff] 0.0
    %46 = vst [vmem:[#allocation2 + $0xe0] sm:$0xff] 0.0
    %47 = vst [vmem:[#allocation2 + $0xe8] sm:$0xff] 0.0
    %48 = vst [vmem:[#allocation2 + $0xf0] sm:$0xff] 0.0
    %49 = vst [vmem:[#allocation2 + $0xf8] sm:$0xff] 0.0
    %50 = vst [vmem:[#allocation2 + $0x100] sm:$0xff] 0.0
    %51 = vst [vmem:[#allocation2 + $0x108] sm:$0xff] 0.0
    %52 = vst [vmem:[#allocation2 + $0x110] sm:$0xff] 0.0
    %53 = vst [vmem:[#allocation2 + $0x118] sm:$0xff] 0.0
    %54 = vst [vmem:[#allocation2 + $0x120] sm:$0xff] 0.0
    %55 = vst [vmem:[#allocation2 + $0x128] sm:$0xff] 0.0
    %56 = vst [vmem:[#allocation2 + $0x130] sm:$0xff] 0.0
    %57 = vst [vmem:[#allocation2 + $0x138] sm:$0xff] 0.0
    %58 = vst [vmem:[#allocation2 + $0x140] sm:$0xff] 0.0
    %59 = vst [vmem:[#allocation2 + $0x148] sm:$0xff] 0.0
    %60 = vst [vmem:[#allocation2 + $0x150] sm:$0xff] 0.0
    %61 = vst [vmem:[#allocation2 + $0x158] sm:$0xff] 0.0
    %62 = vst [vmem:[#allocation2 + $0x160] sm:$0xff] 0.0
    %63 = vst [vmem:[#allocation2 + $0x168] sm:$0xff] 0.0
    %64 = vst [vmem:[#allocation2 + $0x170] sm:$0xff] 0.0
    %65 = vst [vmem:[#allocation2 + $0x178] sm:$0xff] 0.0
    %66 = vst [vmem:[#allocation2 + $0x180] sm:$0xff] 0.0
    %67 = vst [vmem:[#allocation2 + $0x188] sm:$0xff] 0.0
    %68 = vst [vmem:[#allocation2 + $0x190] sm:$0xff] 0.0
    %69 = vst [vmem:[#allocation2 + $0x198] sm:$0xff] 0.0
    %70 = vst [vmem:[#allocation2 + $0x1a0] sm:$0xff] 0.0
    %71 = vst [vmem:[#allocation2 + $0x1a8] sm:$0xff] 0.0
    %72 = vst [vmem:[#allocation2 + $0x1b0] sm:$0xff] 0.0
    %73 = vst [vmem:[#allocation2 + $0x1b8] sm:$0xff] 0.0
    %74 = vst [vmem:[#allocation2 + $0x1c0] sm:$0xff] 0.0
    %75 = vst [vmem:[#allocation2 + $0x1c8] sm:$0xff] 0.0
    %76 = vst [vmem:[#allocation2 + $0x1d0] sm:$0xff] 0.0
    %77 = vst [vmem:[#allocation2 + $0x1d8] sm:$0xff] 0.0
    %78 = vst [vmem:[#allocation2 + $0x1e0] sm:$0xff] 0.0
    %79 = vst [vmem:[#allocation2 + $0x1e8] sm:$0xff] 0.0
    %80 = vst [vmem:[#allocation2 + $0x1f0] sm:$0xff] 0.0
    %81 = vst [vmem:[#allocation2 + $0x1f8] sm:$0xff] 0.0
  $region17: #{_lambda_.8} parent=0 // pred_fallthru
    _
  %v82 = vld [vmem:[#allocation2] sm:$0xff]
  %v83 = vld [vmem:[#allocation2 + $0x8] sm:$0xff]
  %v84 = vld [vmem:[#allocation2 + $0x10] sm:$0xff]
  %v85 = vld [vmem:[#allocation2 + $0x18] sm:$0xff]
  %v86 = vld [vmem:[#allocation2 + $0x20] sm:$0xff]
  %v87 = vld [vmem:[#allocation2 + $0x28] sm:$0xff]
  %v88 = vld [vmem:[#allocation2 + $0x30] sm:$0xff]
  %v89 = vld [vmem:[#allocation2 + $0x38] sm:$0xff]
  %v90 = vld [vmem:[#allocation2 + $0x40] sm:$0xff]
  %v91 = vld [vmem:[#allocation2 + $0x48] sm:$0xff]
  %v92 = vld [vmem:[#allocation2 + $0x50] sm:$0xff]
  %v93 = vld [vmem:[#allocation2 + $0x58] sm:$0xff]
  %v94 = vld [vmem:[#allocation2 + $0x60] sm:$0xff]
  %v95 = vld [vmem:[#allocation2 + $0x68] sm:$0xff]
  %v96 = vld [vmem:[#allocation2 + $0x70] sm:$0xff]
  %v97 = vld [vmem:[#allocation2 + $0x78] sm:$0xff]
  %v98 = vld [vmem:[#allocation2 + $0x80] sm:$0xff]
  %v99 = vld [vmem:[#allocation2 + $0x88] sm:$0xff]
  %v100 = vld [vmem:[#allocation2 + $0x90] sm:$0xff]
  %v101 = vld [vmem:[#allocation2 + $0x98] sm:$0xff]
  %v102 = vld [vmem:[#allocation2 + $0xa0] sm:$0xff]
  %v103 = vld [vmem:[#allocation2 + $0xa8] sm:$0xff]
  %v104 = vld [vmem:[#allocation2 + $0xb0] sm:$0xff]
  %v105 = vld [vmem:[#allocation2 + $0xb8] sm:$0xff]
  %v106 = vld [vmem:[#allocation2 + $0xc0] sm:$0xff]
  %v107 = vld [vmem:[#allocation2 + $0xc8] sm:$0xff]
  %v108 = vld [vmem:[#allocation2 + $0xd0] sm:$0xff]
  %v109 = vld [vmem:[#allocation2 + $0xd8] sm:$0xff]
  %v110 = vld [vmem:[#allocation2 + $0xe0] sm:$0xff]
  %v111 = vld [vmem:[#allocation2 + $0xe8] sm:$0xff]
  %v112 = vld [vmem:[#allocation2 + $0xf0] sm:$0xff]
  %v113 = vld [vmem:[#allocation2 + $0xf8] sm:$0xff]
  %v114 = vld [vmem:[#allocation2 + $0x100] sm:$0xff]
  %v115 = vld [vmem:[#allocation2 + $0x108] sm:$0xff]
  %v116 = vld [vmem:[#allocation2 + $0x110] sm:$0xff]
  %v117 = vld [vmem:[#allocation2 + $0x118] sm:$0xff]
  %v118 = vld [vmem:[#allocation2 + $0x120] sm:$0xff]
  %v119 = vld [vmem:[#allocation2 + $0x128] sm:$0xff]
  %v120 = vld [vmem:[#allocation2 + $0x130] sm:$0xff]
  %v121 = vld [vmem:[#allocation2 + $0x138] sm:$0xff]
  %v122 = vld [vmem:[#allocation2 + $0x140] sm:$0xff]
  %v123 = vld [vmem:[#allocation2 + $0x148] sm:$0xff]
  %v124 = vld [vmem:[#allocation2 + $0x150] sm:$0xff]
  %v125 = vld [vmem:[#allocation2 + $0x158] sm:$0xff]
  %v126 = vld [vmem:[#allocation2 + $0x160] sm:$0xff]
  %v127 = vld [vmem:[#allocation2 + $0x168] sm:$0xff]
  %v128 = vld [vmem:[#allocation2 + $0x170] sm:$0xff]
  %v129 = vld [vmem:[#allocation2 + $0x178] sm:$0xff]
  %v130 = vld [vmem:[#allocation2 + $0x180] sm:$0xff]
  %v131 = vld [vmem:[#allocation2 + $0x188] sm:$0xff]
  %v132 = vld [vmem:[#allocation2 + $0x190] sm:$0xff]
  %v133 = vld [vmem:[#allocation2 + $0x198] sm:$0xff]
  %v134 = vld [vmem:[#allocation2 + $0x1a0] sm:$0xff]
  %v135 = vld [vmem:[#allocation2 + $0x1a8] sm:$0xff]
  %v136 = vld [vmem:[#allocation2 + $0x1b0] sm:$0xff]
  %v137 = vld [vmem:[#allocation2 + $0x1b8] sm:$0xff]
  %v138 = vld [vmem:[#allocation2 + $0x1c0] sm:$0xff]
  %v139 = vld [vmem:[#allocation2 + $0x1c8] sm:$0xff]
  %v140 = vld [vmem:[#allocation2 + $0x1d0] sm:$0xff]
  %v141 = vld [vmem:[#allocation2 + $0x1d8] sm:$0xff]
  %v142 = vld [vmem:[#allocation2 + $0x1e0] sm:$0xff]
  %v143 = vld [vmem:[#allocation2 + $0x1e8] sm:$0xff]
  %v144 = vld [vmem:[#allocation2 + $0x1f0] sm:$0xff]
  %v145 = vld [vmem:[#allocation2 + $0x1f8] sm:$0xff]
  %v146 = vld [vmem:[%s0] sm:$0xff]
  %v147 = vld [vmem:[%s0 + $0x8] sm:$0xff]
  %v148 = vld [vmem:[%s0 + $0x10] sm:$0xff]
  %v149 = vld [vmem:[%s0 + $0x18] sm:$0xff]
  %v150 = vld [vmem:[%s0 + $0x20] sm:$0xff]
  %v151 = vld [vmem:[%s0 + $0x28] sm:$0xff]
  %v152 = vld [vmem:[%s0 + $0x30] sm:$0xff]
  %v153 = vld [vmem:[%s0 + $0x38] sm:$0xff]
  %v154 = vld [vmem:[%s0 + $0x40] sm:$0xff]
  %v155 = vld [vmem:[%s0 + $0x48] sm:$0xff]
  %v156 = vld [vmem:[%s0 + $0x50] sm:$0xff]
  %v157 = vld [vmem:[%s0 + $0x58] sm:$0xff]
  %v158 = vld [vmem:[%s0 + $0x60] sm:$0xff]
  %v159 = vld [vmem:[%s0 + $0x68] sm:$0xff]
  %v160 = vld [vmem:[%s0 + $0x70] sm:$0xff]
  %v161 = vld [vmem:[%s0 + $0x78] sm:$0xff]
  %v162 = vld [vmem:[%s0 + $0x80] sm:$0xff]
  %v163 = vld [vmem:[%s0 + $0x88] sm:$0xff]
  %v164 = vld [vmem:[%s0 + $0x90] sm:$0xff]
  %v165 = vld [vmem:[%s0 + $0x98] sm:$0xff]
  %v166 = vld [vmem:[%s0 + $0xa0] sm:$0xff]
  %v167 = vld [vmem:[%s0 + $0xa8] sm:$0xff]
  %v168 = vld [vmem:[%s0 + $0xb0] sm:$0xff]
  %v169 = vld [vmem:[%s0 + $0xb8] sm:$0xff]
  %v170 = vld [vmem:[%s0 + $0xc0] sm:$0xff]
  %v171 = vld [vmem:[%s0 + $0xc8] sm:$0xff]
  %v172 = vld [vmem:[%s0 + $0xd0] sm:$0xff]
  %v173 = vld [vmem:[%s0 + $0xd8] sm:$0xff]
  %v174 = vld [vmem:[%s0 + $0xe0] sm:$0xff]
  %v175 = vld [vmem:[%s0 + $0xe8] sm:$0xff]
  %v176 = vld [vmem:[%s0 + $0xf0] sm:$0xff]
  %v177 = vld [vmem:[%s0 + $0xf8] sm:$0xff]
  %v178 = vld [vmem:[%s0 + $0x100] sm:$0xff]
  %v179 = vld [vmem:[%s0 + $0x108] sm:$0xff]
  %v180 = vld [vmem:[%s0 + $0x110] sm:$0xff]
  %v181 = vld [vmem:[%s0 + $0x118] sm:$0xff]
  %v182 = vld [vmem:[%s0 + $0x120] sm:$0xff]
  %v183 = vld [vmem:[%s0 + $0x128] sm:$0xff]
  %v184 = vld [vmem:[%s0 + $0x130] sm:$0xff]
  %v185 = vld [vmem:[%s0 + $0x138] sm:$0xff]
  %v186 = vld [vmem:[%s0 + $0x140] sm:$0xff]
  %v187 = vld [vmem:[%s0 + $0x148] sm:$0xff]
  %v188 = vld [vmem:[%s0 + $0x150] sm:$0xff]
  %v189 = vld [vmem:[%s0 + $0x158] sm:$0xff]
  %v190 = vld [vmem:[%s0 + $0x160] sm:$0xff]
  %v191 = vld [vmem:[%s0 + $0x168] sm:$0xff]
  %v192 = vld [vmem:[%s0 + $0x170] sm:$0xff]
  %v193 = vld [vmem:[%s0 + $0x178] sm:$0xff]
  %v194 = vld [vmem:[%s0 + $0x180] sm:$0xff]
  %v195 = vld [vmem:[%s0 + $0x188] sm:$0xff]
  %v196 = vld [vmem:[%s0 + $0x190] sm:$0xff]
  %v197 = vld [vmem:[%s0 + $0x198] sm:$0xff]
  %v198 = vld [vmem:[%s0 + $0x1a0] sm:$0xff]
  %v199 = vld [vmem:[%s0 + $0x1a8] sm:$0xff]
  %v200 = vld [vmem:[%s0 + $0x1b0] sm:$0xff]
  %v201 = vld [vmem:[%s0 + $0x1b8] sm:$0xff]
  %v202 = vld [vmem:[%s0 + $0x1c0] sm:$0xff]
  %v203 = vld [vmem:[%s0 + $0x1c8] sm:$0xff]
  %v204 = vld [vmem:[%s0 + $0x1d0] sm:$0xff]
  %v205 = vld [vmem:[%s0 + $0x1d8] sm:$0xff]
  %v206 = vld [vmem:[%s0 + $0x1e0] sm:$0xff]
  %v207 = vld [vmem:[%s0 + $0x1e8] sm:$0xff]
  %v208 = vld [vmem:[%s0 + $0x1f0] sm:$0xff]
  %v209 = vld [vmem:[%s0 + $0x1f8] sm:$0xff]
  %v210 = vld [vmem:[%s1] sm:$0xff]
  %v211 = vld [vmem:[%s1 + $0x8] sm:$0xff]
  %v212 = vld [vmem:[%s1 + $0x10] sm:$0xff]
  %v213 = vld [vmem:[%s1 + $0x18] sm:$0xff]
  %v214 = vld [vmem:[%s1 + $0x20] sm:$0xff]
  %v215 = vld [vmem:[%s1 + $0x28] sm:$0xff]
  %v216 = vld [vmem:[%s1 + $0x30] sm:$0xff]
  %v217 = vld [vmem:[%s1 + $0x38] sm:$0xff]
  %v218 = vld [vmem:[%s1 + $0x40] sm:$0xff]
  %v219 = vld [vmem:[%s1 + $0x48] sm:$0xff]
  %v220 = vld [vmem:[%s1 + $0x50] sm:$0xff]
  %v221 = vld [vmem:[%s1 + $0x58] sm:$0xff]
  %v222 = vld [vmem:[%s1 + $0x60] sm:$0xff]
  %v223 = vld [vmem:[%s1 + $0x68] sm:$0xff]
  %v224 = vld [vmem:[%s1 + $0x70] sm:$0xff]
  %v225 = vld [vmem:[%s1 + $0x78] sm:$0xff]
  %226 = vmatprep.subr.mxu0 0.0
  %227 = vmatpush1.msra.mxu0 %v210
  %228 = vmatprep.subr.mxu0 0.0
  %229 = vmatpush1.msra.mxu0 %v211
  %230 = vmatprep.subr.mxu0 0.0
  %231 = vmatpush1.msra.mxu0 %v212
  %232 = vmatprep.subr.mxu0 0.0
  %233 = vmatpush1.msra.mxu0 %v213
  %234 = vmatprep.subr.mxu0 0.0
  %235 = vmatpush1.msra.mxu0 %v214
  %236 = vmatprep.subr.mxu0 0.0
  %237 = vmatpush1.msra.mxu0 %v215
  %238 = vmatprep.subr.mxu0 0.0
  %239 = vmatpush1.msra.mxu0 %v216
  %240 = vmatprep.subr.mxu0 0.0
  %241 = vmatpush1.msra.mxu0 %v217
  %242 = vmatprep.subr.mxu0 0.0
  %243 = vmatpush1.msra.mxu0 %v218
  %244 = vmatprep.subr.mxu0 0.0
  %245 = vmatpush1.msra.mxu0 %v219
  %246 = vmatprep.subr.mxu0 0.0
  %247 = vmatpush1.msra.mxu0 %v220
  %248 = vmatprep.subr.mxu0 0.0
  %249 = vmatpush1.msra.mxu0 %v221
  %250 = vmatprep.subr.mxu0 0.0
  %251 = vmatpush1.msra.mxu0 %v222
  %252 = vmatprep.subr.mxu0 0.0
  %253 = vmatpush1.msra.mxu0 %v223
  %254 = vmatprep.subr.mxu0 0.0
  %255 = vmatpush1.msra.mxu0 %v224
  %256 = vmatprep.subr.mxu0 0.0
  %257 = vmatpush1.msra.mxu0 %v225
  %258 = vmatprep.subr.mxu0 0.0
  %259 = vmatpush1.msra.mxu0 0.0
  %260 = vmatprep.subr.mxu0 0.0
  %261 = vmatpush1.msra.mxu0 0.0
  %262 = vmatprep.subr.mxu0 0.0
  %263 = vmatpush1.msra.mxu0 0.0
  %264 = vmatprep.subr.mxu0 0.0
  %265 = vmatpush1.msra.mxu0 0.0
  %266 = vmatprep.subr.mxu0 0.0
  %267 = vmatpush1.msra.mxu0 0.0
  %268 = vmatprep.subr.mxu0 0.0
  %269 = vmatpush1.msra.mxu0 0.0
  %270 = vmatprep.subr.mxu0 0.0
  %271 = vmatpush1.msra.mxu0 0.0
  %272 = vmatprep.subr.mxu0 0.0
  %273 = vmatpush1.msra.mxu0 0.0
  %274 = vmatprep.subr.mxu0 0.0
  %275 = vmatpush1.msra.mxu0 0.0
  %276 = vmatprep.subr.mxu0 0.0
  %277 = vmatpush1.msra.mxu0 0.0
  %278 = vmatprep.subr.mxu0 0.0
  %279 = vmatpush1.msra.mxu0 0.0
  %280 = vmatprep.subr.mxu0 0.0
  %281 = vmatpush1.msra.mxu0 0.0
  %282 = vmatprep.subr.mxu0 0.0
  %283 = vmatpush1.msra.mxu0 0.0
  %284 = vmatprep.subr.mxu0 0.0
  %285 = vmatpush1.msra.mxu0 0.0
  %286 = vmatprep.subr.mxu0 0.0
  %287 = vmatpush1.msra.mxu0 0.0
  %288 = vmatprep.subr.mxu0 0.0
  %289 = vmatpush1.msra.mxu0 0.0
  %290 = vmatprep.mubr.f32.mxu0 0.0
  %291 = vmatmul.mubr.f32.gmra.mrb[0].mxu0 %v146
  %v292 = vpop.f32.mrb[0].mxu0
  %v293 = vadd.f32 0.0, %v292
  %v294 = vpop.f32.mrb[0].mxu0
  %295 = vmatprep.mubr.f32.mxu0 0.0
  %296 = vmatmul.mubr.f32.gmra.mrb[0].mxu0 %v147
  %v297 = vpop.f32.mrb[0].mxu0
  %v298 = vadd.f32 0.0, %v297
  %v299 = vpop.f32.mrb[0].mxu0
  %300 = vmatprep.mubr.f32.mxu0 0.0
  %301 = vmatmul.mubr.f32.gmra.mrb[0].mxu0 %v148
  %v302 = vpop.f32.mrb[0].mxu0
  %v303 = vadd.f32 0.0, %v302
  %v304 = vpop.f32.mrb[0].mxu0
  %305 = vmatprep.mubr.f32.mxu0 0.0
  %306 = vmatmul.mubr.f32.gmra.mrb[0].mxu0 %v149
  %v307 = vpop.f32.mrb[0].mxu0
  %v308 = vadd.f32 0.0, %v307
  %v309 = vpop.f32.mrb[0].mxu0
  %310 = vmatprep.mubr.f32.mxu0 0.0
  %311 = vmatmul.mubr.f32.gmra.mrb[0].mxu0 %v150
  %v312 = vpop.f32.mrb[0].mxu0
  %v313 = vadd.f32 0.0, %v312
  %v314 = vpop.f32.mrb[0].mxu0
  %315 = vmatprep.mubr.f32.mxu0 0.0
  %316 = vmatmul.mubr.f32.gmra.mrb[0].mxu0 %v151
  %v317 = vpop.f32.mrb[0].mxu0
  %v318 = vadd.f32 0.0, %v317
  %v319 = vpop.f32.mrb[0].mxu0
  %320 = vmatprep.mubr.f32.mxu0 0.0
  %321 = vmatmul.mubr.f32.gmra.mrb[0].mxu0 %v152
  %v322 = vpop.f32.mrb[0].mxu0
  %v323 = vadd.f32 0.0, %v322
  %v324 = vpop.f32.mrb[0].mxu0
  %325 = vmatprep.mubr.f32.mxu0 0.0
  %326 = vmatmul.mubr.f32.gmra.mrb[0].mxu0 %v153
  %v327 = vpop.f32.mrb[0].mxu0
  %v328 = vadd.f32 0.0, %v327
  %v329 = vpop.f32.mrb[0].mxu0
  %330 = vmatprep.mubr.f32.mxu0 0.0
  %331 = vmatmul.mubr.f32.gmra.mrb[0].mxu0 %v154
  %v332 = vpop.f32.mrb[0].mxu0
  %v333 = vadd.f32 0.0, %v332
  %v334 = vpop.f32.mrb[0].mxu0
  %335 = vmatprep.mubr.f32.mxu0 0.0
  %336 = vmatmul.mubr.f32.gmra.mrb[0].mxu0 %v155
  %v337 = vpop.f32.mrb[0].mxu0
  %v338 = vadd.f32 0.0, %v337
  %v339 = vpop.f32.mrb[0].mxu0
  %340 = vmatprep.mubr.f32.mxu0 0.0
  %341 = vmatmul.mubr.f32.gmra.mrb[0].mxu0 %v156
  %v342 = vpop.f32.mrb[0].mxu0
  %v343 = vadd.f32 0.0, %v342
  %v344 = vpop.f32.mrb[0].mxu0
  %345 = vmatprep.mubr.f32.mxu0 0.0
  %346 = vmatmul.mubr.f32.gmra.mrb[0].mxu0 %v157
  %v347 = vpop.f32.mrb[0].mxu0
  %v348 = vadd.f32 0.0, %v347
  %v349 = vpop.f32.mrb[0].mxu0
  %350 = vmatprep.mubr.f32.mxu0 0.0
  %351 = vmatmul.mubr.f32.gmra.mrb[0].mxu0 %v158
  %v352 = vpop.f32.mrb[0].mxu0
  %v353 = vadd.f32 0.0, %v352
  %v354 = vpop.f32.mrb[0].mxu0
  %355 = vmatprep.mubr.f32.mxu0 0.0
  %356 = vmatmul.mubr.f32.gmra.mrb[0].mxu0 %v159
  %v357 = vpop.f32.mrb[0].mxu0
  %v358 = vadd.f32 0.0, %v357
  %v359 = vpop.f32.mrb[0].mxu0
  %360 = vmatprep.mubr.f32.mxu0 0.0
  %361 = vmatmul.mubr.f32.gmra.mrb[0].mxu0 %v160
  %v362 = vpop.f32.mrb[0].mxu0
  %v363 = vadd.f32 0.0, %v362
  %v364 = vpop.f32.mrb[0].mxu0
  %365 = vmatprep.mubr.f32.mxu0 0.0
  %366 = vmatmul.mubr.f32.gmra.mrb[0].mxu0 %v161
  %v367 = vpop.f32.mrb[0].mxu0
  %v368 = vadd.f32 0.0, %v367
  %v369 = vpop.f32.mrb[0].mxu0
  %370 = vmatprep.mubr.f32.mxu0 0.0
  %371 = vmatmul.mubr.f32.gmra.mrb[0].mxu0 %v162
  %v372 = vpop.f32.mrb[0].mxu0
  %v373 = vadd.f32 0.0, %v372
  %v374 = vpop.f32.mrb[0].mxu0
  %375 = vmatprep.mubr.f32.mxu0 0.0
  %376 = vmatmul.mubr.f32.gmra.mrb[0].mxu0 %v163
  %v377 = vpop.f32.mrb[0].mxu0
  %v378 = vadd.f32 0.0, %v377
  %v379 = vpop.f32.mrb[0].mxu0
  %380 = vmatprep.mubr.f32.mxu0 0.0
  %381 = vmatmul.mubr.f32.gmra.mrb[0].mxu0 %v164
  %v382 = vpop.f32.mrb[0].mxu0
  %v383 = vadd.f32 0.0, %v382
  %v384 = vpop.f32.mrb[0].mxu0
  %385 = vmatprep.mubr.f32.mxu0 0.0
  %386 = vmatmul.mubr.f32.gmra.mrb[0].mxu0 %v165
  %v387 = vpop.f32.mrb[0].mxu0
  %v388 = vadd.f32 0.0, %v387
  %v389 = vpop.f32.mrb[0].mxu0
  %390 = vmatprep.mubr.f32.mxu0 0.0
  %391 = vmatmul.mubr.f32.gmra.mrb[0].mxu0 %v166
  %v392 = vpop.f32.mrb[0].mxu0
  %v393 = vadd.f32 0.0, %v392
  %v394 = vpop.f32.mrb[0].mxu0
  %395 = vmatprep.mubr.f32.mxu0 0.0
  %396 = vmatmul.mubr.f32.gmra.mrb[0].mxu0 %v167
  %v397 = vpop.f32.mrb[0].mxu0
  %v398 = vadd.f32 0.0, %v397
  %v399 = vpop.f32.mrb[0].mxu0
  %400 = vmatprep.mubr.f32.mxu0 0.0
  %401 = vmatmul.mubr.f32.gmra.mrb[0].mxu0 %v168
  %v402 = vpop.f32.mrb[0].mxu0
  %v403 = vadd.f32 0.0, %v402
  %v404 = vpop.f32.mrb[0].mxu0
  %405 = vmatprep.mubr.f32.mxu0 0.0
  %406 = vmatmul.mubr.f32.gmra.mrb[0].mxu0 %v169
  %v407 = vpop.f32.mrb[0].mxu0
  %v408 = vadd.f32 0.0, %v407
  %v409 = vpop.f32.mrb[0].mxu0
  %410 = vmatprep.mubr.f32.mxu0 0.0
  %411 = vmatmul.mubr.f32.gmra.mrb[0].mxu0 %v170
  %v412 = vpop.f32.mrb[0].mxu0
  %v413 = vadd.f32 0.0, %v412
  %v414 = vpop.f32.mrb[0].mxu0
  %415 = vmatprep.mubr.f32.mxu0 0.0
  %416 = vmatmul.mubr.f32.gmra.mrb[0].mxu0 %v171
  %v417 = vpop.f32.mrb[0].mxu0
  %v418 = vadd.f32 0.0, %v417
  %v419 = vpop.f32.mrb[0].mxu0
  %420 = vmatprep.mubr.f32.mxu0 0.0
  %421 = vmatmul.mubr.f32.gmra.mrb[0].mxu0 %v172
  %v422 = vpop.f32.mrb[0].mxu0
  %v423 = vadd.f32 0.0, %v422
  %v424 = vpop.f32.mrb[0].mxu0
  %425 = vmatprep.mubr.f32.mxu0 0.0
  %426 = vmatmul.mubr.f32.gmra.mrb[0].mxu0 %v173
  %v427 = vpop.f32.mrb[0].mxu0
  %v428 = vadd.f32 0.0, %v427
  %v429 = vpop.f32.mrb[0].mxu0
  %430 = vmatprep.mubr.f32.mxu0 0.0
  %431 = vmatmul.mubr.f32.gmra.mrb[0].mxu0 %v174
  %v432 = vpop.f32.mrb[0].mxu0
  %v433 = vadd.f32 0.0, %v432
  %v434 = vpop.f32.mrb[0].mxu0
  %435 = vmatprep.mubr.f32.mxu0 0.0
  %436 = vmatmul.mubr.f32.gmra.mrb[0].mxu0 %v175
  %v437 = vpop.f32.mrb[0].mxu0
  %v438 = vadd.f32 0.0, %v437
  %v439 = vpop.f32.mrb[0].mxu0
  %440 = vmatprep.mubr.f32.mxu0 0.0
  %441 = vmatmul.mubr.f32.gmra.mrb[0].mxu0 %v176
  %v442 = vpop.f32.mrb[0].mxu0
  %v443 = vadd.f32 0.0, %v442
  %v444 = vpop.f32.mrb[0].mxu0
  %445 = vmatprep.mubr.f32.mxu0 0.0
  %446 = vmatmul.mubr.f32.gmra.mrb[0].mxu0 %v177
  %v447 = vpop.f32.mrb[0].mxu0
  %v448 = vadd.f32 0.0, %v447
  %v449 = vpop.f32.mrb[0].mxu0
  %450 = vmatprep.mubr.f32.mxu0 0.0
  %451 = vmatmul.mubr.f32.gmra.mrb[0].mxu0 %v178
  %v452 = vpop.f32.mrb[0].mxu0
  %v453 = vadd.f32 0.0, %v452
  %v454 = vpop.f32.mrb[0].mxu0
  %455 = vmatprep.mubr.f32.mxu0 0.0
  %456 = vmatmul.mubr.f32.gmra.mrb[0].mxu0 %v179
  %v457 = vpop.f32.mrb[0].mxu0
  %v458 = vadd.f32 0.0, %v457
  %v459 = vpop.f32.mrb[0].mxu0
  %460 = vmatprep.mubr.f32.mxu0 0.0
  %461 = vmatmul.mubr.f32.gmra.mrb[0].mxu0 %v180
  %v462 = vpop.f32.mrb[0].mxu0
  %v463 = vadd.f32 0.0, %v462
  %v464 = vpop.f32.mrb[0].mxu0
  %465 = vmatprep.mubr.f32.mxu0 0.0
  %466 = vmatmul.mubr.f32.gmra.mrb[0].mxu0 %v181
  %v467 = vpop.f32.mrb[0].mxu0
  %v468 = vadd.f32 0.0, %v467
  %v469 = vpop.f32.mrb[0].mxu0
  %470 = vmatprep.mubr.f32.mxu0 0.0
  %471 = vmatmul.mubr.f32.gmra.mrb[0].mxu0 %v182
  %v472 = vpop.f32.mrb[0].mxu0
  %v473 = vadd.f32 0.0, %v472
  %v474 = vpop.f32.mrb[0].mxu0
  %475 = vmatprep.mubr.f32.mxu0 0.0
  %476 = vmatmul.mubr.f32.gmra.mrb[0].mxu0 %v183
  %v477 = vpop.f32.mrb[0].mxu0
  %v478 = vadd.f32 0.0, %v477
  %v479 = vpop.f32.mrb[0].mxu0
  %480 = vmatprep.mubr.f32.mxu0 0.0
  %481 = vmatmul.mubr.f32.gmra.mrb[0].mxu0 %v184
  %v482 = vpop.f32.mrb[0].mxu0
  %v483 = vadd.f32 0.0, %v482
  %v484 = vpop.f32.mrb[0].mxu0
  %485 = vmatprep.mubr.f32.mxu0 0.0
  %486 = vmatmul.mubr.f32.gmra.mrb[0].mxu0 %v185
  %v487 = vpop.f32.mrb[0].mxu0
  %v488 = vadd.f32 0.0, %v487
  %v489 = vpop.f32.mrb[0].mxu0
  %490 = vmatprep.mubr.f32.mxu0 0.0
  %491 = vmatmul.mubr.f32.gmra.mrb[0].mxu0 %v186
  %v492 = vpop.f32.mrb[0].mxu0
  %v493 = vadd.f32 0.0, %v492
  %v494 = vpop.f32.mrb[0].mxu0
  %495 = vmatprep.mubr.f32.mxu0 0.0
  %496 = vmatmul.mubr.f32.gmra.mrb[0].mxu0 %v187
  %v497 = vpop.f32.mrb[0].mxu0
  %v498 = vadd.f32 0.0, %v497
  %v499 = vpop.f32.mrb[0].mxu0
  %500 = vmatprep.mubr.f32.mxu0 0.0
  %501 = vmatmul.mubr.f32.gmra.mrb[0].mxu0 %v188
  %v502 = vpop.f32.mrb[0].mxu0
  %v503 = vadd.f32 0.0, %v502
  %v504 = vpop.f32.mrb[0].mxu0
  %505 = vmatprep.mubr.f32.mxu0 0.0
  %506 = vmatmul.mubr.f32.gmra.mrb[0].mxu0 %v189
  %v507 = vpop.f32.mrb[0].mxu0
  %v508 = vadd.f32 0.0, %v507
  %v509 = vpop.f32.mrb[0].mxu0
  %510 = vmatprep.mubr.f32.mxu0 0.0
  %511 = vmatmul.mubr.f32.gmra.mrb[0].mxu0 %v190
  %v512 = vpop.f32.mrb[0].mxu0
  %v513 = vadd.f32 0.0, %v512
  %v514 = vpop.f32.mrb[0].mxu0
  %515 = vmatprep.mubr.f32.mxu0 0.0
  %516 = vmatmul.mubr.f32.gmra.mrb[0].mxu0 %v191
  %v517 = vpop.f32.mrb[0].mxu0
  %v518 = vadd.f32 0.0, %v517
  %v519 = vpop.f32.mrb[0].mxu0
  %520 = vmatprep.mubr.f32.mxu0 0.0
  %521 = vmatmul.mubr.f32.gmra.mrb[0].mxu0 %v192
  %v522 = vpop.f32.mrb[0].mxu0
  %v523 = vadd.f32 0.0, %v522
  %v524 = vpop.f32.mrb[0].mxu0
  %525 = vmatprep.mubr.f32.mxu0 0.0
  %526 = vmatmul.mubr.f32.gmra.mrb[0].mxu0 %v193
  %v527 = vpop.f32.mrb[0].mxu0
  %v528 = vadd.f32 0.0, %v527
  %v529 = vpop.f32.mrb[0].mxu0
  %530 = vmatprep.mubr.f32.mxu0 0.0
  %531 = vmatmul.mubr.f32.gmra.mrb[0].mxu0 %v194
  %v532 = vpop.f32.mrb[0].mxu0
  %v533 = vadd.f32 0.0, %v532
  %v534 = vpop.f32.mrb[0].mxu0
  %535 = vmatprep.mubr.f32.mxu0 0.0
  %536 = vmatmul.mubr.f32.gmra.mrb[0].mxu0 %v195
  %v537 = vpop.f32.mrb[0].mxu0
  %v538 = vadd.f32 0.0, %v537
  %v539 = vpop.f32.mrb[0].mxu0
  %540 = vmatprep.mubr.f32.mxu0 0.0
  %541 = vmatmul.mubr.f32.gmra.mrb[0].mxu0 %v196
  %v542 = vpop.f32.mrb[0].mxu0
  %v543 = vadd.f32 0.0, %v542
  %v544 = vpop.f32.mrb[0].mxu0
  %545 = vmatprep.mubr.f32.mxu0 0.0
  %546 = vmatmul.mubr.f32.gmra.mrb[0].mxu0 %v197
  %v547 = vpop.f32.mrb[0].mxu0
  %v548 = vadd.f32 0.0, %v547
  %v549 = vpop.f32.mrb[0].mxu0
  %550 = vmatprep.mubr.f32.mxu0 0.0
  %551 = vmatmul.mubr.f32.gmra.mrb[0].mxu0 %v198
  %v552 = vpop.f32.mrb[0].mxu0
  %v553 = vadd.f32 0.0, %v552
  %v554 = vpop.f32.mrb[0].mxu0
  %555 = vmatprep.mubr.f32.mxu0 0.0
  %556 = vmatmul.mubr.f32.gmra.mrb[0].mxu0 %v199
  %v557 = vpop.f32.mrb[0].mxu0
  %v558 = vadd.f32 0.0, %v557
  %v559 = vpop.f32.mrb[0].mxu0
  %560 = vmatprep.mubr.f32.mxu0 0.0
  %561 = vmatmul.mubr.f32.gmra.mrb[0].mxu0 %v200
  %v562 = vpop.f32.mrb[0].mxu0
  %v563 = vadd.f32 0.0, %v562
  %v564 = vpop.f32.mrb[0].mxu0
  %565 = vmatprep.mubr.f32.mxu0 0.0
  %566 = vmatmul.mubr.f32.gmra.mrb[0].mxu0 %v201
  %v567 = vpop.f32.mrb[0].mxu0
  %v568 = vadd.f32 0.0, %v567
  %v569 = vpop.f32.mrb[0].mxu0
  %570 = vmatprep.mubr.f32.mxu0 0.0
  %571 = vmatmul.mubr.f32.gmra.mrb[0].mxu0 %v202
  %v572 = vpop.f32.mrb[0].mxu0
  %v573 = vadd.f32 0.0, %v572
  %v574 = vpop.f32.mrb[0].mxu0
  %575 = vmatprep.mubr.f32.mxu0 0.0
  %576 = vmatmul.mubr.f32.gmra.mrb[0].mxu0 %v203
  %v577 = vpop.f32.mrb[0].mxu0
  %v578 = vadd.f32 0.0, %v577
  %v579 = vpop.f32.mrb[0].mxu0
  %580 = vmatprep.mubr.f32.mxu0 0.0
  %581 = vmatmul.mubr.f32.gmra.mrb[0].mxu0 %v204
  %v582 = vpop.f32.mrb[0].mxu0
  %v583 = vadd.f32 0.0, %v582
  %v584 = vpop.f32.mrb[0].mxu0
  %585 = vmatprep.mubr.f32.mxu0 0.0
  %586 = vmatmul.mubr.f32.gmra.mrb[0].mxu0 %v205
  %v587 = vpop.f32.mrb[0].mxu0
  %v588 = vadd.f32 0.0, %v587
  %v589 = vpop.f32.mrb[0].mxu0
  %590 = vmatprep.mubr.f32.mxu0 0.0
  %591 = vmatmul.mubr.f32.gmra.mrb[0].mxu0 %v206
  %v592 = vpop.f32.mrb[0].mxu0
  %v593 = vadd.f32 0.0, %v592
  %v594 = vpop.f32.mrb[0].mxu0
  %595 = vmatprep.mubr.f32.mxu0 0.0
  %596 = vmatmul.mubr.f32.gmra.mrb[0].mxu0 %v207
  %v597 = vpop.f32.mrb[0].mxu0
  %v598 = vadd.f32 0.0, %v597
  %v599 = vpop.f32.mrb[0].mxu0
  %600 = vmatprep.mubr.f32.mxu0 0.0
  %601 = vmatmul.mubr.f32.gmra.mrb[0].mxu0 %v208
  %v602 = vpop.f32.mrb[0].mxu0
  %v603 = vadd.f32 0.0, %v602
  %v604 = vpop.f32.mrb[0].mxu0
  %605 = vmatprep.mubr.f32.mxu0 0.0
  %606 = vmatmul.mubr.f32.gmra.mrb[0].mxu0 %v209
  %v607 = vpop.f32.mrb[0].mxu0
  %v608 = vadd.f32 0.0, %v607
  %v609 = vpop.f32.mrb[0].mxu0
  %610 = vdwg.mxu0
  %v611 = vadd.f32 %v82, %v293
  %v612 = vadd.f32 %v83, %v298
  %v613 = vadd.f32 %v84, %v303
  %v614 = vadd.f32 %v85, %v308
  %v615 = vadd.f32 %v86, %v313
  %v616 = vadd.f32 %v87, %v318
  %v617 = vadd.f32 %v88, %v323
  %v618 = vadd.f32 %v89, %v328
  %v619 = vadd.f32 %v90, %v333
  %v620 = vadd.f32 %v91, %v338
  %v621 = vadd.f32 %v92, %v343
  %v622 = vadd.f32 %v93, %v348
  %v623 = vadd.f32 %v94, %v353
  %v624 = vadd.f32 %v95, %v358
  %v625 = vadd.f32 %v96, %v363
  %v626 = vadd.f32 %v97, %v368
  %v627 = vadd.f32 %v98, %v373
  %v628 = vadd.f32 %v99, %v378
  %v629 = vadd.f32 %v100, %v383
  %v630 = vadd.f32 %v101, %v388
  %v631 = vadd.f32 %v102, %v393
  %v632 = vadd.f32 %v103, %v398
  %v633 = vadd.f32 %v104, %v403
  %v634 = vadd.f32 %v105, %v408
  %v635 = vadd.f32 %v106, %v413
  %v636 = vadd.f32 %v107, %v418
  %v637 = vadd.f32 %v108, %v423
  %v638 = vadd.f32 %v109, %v428
  %v639 = vadd.f32 %v110, %v433
  %v640 = vadd.f32 %v111, %v438
  %v641 = vadd.f32 %v112, %v443
  %v642 = vadd.f32 %v113, %v448
  %v643 = vadd.f32 %v114, %v453
  %v644 = vadd.f32 %v115, %v458
  %v645 = vadd.f32 %v116, %v463
  %v646 = vadd.f32 %v117, %v468
  %v647 = vadd.f32 %v118, %v473
  %v648 = vadd.f32 %v119, %v478
  %v649 = vadd.f32 %v120, %v483
  %v650 = vadd.f32 %v121, %v488
  %v651 = vadd.f32 %v122, %v493
  %v652 = vadd.f32 %v123, %v498
  %v653 = vadd.f32 %v124, %v503
  %v654 = vadd.f32 %v125, %v508
  %v655 = vadd.f32 %v126, %v513
  %v656 = vadd.f32 %v127, %v518
  %v657 = vadd.f32 %v128, %v523
  %v658 = vadd.f32 %v129, %v528
  %v659 = vadd.f32 %v130, %v533
  %v660 = vadd.f32 %v131, %v538
  %v661 = vadd.f32 %v132, %v543
  %v662 = vadd.f32 %v133, %v548
  %v663 = vadd.f32 %v134, %v553
  %v664 = vadd.f32 %v135, %v558
  %v665 = vadd.f32 %v136, %v563
  %v666 = vadd.f32 %v137, %v568
  %v667 = vadd.f32 %v138, %v573
  %v668 = vadd.f32 %v139, %v578
  %v669 = vadd.f32 %v140, %v583
  %v670 = vadd.f32 %v141, %v588
  %v671 = vadd.f32 %v142, %v593
  %v672 = vadd.f32 %v143, %v598
  %v673 = vadd.f32 %v144, %v603
  %v674 = vadd.f32 %v145, %v608
  %675 = vst [vmem:[#allocation2] sm:$0xff] %v611
  %676 = vst [vmem:[#allocation2 + $0x8] sm:$0xff] %v612
  %677 = vst [vmem:[#allocation2 + $0x10] sm:$0xff] %v613
  %678 = vst [vmem:[#allocation2 + $0x18] sm:$0xff] %v614
  %679 = vst [vmem:[#allocation2 + $0x20] sm:$0xff] %v615
  %680 = vst [vmem:[#allocation2 + $0x28] sm:$0xff] %v616
  %681 = vst [vmem:[#allocation2 + $0x30] sm:$0xff] %v617
  %682 = vst [vmem:[#allocation2 + $0x38] sm:$0xff] %v618
  %683 = vst [vmem:[#allocation2 + $0x40] sm:$0xff] %v619
  %684 = vst [vmem:[#allocation2 + $0x48] sm:$0xff] %v620
  %685 = vst [vmem:[#allocation2 + $0x50] sm:$0xff] %v621
  %686 = vst [vmem:[#allocation2 + $0x58] sm:$0xff] %v622
  %687 = vst [vmem:[#allocation2 + $0x60] sm:$0xff] %v623
  %688 = vst [vmem:[#allocation2 + $0x68] sm:$0xff] %v624
  %689 = vst [vmem:[#allocation2 + $0x70] sm:$0xff] %v625
  %690 = vst [vmem:[#allocation2 + $0x78] sm:$0xff] %v626
  %691 = vst [vmem:[#allocation2 + $0x80] sm:$0xff] %v627
  %692 = vst [vmem:[#allocation2 + $0x88] sm:$0xff] %v628
  %693 = vst [vmem:[#allocation2 + $0x90] sm:$0xff] %v629
  %694 = vst [vmem:[#allocation2 + $0x98] sm:$0xff] %v630
  %695 = vst [vmem:[#allocation2 + $0xa0] sm:$0xff] %v631
  %696 = vst [vmem:[#allocation2 + $0xa8] sm:$0xff] %v632
  %697 = vst [vmem:[#allocation2 + $0xb0] sm:$0xff] %v633
  %698 = vst [vmem:[#allocation2 + $0xb8] sm:$0xff] %v634
  %699 = vst [vmem:[#allocation2 + $0xc0] sm:$0xff] %v635
  %700 = vst [vmem:[#allocation2 + $0xc8] sm:$0xff] %v636
  %701 = vst [vmem:[#allocation2 + $0xd0] sm:$0xff] %v637
  %702 = vst [vmem:[#allocation2 + $0xd8] sm:$0xff] %v638
  %703 = vst [vmem:[#allocation2 + $0xe0] sm:$0xff] %v639
  %704 = vst [vmem:[#allocation2 + $0xe8] sm:$0xff] %v640
  %705 = vst [vmem:[#allocation2 + $0xf0] sm:$0xff] %v641
  %706 = vst [vmem:[#allocation2 + $0xf8] sm:$0xff] %v642
  %707 = vst [vmem:[#allocation2 + $0x100] sm:$0xff] %v643
  %708 = vst [vmem:[#allocation2 + $0x108] sm:$0xff] %v644
  %709 = vst [vmem:[#allocation2 + $0x110] sm:$0xff] %v645
  %710 = vst [vmem:[#allocation2 + $0x118] sm:$0xff] %v646
  %711 = vst [vmem:[#allocation2 + $0x120] sm:$0xff] %v647
  %712 = vst [vmem:[#allocation2 + $0x128] sm:$0xff] %v648
  %713 = vst [vmem:[#allocation2 + $0x130] sm:$0xff] %v649
  %714 = vst [vmem:[#allocation2 + $0x138] sm:$0xff] %v650
  %715 = vst [vmem:[#allocation2 + $0x140] sm:$0xff] %v651
  %716 = vst [vmem:[#allocation2 + $0x148] sm:$0xff] %v652
  %717 = vst [vmem:[#allocation2 + $0x150] sm:$0xff] %v653
  %718 = vst [vmem:[#allocation2 + $0x158] sm:$0xff] %v654
  %719 = vst [vmem:[#allocation2 + $0x160] sm:$0xff] %v655
  %720 = vst [vmem:[#allocation2 + $0x168] sm:$0xff] %v656
  %721 = vst [vmem:[#allocation2 + $0x170] sm:$0xff] %v657
  %722 = vst [vmem:[#allocation2 + $0x178] sm:$0xff] %v658
  %723 = vst [vmem:[#allocation2 + $0x180] sm:$0xff] %v659
  %724 = vst [vmem:[#allocation2 + $0x188] sm:$0xff] %v660
  %725 = vst [vmem:[#allocation2 + $0x190] sm:$0xff] %v661
  %726 = vst [vmem:[#allocation2 + $0x198] sm:$0xff] %v662
  %727 = vst [vmem:[#allocation2 + $0x1a0] sm:$0xff] %v663
  %728 = vst [vmem:[#allocation2 + $0x1a8] sm:$0xff] %v664
  %729 = vst [vmem:[#allocation2 + $0x1b0] sm:$0xff] %v665
  %730 = vst [vmem:[#allocation2 + $0x1b8] sm:$0xff] %v666
  %731 = vst [vmem:[#allocation2 + $0x1c0] sm:$0xff] %v667
  %732 = vst [vmem:[#allocation2 + $0x1c8] sm:$0xff] %v668
  %733 = vst [vmem:[#allocation2 + $0x1d0] sm:$0xff] %v669
  %734 = vst [vmem:[#allocation2 + $0x1d8] sm:$0xff] %v670
  %735 = vst [vmem:[#allocation2 + $0x1e0] sm:$0xff] %v671
  %736 = vst [vmem:[#allocation2 + $0x1e8] sm:$0xff] %v672
  %737 = vst [vmem:[#allocation2 + $0x1f0] sm:$0xff] %v673
  %738 = vst [vmem:[#allocation2 + $0x1f8] sm:$0xff] %v674
  // Predicated region
  $region18: #{_lambda_.8} parent=0 // pred_check
    %p739 = pneg %p14
  $region19: #{_lambda_.8} parent=0 // pred_check_branch
    %741 = sbr.rel (%p739) target = $region21
  $region20: #{_lambda_.8} parent=0 // pred_region
    %v742 = vld [vmem:[#allocation2] sm:$0xff]
    %v743 = vld [vmem:[#allocation2 + $0x8] sm:$0xff]
    %v744 = vld [vmem:[#allocation2 + $0x10] sm:$0xff]
    %v745 = vld [vmem:[#allocation2 + $0x18] sm:$0xff]
    %v746 = vld [vmem:[#allocation2 + $0x20] sm:$0xff]
    %v747 = vld [vmem:[#allocation2 + $0x28] sm:$0xff]
    %v748 = vld [vmem:[#allocation2 + $0x30] sm:$0xff]
    %v749 = vld [vmem:[#allocation2 + $0x38] sm:$0xff]
    %v750 = vld [vmem:[#allocation2 + $0x40] sm:$0xff]
    %v751 = vld [vmem:[#allocation2 + $0x48] sm:$0xff]
    %v752 = vld [vmem:[#allocation2 + $0x50] sm:$0xff]
    %v753 = vld [vmem:[#allocation2 + $0x58] sm:$0xff]
    %v754 = vld [vmem:[#allocation2 + $0x60] sm:$0xff]
    %v755 = vld [vmem:[#allocation2 + $0x68] sm:$0xff]
    %v756 = vld [vmem:[#allocation2 + $0x70] sm:$0xff]
    %v757 = vld [vmem:[#allocation2 + $0x78] sm:$0xff]
    %v758 = vld [vmem:[#allocation2 + $0x80] sm:$0xff]
    %v759 = vld [vmem:[#allocation2 + $0x88] sm:$0xff]
    %v760 = vld [vmem:[#allocation2 + $0x90] sm:$0xff]
    %v761 = vld [vmem:[#allocation2 + $0x98] sm:$0xff]
    %v762 = vld [vmem:[#allocation2 + $0xa0] sm:$0xff]
    %v763 = vld [vmem:[#allocation2 + $0xa8] sm:$0xff]
    %v764 = vld [vmem:[#allocation2 + $0xb0] sm:$0xff]
    %v765 = vld [vmem:[#allocation2 + $0xb8] sm:$0xff]
    %v766 = vld [vmem:[#allocation2 + $0xc0] sm:$0xff]
    %v767 = vld [vmem:[#allocation2 + $0xc8] sm:$0xff]
    %v768 = vld [vmem:[#allocation2 + $0xd0] sm:$0xff]
    %v769 = vld [vmem:[#allocation2 + $0xd8] sm:$0xff]
    %v770 = vld [vmem:[#allocation2 + $0xe0] sm:$0xff]
    %v771 = vld [vmem:[#allocation2 + $0xe8] sm:$0xff]
    %v772 = vld [vmem:[#allocation2 + $0xf0] sm:$0xff]
    %v773 = vld [vmem:[#allocation2 + $0xf8] sm:$0xff]
    %v774 = vld [vmem:[#allocation2 + $0x100] sm:$0xff]
    %v775 = vld [vmem:[#allocation2 + $0x108] sm:$0xff]
    %v776 = vld [vmem:[#allocation2 + $0x110] sm:$0xff]
    %v777 = vld [vmem:[#allocation2 + $0x118] sm:$0xff]
    %v778 = vld [vmem:[#allocation2 + $0x120] sm:$0xff]
    %v779 = vld [vmem:[#allocation2 + $0x128] sm:$0xff]
    %v780 = vld [vmem:[#allocation2 + $0x130] sm:$0xff]
    %v781 = vld [vmem:[#allocation2 + $0x138] sm:$0xff]
    %v782 = vld [vmem:[#allocation2 + $0x140] sm:$0xff]
    %v783 = vld [vmem:[#allocation2 + $0x148] sm:$0xff]
    %v784 = vld [vmem:[#allocation2 + $0x150] sm:$0xff]
    %v785 = vld [vmem:[#allocation2 + $0x158] sm:$0xff]
    %v786 = vld [vmem:[#allocation2 + $0x160] sm:$0xff]
    %v787 = vld [vmem:[#allocation2 + $0x168] sm:$0xff]
    %v788 = vld [vmem:[#allocation2 + $0x170] sm:$0xff]
    %v789 = vld [vmem:[#allocation2 + $0x178] sm:$0xff]
    %v790 = vld [vmem:[#allocation2 + $0x180] sm:$0xff]
    %v791 = vld [vmem:[#allocation2 + $0x188] sm:$0xff]
    %v792 = vld [vmem:[#allocation2 + $0x190] sm:$0xff]
    %v793 = vld [vmem:[#allocation2 + $0x198] sm:$0xff]
    %v794 = vld [vmem:[#allocation2 + $0x1a0] sm:$0xff]
    %v795 = vld [vmem:[#allocation2 + $0x1a8] sm:$0xff]
    %v796 = vld [vmem:[#allocation2 + $0x1b0] sm:$0xff]
    %v797 = vld [vmem:[#allocation2 + $0x1b8] sm:$0xff]
    %v798 = vld [vmem:[#allocation2 + $0x1c0] sm:$0xff]
    %v799 = vld [vmem:[#allocation2 + $0x1c8] sm:$0xff]
    %v800 = vld [vmem:[#allocation2 + $0x1d0] sm:$0xff]
    %v801 = vld [vmem:[#allocation2 + $0x1d8] sm:$0xff]
    %v802 = vld [vmem:[#allocation2 + $0x1e0] sm:$0xff]
    %v803 = vld [vmem:[#allocation2 + $0x1e8] sm:$0xff]
    %v804 = vld [vmem:[#allocation2 + $0x1f0] sm:$0xff]
    %v805 = vld [vmem:[#allocation2 + $0x1f8] sm:$0xff]
    %v806 = vld [vmem:[%s2] sm:$0x1]
    %v808 = vlaneseq
    %v809 = vshrl.u32 %v808, 7
    %v810 = vsub.s32 0, %v809
    %v811 = vrot.slane %v806, %v810
    %v813 = vadd.f32 %v742, %v811
    %v814 = vadd.f32 %v743, %v811
    %v815 = vadd.f32 %v744, %v811
    %v816 = vadd.f32 %v745, %v811
    %v817 = vadd.f32 %v746, %v811
    %v818 = vadd.f32 %v747, %v811
    %v819 = vadd.f32 %v748, %v811
    %v820 = vadd.f32 %v749, %v811
    %v821 = vadd.f32 %v750, %v811
    %v822 = vadd.f32 %v751, %v811
    %v823 = vadd.f32 %v752, %v811
    %v824 = vadd.f32 %v753, %v811
    %v825 = vadd.f32 %v754, %v811
    %v826 = vadd.f32 %v755, %v811
    %v827 = vadd.f32 %v756, %v811
    %v828 = vadd.f32 %v757, %v811
    %v829 = vadd.f32 %v758, %v811
    %v830 = vadd.f32 %v759, %v811
    %v831 = vadd.f32 %v760, %v811
    %v832 = vadd.f32 %v761, %v811
    %v833 = vadd.f32 %v762, %v811
    %v834 = vadd.f32 %v763, %v811
    %v835 = vadd.f32 %v764, %v811
    %v836 = vadd.f32 %v765, %v811
    %v837 = vadd.f32 %v766, %v811
    %v838 = vadd.f32 %v767, %v811
    %v839 = vadd.f32 %v768, %v811
    %v840 = vadd.f32 %v769, %v811
    %v841 = vadd.f32 %v770, %v811
    %v842 = vadd.f32 %v771, %v811
    %v843 = vadd.f32 %v772, %v811
    %v844 = vadd.f32 %v773, %v811
    %v845 = vadd.f32 %v774, %v811
    %v846 = vadd.f32 %v775, %v811
    %v847 = vadd.f32 %v776, %v811
    %v848 = vadd.f32 %v777, %v811
    %v849 = vadd.f32 %v778, %v811
    %v850 = vadd.f32 %v779, %v811
    %v851 = vadd.f32 %v780, %v811
    %v852 = vadd.f32 %v781, %v811
    %v853 = vadd.f32 %v782, %v811
    %v854 = vadd.f32 %v783, %v811
    %v855 = vadd.f32 %v784, %v811
    %v856 = vadd.f32 %v785, %v811
    %v857 = vadd.f32 %v786, %v811
    %v858 = vadd.f32 %v787, %v811
    %v859 = vadd.f32 %v788, %v811
    %v860 = vadd.f32 %v789, %v811
    %v861 = vadd.f32 %v790, %v811
    %v862 = vadd.f32 %v791, %v811
    %v863 = vadd.f32 %v792, %v811
    %v864 = vadd.f32 %v793, %v811
    %v865 = vadd.f32 %v794, %v811
    %v866 = vadd.f32 %v795, %v811
    %v867 = vadd.f32 %v796, %v811
    %v868 = vadd.f32 %v797, %v811
    %v869 = vadd.f32 %v798, %v811
    %v870 = vadd.f32 %v799, %v811
    %v871 = vadd.f32 %v800, %v811
    %v872 = vadd.f32 %v801, %v811
    %v873 = vadd.f32 %v802, %v811
    %v874 = vadd.f32 %v803, %v811
    %v875 = vadd.f32 %v804, %v811
    %v876 = vadd.f32 %v805, %v811
    %vm877 = vcmp.ge.f32.partialorder %v813, 0.0
    %vm878 = vcmp.ge.f32.partialorder %v814, 0.0
    %vm879 = vcmp.ge.f32.partialorder %v815, 0.0
    %vm880 = vcmp.ge.f32.partialorder %v816, 0.0
    %vm881 = vcmp.ge.f32.partialorder %v817, 0.0
    %vm882 = vcmp.ge.f32.partialorder %v818, 0.0
    %vm883 = vcmp.ge.f32.partialorder %v819, 0.0
    %vm884 = vcmp.ge.f32.partialorder %v820, 0.0
    %vm885 = vcmp.ge.f32.partialorder %v821, 0.0
    %vm886 = vcmp.ge.f32.partialorder %v822, 0.0
    %vm887 = vcmp.ge.f32.partialorder %v823, 0.0
    %vm888 = vcmp.ge.f32.partialorder %v824, 0.0
    %vm889 = vcmp.ge.f32.partialorder %v825, 0.0
    %vm890 = vcmp.ge.f32.partialorder %v826, 0.0
    %vm891 = vcmp.ge.f32.partialorder %v827, 0.0
    %vm892 = vcmp.ge.f32.partialorder %v828, 0.0
    %vm893 = vcmp.ge.f32.partialorder %v829, 0.0
    %vm894 = vcmp.ge.f32.partialorder %v830, 0.0
    %vm895 = vcmp.ge.f32.partialorder %v831, 0.0
    %vm896 = vcmp.ge.f32.partialorder %v832, 0.0
    %vm897 = vcmp.ge.f32.partialorder %v833, 0.0
    %vm898 = vcmp.ge.f32.partialorder %v834, 0.0
    %vm899 = vcmp.ge.f32.partialorder %v835, 0.0
    %vm900 = vcmp.ge.f32.partialorder %v836, 0.0
    %vm901 = vcmp.ge.f32.partialorder %v837, 0.0
    %vm902 = vcmp.ge.f32.partialorder %v838, 0.0
    %vm903 = vcmp.ge.f32.partialorder %v839, 0.0
    %vm904 = vcmp.ge.f32.partialorder %v840, 0.0
    %vm905 = vcmp.ge.f32.partialorder %v841, 0.0
    %vm906 = vcmp.ge.f32.partialorder %v842, 0.0
    %vm907 = vcmp.ge.f32.partialorder %v843, 0.0
    %vm908 = vcmp.ge.f32.partialorder %v844, 0.0
    %vm909 = vcmp.ge.f32.partialorder %v845, 0.0
    %vm910 = vcmp.ge.f32.partialorder %v846, 0.0
    %vm911 = vcmp.ge.f32.partialorder %v847, 0.0
    %vm912 = vcmp.ge.f32.partialorder %v848, 0.0
    %vm913 = vcmp.ge.f32.partialorder %v849, 0.0
    %vm914 = vcmp.ge.f32.partialorder %v850, 0.0
    %vm915 = vcmp.ge.f32.partialorder %v851, 0.0
    %vm916 = vcmp.ge.f32.partialorder %v852, 0.0
    %vm917 = vcmp.ge.f32.partialorder %v853, 0.0
    %vm918 = vcmp.ge.f32.partialorder %v854, 0.0
    %vm919 = vcmp.ge.f32.partialorder %v855, 0.0
    %vm920 = vcmp.ge.f32.partialorder %v856, 0.0
    %vm921 = vcmp.ge.f32.partialorder %v857, 0.0
    %vm922 = vcmp.ge.f32.partialorder %v858, 0.0
    %vm923 = vcmp.ge.f32.partialorder %v859, 0.0
    %vm924 = vcmp.ge.f32.partialorder %v860, 0.0
    %vm925 = vcmp.ge.f32.partialorder %v861, 0.0
    %vm926 = vcmp.ge.f32.partialorder %v862, 0.0
    %vm927 = vcmp.ge.f32.partialorder %v863, 0.0
    %vm928 = vcmp.ge.f32.partialorder %v864, 0.0
    %vm929 = vcmp.ge.f32.partialorder %v865, 0.0
    %vm930 = vcmp.ge.f32.partialorder %v866, 0.0
    %vm931 = vcmp.ge.f32.partialorder %v867, 0.0
    %vm932 = vcmp.ge.f32.partialorder %v868, 0.0
    %vm933 = vcmp.ge.f32.partialorder %v869, 0.0
    %vm934 = vcmp.ge.f32.partialorder %v870, 0.0
    %vm935 = vcmp.ge.f32.partialorder %v871, 0.0
    %vm936 = vcmp.ge.f32.partialorder %v872, 0.0
    %vm937 = vcmp.ge.f32.partialorder %v873, 0.0
    %vm938 = vcmp.ge.f32.partialorder %v874, 0.0
    %vm939 = vcmp.ge.f32.partialorder %v875, 0.0
    %vm940 = vcmp.ge.f32.partialorder %v876, 0.0
    %v941 = vmul.f32 %v813, 0.2
    %v942 = vmul.f32 %v814, 0.2
    %v943 = vmul.f32 %v815, 0.2
    %v944 = vmul.f32 %v816, 0.2
    %v945 = vmul.f32 %v817, 0.2
    %v946 = vmul.f32 %v818, 0.2
    %v947 = vmul.f32 %v819, 0.2
    %v948 = vmul.f32 %v820, 0.2
    %v949 = vmul.f32 %v821, 0.2
    %v950 = vmul.f32 %v822, 0.2
    %v951 = vmul.f32 %v823, 0.2
    %v952 = vmul.f32 %v824, 0.2
    %v953 = vmul.f32 %v825, 0.2
    %v954 = vmul.f32 %v826, 0.2
    %v955 = vmul.f32 %v827, 0.2
    %v956 = vmul.f32 %v828, 0.2
    %v957 = vmul.f32 %v829, 0.2
    %v958 = vmul.f32 %v830, 0.2
    %v959 = vmul.f32 %v831, 0.2
    %v960 = vmul.f32 %v832, 0.2
    %v961 = vmul.f32 %v833, 0.2
    %v962 = vmul.f32 %v834, 0.2
    %v963 = vmul.f32 %v835, 0.2
    %v964 = vmul.f32 %v836, 0.2
    %v965 = vmul.f32 %v837, 0.2
    %v966 = vmul.f32 %v838, 0.2
    %v967 = vmul.f32 %v839, 0.2
    %v968 = vmul.f32 %v840, 0.2
    %v969 = vmul.f32 %v841, 0.2
    %v970 = vmul.f32 %v842, 0.2
    %v971 = vmul.f32 %v843, 0.2
    %v972 = vmul.f32 %v844, 0.2
    %v973 = vmul.f32 %v845, 0.2
    %v974 = vmul.f32 %v846, 0.2
    %v975 = vmul.f32 %v847, 0.2
    %v976 = vmul.f32 %v848, 0.2
    %v977 = vmul.f32 %v849, 0.2
    %v978 = vmul.f32 %v850, 0.2
    %v979 = vmul.f32 %v851, 0.2
    %v980 = vmul.f32 %v852, 0.2
    %v981 = vmul.f32 %v853, 0.2
    %v982 = vmul.f32 %v854, 0.2
    %v983 = vmul.f32 %v855, 0.2
    %v984 = vmul.f32 %v856, 0.2
    %v985 = vmul.f32 %v857, 0.2
    %v986 = vmul.f32 %v858, 0.2
    %v987 = vmul.f32 %v859, 0.2
    %v988 = vmul.f32 %v860, 0.2
    %v989 = vmul.f32 %v861, 0.2
    %v990 = vmul.f32 %v862, 0.2
    %v991 = vmul.f32 %v863, 0.2
    %v992 = vmul.f32 %v864, 0.2
    %v993 = vmul.f32 %v865, 0.2
    %v994 = vmul.f32 %v866, 0.2
    %v995 = vmul.f32 %v867, 0.2
    %v996 = vmul.f32 %v868, 0.2
    %v997 = vmul.f32 %v869, 0.2
    %v998 = vmul.f32 %v870, 0.2
    %v999 = vmul.f32 %v871, 0.2
    %v1000 = vmul.f32 %v872, 0.2
    %v1001 = vmul.f32 %v873, 0.2
    %v1002 = vmul.f32 %v874, 0.2
    %v1003 = vmul.f32 %v875, 0.2
    %v1004 = vmul.f32 %v876, 0.2
    %v1005 = vsel %vm877, %v813, %v941
    %v1006 = vsel %vm878, %v814, %v942
    %v1007 = vsel %vm879, %v815, %v943
    %v1008 = vsel %vm880, %v816, %v944
    %v1009 = vsel %vm881, %v817, %v945
    %v1010 = vsel %vm882, %v818, %v946
    %v1011 = vsel %vm883, %v819, %v947
    %v1012 = vsel %vm884, %v820, %v948
    %v1013 = vsel %vm885, %v821, %v949
    %v1014 = vsel %vm886, %v822, %v950
    %v1015 = vsel %vm887, %v823, %v951
    %v1016 = vsel %vm888, %v824, %v952
    %v1017 = vsel %vm889, %v825, %v953
    %v1018 = vsel %vm890, %v826, %v954
    %v1019 = vsel %vm891, %v827, %v955
    %v1020 = vsel %vm892, %v828, %v956
    %v1021 = vsel %vm893, %v829, %v957
    %v1022 = vsel %vm894, %v830, %v958
    %v1023 = vsel %vm895, %v831, %v959
    %v1024 = vsel %vm896, %v832, %v960
    %v1025 = vsel %vm897, %v833, %v961
    %v1026 = vsel %vm898, %v834, %v962
    %v1027 = vsel %vm899, %v835, %v963
    %v1028 = vsel %vm900, %v836, %v964
    %v1029 = vsel %vm901, %v837, %v965
    %v1030 = vsel %vm902, %v838, %v966
    %v1031 = vsel %vm903, %v839, %v967
    %v1032 = vsel %vm904, %v840, %v968
    %v1033 = vsel %vm905, %v841, %v969
    %v1034 = vsel %vm906, %v842, %v970
    %v1035 = vsel %vm907, %v843, %v971
    %v1036 = vsel %vm908, %v844, %v972
    %v1037 = vsel %vm909, %v845, %v973
    %v1038 = vsel %vm910, %v846, %v974
    %v1039 = vsel %vm911, %v847, %v975
    %v1040 = vsel %vm912, %v848, %v976
    %v1041 = vsel %vm913, %v849, %v977
    %v1042 = vsel %vm914, %v850, %v978
    %v1043 = vsel %vm915, %v851, %v979
    %v1044 = vsel %vm916, %v852, %v980
    %v1045 = vsel %vm917, %v853, %v981
    %v1046 = vsel %vm918, %v854, %v982
    %v1047 = vsel %vm919, %v855, %v983
    %v1048 = vsel %vm920, %v856, %v984
    %v1049 = vsel %vm921, %v857, %v985
    %v1050 = vsel %vm922, %v858, %v986
    %v1051 = vsel %vm923, %v859, %v987
    %v1052 = vsel %vm924, %v860, %v988
    %v1053 = vsel %vm925, %v861, %v989
    %v1054 = vsel %vm926, %v862, %v990
    %v1055 = vsel %vm927, %v863, %v991
    %v1056 = vsel %vm928, %v864, %v992
    %v1057 = vsel %vm929, %v865, %v993
    %v1058 = vsel %vm930, %v866, %v994
    %v1059 = vsel %vm931, %v867, %v995
    %v1060 = vsel %vm932, %v868, %v996
    %v1061 = vsel %vm933, %v869, %v997
    %v1062 = vsel %vm934, %v870, %v998
    %v1063 = vsel %vm935, %v871, %v999
    %v1064 = vsel %vm936, %v872, %v1000
    %v1065 = vsel %vm937, %v873, %v1001
    %v1066 = vsel %vm938, %v874, %v1002
    %v1067 = vsel %vm939, %v875, %v1003
    %v1068 = vsel %vm940, %v876, %v1004
    %1069 = vst [vmem:[%s3] sm:$0xff] %v1005
    %1070 = vst [vmem:[%s3 + $0x8] sm:$0xff] %v1006
    %1071 = vst [vmem:[%s3 + $0x10] sm:$0xff] %v1007
    %1072 = vst [vmem:[%s3 + $0x18] sm:$0xff] %v1008
    %1073 = vst [vmem:[%s3 + $0x20] sm:$0xff] %v1009
    %1074 = vst [vmem:[%s3 + $0x28] sm:$0xff] %v1010
    %1075 = vst [vmem:[%s3 + $0x30] sm:$0xff] %v1011
    %1076 = vst [vmem:[%s3 + $0x38] sm:$0xff] %v1012
    %1077 = vst [vmem:[%s3 + $0x40] sm:$0xff] %v1013
    %1078 = vst [vmem:[%s3 + $0x48] sm:$0xff] %v1014
    %1079 = vst [vmem:[%s3 + $0x50] sm:$0xff] %v1015
    %1080 = vst [vmem:[%s3 + $0x58] sm:$0xff] %v1016
    %1081 = vst [vmem:[%s3 + $0x60] sm:$0xff] %v1017
    %1082 = vst [vmem:[%s3 + $0x68] sm:$0xff] %v1018
    %1083 = vst [vmem:[%s3 + $0x70] sm:$0xff] %v1019
    %1084 = vst [vmem:[%s3 + $0x78] sm:$0xff] %v1020
    %1085 = vst [vmem:[%s3 + $0x80] sm:$0xff] %v1021
    %1086 = vst [vmem:[%s3 + $0x88] sm:$0xff] %v1022
    %1087 = vst [vmem:[%s3 + $0x90] sm:$0xff] %v1023
    %1088 = vst [vmem:[%s3 + $0x98] sm:$0xff] %v1024
    %1089 = vst [vmem:[%s3 + $0xa0] sm:$0xff] %v1025
    %1090 = vst [vmem:[%s3 + $0xa8] sm:$0xff] %v1026
    %1091 = vst [vmem:[%s3 + $0xb0] sm:$0xff] %v1027
    %1092 = vst [vmem:[%s3 + $0xb8] sm:$0xff] %v1028
    %1093 = vst [vmem:[%s3 + $0xc0] sm:$0xff] %v1029
    %1094 = vst [vmem:[%s3 + $0xc8] sm:$0xff] %v1030
    %1095 = vst [vmem:[%s3 + $0xd0] sm:$0xff] %v1031
    %1096 = vst [vmem:[%s3 + $0xd8] sm:$0xff] %v1032
    %1097 = vst [vmem:[%s3 + $0xe0] sm:$0xff] %v1033
    %1098 = vst [vmem:[%s3 + $0xe8] sm:$0xff] %v1034
    %1099 = vst [vmem:[%s3 + $0xf0] sm:$0xff] %v1035
    %1100 = vst [vmem:[%s3 + $0xf8] sm:$0xff] %v1036
    %1101 = vst [vmem:[%s3 + $0x100] sm:$0xff] %v1037
    %1102 = vst [vmem:[%s3 + $0x108] sm:$0xff] %v1038
    %1103 = vst [vmem:[%s3 + $0x110] sm:$0xff] %v1039
    %1104 = vst [vmem:[%s3 + $0x118] sm:$0xff] %v1040
    %1105 = vst [vmem:[%s3 + $0x120] sm:$0xff] %v1041
    %1106 = vst [vmem:[%s3 + $0x128] sm:$0xff] %v1042
    %1107 = vst [vmem:[%s3 + $0x130] sm:$0xff] %v1043
    %1108 = vst [vmem:[%s3 + $0x138] sm:$0xff] %v1044
    %1109 = vst [vmem:[%s3 + $0x140] sm:$0xff] %v1045
    %1110 = vst [vmem:[%s3 + $0x148] sm:$0xff] %v1046
    %1111 = vst [vmem:[%s3 + $0x150] sm:$0xff] %v1047
    %1112 = vst [vmem:[%s3 + $0x158] sm:$0xff] %v1048
    %1113 = vst [vmem:[%s3 + $0x160] sm:$0xff] %v1049
    %1114 = vst [vmem:[%s3 + $0x168] sm:$0xff] %v1050
    %1115 = vst [vmem:[%s3 + $0x170] sm:$0xff] %v1051
    %1116 = vst [vmem:[%s3 + $0x178] sm:$0xff] %v1052
    %1117 = vst [vmem:[%s3 + $0x180] sm:$0xff] %v1053
    %1118 = vst [vmem:[%s3 + $0x188] sm:$0xff] %v1054
    %1119 = vst [vmem:[%s3 + $0x190] sm:$0xff] %v1055
    %1120 = vst [vmem:[%s3 + $0x198] sm:$0xff] %v1056
    %1121 = vst [vmem:[%s3 + $0x1a0] sm:$0xff] %v1057
    %1122 = vst [vmem:[%s3 + $0x1a8] sm:$0xff] %v1058
    %1123 = vst [vmem:[%s3 + $0x1b0] sm:$0xff] %v1059
    %1124 = vst [vmem:[%s3 + $0x1b8] sm:$0xff] %v1060
    %1125 = vst [vmem:[%s3 + $0x1c0] sm:$0xff] %v1061
    %1126 = vst [vmem:[%s3 + $0x1c8] sm:$0xff] %v1062
    %1127 = vst [vmem:[%s3 + $0x1d0] sm:$0xff] %v1063
    %1128 = vst [vmem:[%s3 + $0x1d8] sm:$0xff] %v1064
    %1129 = vst [vmem:[%s3 + $0x1e0] sm:$0xff] %v1065
    %1130 = vst [vmem:[%s3 + $0x1e8] sm:$0xff] %v1066
    %1131 = vst [vmem:[%s3 + $0x1f0] sm:$0xff] %v1067
    %1132 = vst [vmem:[%s3 + $0x1f8] sm:$0xff] %v1068
  $region21: #{_lambda_.8} parent=0 // pred_fallthru
    _
  // Predicated region
  $region22: #{_lambda_.8} parent=0 // pred_check
    _
  $region23: #{_lambda_.8} parent=0 // pred_check_branch
    %1134 = sbr.rel (0) target = $region25
  $region24: #{_lambda_.8} parent=0 // pred_region
    _
  $region25: #{_lambda_.8} parent=0 // pred_fallthru
    _
  // Predicated region
  $region26: #{_lambda_.8} parent=0 // pred_check
    _
  $region27: #{_lambda_.8} parent=0 // pred_check_branch
    %1136 = sbr.rel (0) target = $region29
  $region28: #{_lambda_.8} parent=0 // pred_region
    _
  $region29: #{_lambda_.8} parent=0 // pred_fallthru
    _

// kernel: _lambda_.9
$region0: #{_lambda_.9}
  #allocation0 [shape = 'u32[]', space=smem, size = 0x4, offset = 0x4, fixed_abs, tag = 'smem constant byte address 0x4 - core index']
  #allocation1 [shape = 'u32[144,128]{1,0:T(1,128)}', space=vmem, size = 0x12000, scoped, tag = 'internal scratch']
  #allocation2 [shape = 'f32[128,128]{1,0:T(8,128)}', space=vmem, size = 0x10000, scoped, tag = 'scratch operand']
  %s0 = inlined_call_operand.vmem [shape: f32[128,128], index: 0, kind: input, shape index: {}]
  %s1 = inlined_call_operand.vmem [shape: f32[128,128], index: 1, kind: input, shape index: {}]
  %s2 = inlined_call_operand.vmem [shape: f32[128,128], index: 2, kind: output, shape index: {0}]
  %s3 = inlined_call_operand.vmem [shape: f32[1,2,128], index: 3, kind: output, shape index: {1}]
  %4 = xla_tuple %s2, %s3
  %s5 = sld [smem:[#allocation0]]
  $region34: #{_lambda_.9} parent=0
    _
  %s7 = ssub.s32 1, %s5
  %s8 = scalar_select 0, %s7, %s5
  // Predicated region
  $region2: #{_lambda_.9} parent=0 // pred_check
    _
  $region3: #{_lambda_.9} parent=0 // pred_check_branch
    %10 = sbr.rel (0) target = $region5
  $region4: #{_lambda_.9} parent=0 // pred_region
    _
  $region5: #{_lambda_.9} parent=0 // pred_fallthru
    _
  // Predicated region
  $region6: #{_lambda_.9} parent=0 // pred_check
    _
  $region7: #{_lambda_.9} parent=0 // pred_check_branch
    %12 = sbr.rel (0) target = $region9
  $region8: #{_lambda_.9} parent=0 // pred_region
    _
  $region9: #{_lambda_.9} parent=0 // pred_fallthru
    _
  %p13 = scmp.eq.s32.totalorder 0, 0
  // Predicated region
  $region10: #{_lambda_.9} parent=0 // pred_check
    %p14 = pneg %p13
  $region11: #{_lambda_.9} parent=0 // pred_check_branch
    %16 = sbr.rel (%p14) target = $region13
  $region12: #{_lambda_.9} parent=0 // pred_region
    %17 = vst [vmem:[#allocation2] sm:$0xff] 0.0
    %18 = vst [vmem:[#allocation2 + $0x8] sm:$0xff] 0.0
    %19 = vst [vmem:[#allocation2 + $0x10] sm:$0xff] 0.0
    %20 = vst [vmem:[#allocation2 + $0x18] sm:$0xff] 0.0
    %21 = vst [vmem:[#allocation2 + $0x20] sm:$0xff] 0.0
    %22 = vst [vmem:[#allocation2 + $0x28] sm:$0xff] 0.0
    %23 = vst [vmem:[#allocation2 + $0x30] sm:$0xff] 0.0
    %24 = vst [vmem:[#allocation2 + $0x38] sm:$0xff] 0.0
    %25 = vst [vmem:[#allocation2 + $0x40] sm:$0xff] 0.0
    %26 = vst [vmem:[#allocation2 + $0x48] sm:$0xff] 0.0
    %27 = vst [vmem:[#allocation2 + $0x50] sm:$0xff] 0.0
    %28 = vst [vmem:[#allocation2 + $0x58] sm:$0xff] 0.0
    %29 = vst [vmem:[#allocation2 + $0x60] sm:$0xff] 0.0
    %30 = vst [vmem:[#allocation2 + $0x68] sm:$0xff] 0.0
    %31 = vst [vmem:[#allocation2 + $0x70] sm:$0xff] 0.0
    %32 = vst [vmem:[#allocation2 + $0x78] sm:$0xff] 0.0
  $region13: #{_lambda_.9} parent=0 // pred_fallthru
    _
  %v33 = vld [vmem:[#allocation2] sm:$0xff]
  %v34 = vld [vmem:[#allocation2 + $0x8] sm:$0xff]
  %v35 = vld [vmem:[#allocation2 + $0x10] sm:$0xff]
  %v36 = vld [vmem:[#allocation2 + $0x18] sm:$0xff]
  %v37 = vld [vmem:[#allocation2 + $0x20] sm:$0xff]
  %v38 = vld [vmem:[#allocation2 + $0x28] sm:$0xff]
  %v39 = vld [vmem:[#allocation2 + $0x30] sm:$0xff]
  %v40 = vld [vmem:[#allocation2 + $0x38] sm:$0xff]
  %v41 = vld [vmem:[#allocation2 + $0x40] sm:$0xff]
  %v42 = vld [vmem:[#allocation2 + $0x48] sm:$0xff]
  %v43 = vld [vmem:[#allocation2 + $0x50] sm:$0xff]
  %v44 = vld [vmem:[#allocation2 + $0x58] sm:$0xff]
  %v45 = vld [vmem:[#allocation2 + $0x60] sm:$0xff]
  %v46 = vld [vmem:[#allocation2 + $0x68] sm:$0xff]
  %v47 = vld [vmem:[#allocation2 + $0x70] sm:$0xff]
  %v48 = vld [vmem:[#allocation2 + $0x78] sm:$0xff]
  %v49 = vld [vmem:[%s0] sm:$0xff]
  %v50 = vld [vmem:[%s0 + $0x8] sm:$0xff]
  %v51 = vld [vmem:[%s0 + $0x10] sm:$0xff]
  %v52 = vld [vmem:[%s0 + $0x18] sm:$0xff]
  %v53 = vld [vmem:[%s0 + $0x20] sm:$0xff]
  %v54 = vld [vmem:[%s0 + $0x28] sm:$0xff]
  %v55 = vld [vmem:[%s0 + $0x30] sm:$0xff]
  %v56 = vld [vmem:[%s0 + $0x38] sm:$0xff]
  %v57 = vld [vmem:[%s0 + $0x40] sm:$0xff]
  %v58 = vld [vmem:[%s0 + $0x48] sm:$0xff]
  %v59 = vld [vmem:[%s0 + $0x50] sm:$0xff]
  %v60 = vld [vmem:[%s0 + $0x58] sm:$0xff]
  %v61 = vld [vmem:[%s0 + $0x60] sm:$0xff]
  %v62 = vld [vmem:[%s0 + $0x68] sm:$0xff]
  %v63 = vld [vmem:[%s0 + $0x70] sm:$0xff]
  %v64 = vld [vmem:[%s0 + $0x78] sm:$0xff]
  %v65 = vld [vmem:[%s1] sm:$0xff]
  %v66 = vld [vmem:[%s1 + $0x8] sm:$0xff]
  %v67 = vld [vmem:[%s1 + $0x10] sm:$0xff]
  %v68 = vld [vmem:[%s1 + $0x18] sm:$0xff]
  %v69 = vld [vmem:[%s1 + $0x20] sm:$0xff]
  %v70 = vld [vmem:[%s1 + $0x28] sm:$0xff]
  %v71 = vld [vmem:[%s1 + $0x30] sm:$0xff]
  %v72 = vld [vmem:[%s1 + $0x38] sm:$0xff]
  %v73 = vld [vmem:[%s1 + $0x40] sm:$0xff]
  %v74 = vld [vmem:[%s1 + $0x48] sm:$0xff]
  %v75 = vld [vmem:[%s1 + $0x50] sm:$0xff]
  %v76 = vld [vmem:[%s1 + $0x58] sm:$0xff]
  %v77 = vld [vmem:[%s1 + $0x60] sm:$0xff]
  %v78 = vld [vmem:[%s1 + $0x68] sm:$0xff]
  %v79 = vld [vmem:[%s1 + $0x70] sm:$0xff]
  %v80 = vld [vmem:[%s1 + $0x78] sm:$0xff]
  %81 = vmatprep.subr.mxu0 0.0
  %82 = vmatpush1.msra.mxu0 %v65
  %83 = vmatprep.subr.mxu0 0.0
  %84 = vmatpush1.msra.mxu0 %v66
  %85 = vmatprep.subr.mxu0 0.0
  %86 = vmatpush1.msra.mxu0 %v67
  %87 = vmatprep.subr.mxu0 0.0
  %88 = vmatpush1.msra.mxu0 %v68
  %89 = vmatprep.subr.mxu0 0.0
  %90 = vmatpush1.msra.mxu0 %v69
  %91 = vmatprep.subr.mxu0 0.0
  %92 = vmatpush1.msra.mxu0 %v70
  %93 = vmatprep.subr.mxu0 0.0
  %94 = vmatpush1.msra.mxu0 %v71
  %95 = vmatprep.subr.mxu0 0.0
  %96 = vmatpush1.msra.mxu0 %v72
  %97 = vmatprep.subr.mxu0 0.0
  %98 = vmatpush1.msra.mxu0 %v73
  %99 = vmatprep.subr.mxu0 0.0
  %100 = vmatpush1.msra.mxu0 %v74
  %101 = vmatprep.subr.mxu0 0.0
  %102 = vmatpush1.msra.mxu0 %v75
  %103 = vmatprep.subr.mxu0 0.0
  %104 = vmatpush1.msra.mxu0 %v76
  %105 = vmatprep.subr.mxu0 0.0
  %106 = vmatpush1.msra.mxu0 %v77
  %107 = vmatprep.subr.mxu0 0.0
  %108 = vmatpush1.msra.mxu0 %v78
  %109 = vmatprep.subr.mxu0 0.0
  %110 = vmatpush1.msra.mxu0 %v79
  %111 = vmatprep.subr.mxu0 0.0
  %112 = vmatpush1.msra.mxu0 %v80
  %113 = vmatprep.subr.mxu0 0.0
  %114 = vmatpush1.msra.mxu0 0.0
  %115 = vmatprep.subr.mxu0 0.0
  %116 = vmatpush1.msra.mxu0 0.0
  %117 = vmatprep.subr.mxu0 0.0
  %118 = vmatpush1.msra.mxu0 0.0
  %119 = vmatprep.subr.mxu0 0.0
  %120 = vmatpush1.msra.mxu0 0.0
  %121 = vmatprep.subr.mxu0 0.0
  %122 = vmatpush1.msra.mxu0 0.0
  %123 = vmatprep.subr.mxu0 0.0
  %124 = vmatpush1.msra.mxu0 0.0
  %125 = vmatprep.subr.mxu0 0.0
  %126 = vmatpush1.msra.mxu0 0.0
  %127 = vmatprep.subr.mxu0 0.0
  %128 = vmatpush1.msra.mxu0 0.0
  %129 = vmatprep.subr.mxu0 0.0
  %130 = vmatpush1.msra.mxu0 0.0
  %131 = vmatprep.subr.mxu0 0.0
  %132 = vmatpush1.msra.mxu0 0.0
  %133 = vmatprep.subr.mxu0 0.0
  %134 = vmatpush1.msra.mxu0 0.0
  %135 = vmatprep.subr.mxu0 0.0
  %136 = vmatpush1.msra.mxu0 0.0
  %137 = vmatprep.subr.mxu0 0.0
  %138 = vmatpush1.msra.mxu0 0.0
  %139 = vmatprep.subr.mxu0 0.0
  %140 = vmatpush1.msra.mxu0 0.0
  %141 = vmatprep.subr.mxu0 0.0
  %142 = vmatpush1.msra.mxu0 0.0
  %143 = vmatprep.subr.mxu0 0.0
  %144 = vmatpush1.msra.mxu0 0.0
  %145 = vmatprep.mubr.f32.mxu0 0.0
  %146 = vmatmul.mubr.f32.gmra.mrb[0].mxu0 %v49
  %v147 = vpop.f32.mrb[0].mxu0
  %v148 = vadd.f32 0.0, %v147
  %v149 = vpop.f32.mrb[0].mxu0
  %150 = vmatprep.mubr.f32.mxu0 0.0
  %151 = vmatmul.mubr.f32.gmra.mrb[0].mxu0 %v50
  %v152 = vpop.f32.mrb[0].mxu0
  %v153 = vadd.f32 0.0, %v152
  %v154 = vpop.f32.mrb[0].mxu0
  %155 = vmatprep.mubr.f32.mxu0 0.0
  %156 = vmatmul.mubr.f32.gmra.mrb[0].mxu0 %v51
  %v157 = vpop.f32.mrb[0].mxu0
  %v158 = vadd.f32 0.0, %v157
  %v159 = vpop.f32.mrb[0].mxu0
  %160 = vmatprep.mubr.f32.mxu0 0.0
  %161 = vmatmul.mubr.f32.gmra.mrb[0].mxu0 %v52
  %v162 = vpop.f32.mrb[0].mxu0
  %v163 = vadd.f32 0.0, %v162
  %v164 = vpop.f32.mrb[0].mxu0
  %165 = vmatprep.mubr.f32.mxu0 0.0
  %166 = vmatmul.mubr.f32.gmra.mrb[0].mxu0 %v53
  %v167 = vpop.f32.mrb[0].mxu0
  %v168 = vadd.f32 0.0, %v167
  %v169 = vpop.f32.mrb[0].mxu0
  %170 = vmatprep.mubr.f32.mxu0 0.0
  %171 = vmatmul.mubr.f32.gmra.mrb[0].mxu0 %v54
  %v172 = vpop.f32.mrb[0].mxu0
  %v173 = vadd.f32 0.0, %v172
  %v174 = vpop.f32.mrb[0].mxu0
  %175 = vmatprep.mubr.f32.mxu0 0.0
  %176 = vmatmul.mubr.f32.gmra.mrb[0].mxu0 %v55
  %v177 = vpop.f32.mrb[0].mxu0
  %v178 = vadd.f32 0.0, %v177
  %v179 = vpop.f32.mrb[0].mxu0
  %180 = vmatprep.mubr.f32.mxu0 0.0
  %181 = vmatmul.mubr.f32.gmra.mrb[0].mxu0 %v56
  %v182 = vpop.f32.mrb[0].mxu0
  %v183 = vadd.f32 0.0, %v182
  %v184 = vpop.f32.mrb[0].mxu0
  %185 = vmatprep.mubr.f32.mxu0 0.0
  %186 = vmatmul.mubr.f32.gmra.mrb[0].mxu0 %v57
  %v187 = vpop.f32.mrb[0].mxu0
  %v188 = vadd.f32 0.0, %v187
  %v189 = vpop.f32.mrb[0].mxu0
  %190 = vmatprep.mubr.f32.mxu0 0.0
  %191 = vmatmul.mubr.f32.gmra.mrb[0].mxu0 %v58
  %v192 = vpop.f32.mrb[0].mxu0
  %v193 = vadd.f32 0.0, %v192
  %v194 = vpop.f32.mrb[0].mxu0
  %195 = vmatprep.mubr.f32.mxu0 0.0
  %196 = vmatmul.mubr.f32.gmra.mrb[0].mxu0 %v59
  %v197 = vpop.f32.mrb[0].mxu0
  %v198 = vadd.f32 0.0, %v197
  %v199 = vpop.f32.mrb[0].mxu0
  %200 = vmatprep.mubr.f32.mxu0 0.0
  %201 = vmatmul.mubr.f32.gmra.mrb[0].mxu0 %v60
  %v202 = vpop.f32.mrb[0].mxu0
  %v203 = vadd.f32 0.0, %v202
  %v204 = vpop.f32.mrb[0].mxu0
  %205 = vmatprep.mubr.f32.mxu0 0.0
  %206 = vmatmul.mubr.f32.gmra.mrb[0].mxu0 %v61
  %v207 = vpop.f32.mrb[0].mxu0
  %v208 = vadd.f32 0.0, %v207
  %v209 = vpop.f32.mrb[0].mxu0
  %210 = vmatprep.mubr.f32.mxu0 0.0
  %211 = vmatmul.mubr.f32.gmra.mrb[0].mxu0 %v62
  %v212 = vpop.f32.mrb[0].mxu0
  %v213 = vadd.f32 0.0, %v212
  %v214 = vpop.f32.mrb[0].mxu0
  %215 = vmatprep.mubr.f32.mxu0 0.0
  %216 = vmatmul.mubr.f32.gmra.mrb[0].mxu0 %v63
  %v217 = vpop.f32.mrb[0].mxu0
  %v218 = vadd.f32 0.0, %v217
  %v219 = vpop.f32.mrb[0].mxu0
  %220 = vmatprep.mubr.f32.mxu0 0.0
  %221 = vmatmul.mubr.f32.gmra.mrb[0].mxu0 %v64
  %v222 = vpop.f32.mrb[0].mxu0
  %v223 = vadd.f32 0.0, %v222
  %v224 = vpop.f32.mrb[0].mxu0
  %225 = vdwg.mxu0
  %v226 = vadd.f32 %v33, %v148
  %v227 = vadd.f32 %v34, %v153
  %v228 = vadd.f32 %v35, %v158
  %v229 = vadd.f32 %v36, %v163
  %v230 = vadd.f32 %v37, %v168
  %v231 = vadd.f32 %v38, %v173
  %v232 = vadd.f32 %v39, %v178
  %v233 = vadd.f32 %v40, %v183
  %v234 = vadd.f32 %v41, %v188
  %v235 = vadd.f32 %v42, %v193
  %v236 = vadd.f32 %v43, %v198
  %v237 = vadd.f32 %v44, %v203
  %v238 = vadd.f32 %v45, %v208
  %v239 = vadd.f32 %v46, %v213
  %v240 = vadd.f32 %v47, %v218
  %v241 = vadd.f32 %v48, %v223
  %242 = vst [vmem:[#allocation2] sm:$0xff] %v226
  %243 = vst [vmem:[#allocation2 + $0x8] sm:$0xff] %v227
  %244 = vst [vmem:[#allocation2 + $0x10] sm:$0xff] %v228
  %245 = vst [vmem:[#allocation2 + $0x18] sm:$0xff] %v229
  %246 = vst [vmem:[#allocation2 + $0x20] sm:$0xff] %v230
  %247 = vst [vmem:[#allocation2 + $0x28] sm:$0xff] %v231
  %248 = vst [vmem:[#allocation2 + $0x30] sm:$0xff] %v232
  %249 = vst [vmem:[#allocation2 + $0x38] sm:$0xff] %v233
  %250 = vst [vmem:[#allocation2 + $0x40] sm:$0xff] %v234
  %251 = vst [vmem:[#allocation2 + $0x48] sm:$0xff] %v235
  %252 = vst [vmem:[#allocation2 + $0x50] sm:$0xff] %v236
  %253 = vst [vmem:[#allocation2 + $0x58] sm:$0xff] %v237
  %254 = vst [vmem:[#allocation2 + $0x60] sm:$0xff] %v238
  %255 = vst [vmem:[#allocation2 + $0x68] sm:$0xff] %v239
  %256 = vst [vmem:[#allocation2 + $0x70] sm:$0xff] %v240
  %257 = vst [vmem:[#allocation2 + $0x78] sm:$0xff] %v241
  // Predicated region
  $region14: #{_lambda_.9} parent=0 // pred_check
    %p258 = pneg %p13
  $region15: #{_lambda_.9} parent=0 // pred_check_branch
    %260 = sbr.rel (%p258) target = $region17
  $region16: #{_lambda_.9} parent=0 // pred_region
    %v261 = vld [vmem:[#allocation2] sm:$0xff]
    %v262 = vld [vmem:[#allocation2 + $0x8] sm:$0xff]
    %v263 = vld [vmem:[#allocation2 + $0x10] sm:$0xff]
    %v264 = vld [vmem:[#allocation2 + $0x18] sm:$0xff]
    %v265 = vld [vmem:[#allocation2 + $0x20] sm:$0xff]
    %v266 = vld [vmem:[#allocation2 + $0x28] sm:$0xff]
    %v267 = vld [vmem:[#allocation2 + $0x30] sm:$0xff]
    %v268 = vld [vmem:[#allocation2 + $0x38] sm:$0xff]
    %v269 = vld [vmem:[#allocation2 + $0x40] sm:$0xff]
    %v270 = vld [vmem:[#allocation2 + $0x48] sm:$0xff]
    %v271 = vld [vmem:[#allocation2 + $0x50] sm:$0xff]
    %v272 = vld [vmem:[#allocation2 + $0x58] sm:$0xff]
    %v273 = vld [vmem:[#allocation2 + $0x60] sm:$0xff]
    %v274 = vld [vmem:[#allocation2 + $0x68] sm:$0xff]
    %v275 = vld [vmem:[#allocation2 + $0x70] sm:$0xff]
    %v276 = vld [vmem:[#allocation2 + $0x78] sm:$0xff]
    %277 = vst [vmem:[%s2] sm:$0xff] %v261
    %278 = vst [vmem:[%s2 + $0x8] sm:$0xff] %v262
    %279 = vst [vmem:[%s2 + $0x10] sm:$0xff] %v263
    %280 = vst [vmem:[%s2 + $0x18] sm:$0xff] %v264
    %281 = vst [vmem:[%s2 + $0x20] sm:$0xff] %v265
    %282 = vst [vmem:[%s2 + $0x28] sm:$0xff] %v266
    %283 = vst [vmem:[%s2 + $0x30] sm:$0xff] %v267
    %284 = vst [vmem:[%s2 + $0x38] sm:$0xff] %v268
    %285 = vst [vmem:[%s2 + $0x40] sm:$0xff] %v269
    %286 = vst [vmem:[%s2 + $0x48] sm:$0xff] %v270
    %287 = vst [vmem:[%s2 + $0x50] sm:$0xff] %v271
    %288 = vst [vmem:[%s2 + $0x58] sm:$0xff] %v272
    %289 = vst [vmem:[%s2 + $0x60] sm:$0xff] %v273
    %290 = vst [vmem:[%s2 + $0x68] sm:$0xff] %v274
    %291 = vst [vmem:[%s2 + $0x70] sm:$0xff] %v275
    %292 = vst [vmem:[%s2 + $0x78] sm:$0xff] %v276
    %v293 = vadd.f32 %v261, %v262
    %v294 = vadd.f32 %v293, %v263
    %v295 = vadd.f32 %v294, %v264
    %v296 = vadd.f32 %v295, %v265
    %v297 = vadd.f32 %v296, %v266
    %v298 = vadd.f32 %v297, %v267
    %v299 = vadd.f32 %v298, %v268
    %v300 = vadd.f32 %v299, %v269
    %v301 = vadd.f32 %v300, %v270
    %v302 = vadd.f32 %v301, %v271
    %v303 = vadd.f32 %v302, %v272
    %v304 = vadd.f32 %v303, %v273
    %v305 = vadd.f32 %v304, %v274
    %v306 = vadd.f32 %v305, %v275
    %v307 = vadd.f32 %v306, %v276
    %v308 = vrot.slane %v307, 4
    %v309 = vadd.f32 %v307, %v308
    %v310 = vrot.slane %v309, 2
    %v311 = vadd.f32 %v309, %v310
    %v312 = vrot.slane %v311, 1
    %v313 = vadd.f32 %v311, %v312
    %v314 = vmul.f32 %v261, %v261
    %v315 = vmul.f32 %v262, %v262
    %v316 = vmul.f32 %v263, %v263
    %v317 = vmul.f32 %v264, %v264
    %v318 = vmul.f32 %v265, %v265
    %v319 = vmul.f32 %v266, %v266
    %v320 = vmul.f32 %v267, %v267
    %v321 = vmul.f32 %v268, %v268
    %v322 = vmul.f32 %v269, %v269
    %v323 = vmul.f32 %v270, %v270
    %v324 = vmul.f32 %v271, %v271
    %v325 = vmul.f32 %v272, %v272
    %v326 = vmul.f32 %v273, %v273
    %v327 = vmul.f32 %v274, %v274
    %v328 = vmul.f32 %v275, %v275
    %v329 = vmul.f32 %v276, %v276
    %v330 = vadd.f32 %v314, %v315
    %v331 = vadd.f32 %v330, %v316
    %v332 = vadd.f32 %v331, %v317
    %v333 = vadd.f32 %v332, %v318
    %v334 = vadd.f32 %v333, %v319
    %v335 = vadd.f32 %v334, %v320
    %v336 = vadd.f32 %v335, %v321
    %v337 = vadd.f32 %v336, %v322
    %v338 = vadd.f32 %v337, %v323
    %v339 = vadd.f32 %v338, %v324
    %v340 = vadd.f32 %v339, %v325
    %v341 = vadd.f32 %v340, %v326
    %v342 = vadd.f32 %v341, %v327
    %v343 = vadd.f32 %v342, %v328
    %v344 = vadd.f32 %v343, %v329
    %v345 = vrot.slane %v344, 4
    %v346 = vadd.f32 %v344, %v345
    %v347 = vrot.slane %v346, 2
    %v348 = vadd.f32 %v346, %v347
    %v349 = vrot.slane %v348, 1
    %v350 = vadd.f32 %v348, %v349
    %vm351 = vcmask 1040384
    %v352 = vsel %vm351, %v313, %v350
    %353 = vst [vmem:[%s3] sm:$0x3] %v352
  $region17: #{_lambda_.9} parent=0 // pred_fallthru
    _
  // Predicated region
  $region18: #{_lambda_.9} parent=0 // pred_check
    _
  $region19: #{_lambda_.9} parent=0 // pred_check_branch
    %355 = sbr.rel (0) target = $region21
  $region20: #{_lambda_.9} parent=0 // pred_region
    _
  $region21: #{_lambda_.9} parent=0 // pred_fallthru
    _
  // Predicated region
  $region22: #{_lambda_.9} parent=0 // pred_check
    _
  $region23: #{_lambda_.9} parent=0 // pred_check_branch
    %357 = sbr.rel (0) target = $region25
  $region24: #{_lambda_.9} parent=0 // pred_region
    _
  $region25: #{_lambda_.9} parent=0 // pred_fallthru
    _
  // Predicated region
  $region26: #{_lambda_.9} parent=0 // pred_check
    _
  $region27: #{_lambda_.9} parent=0 // pred_check_branch
    %359 = sbr.rel (0) target = $region29
  $region28: #{_lambda_.9} parent=0 // pred_region
    _
  $region29: #{_lambda_.9} parent=0 // pred_fallthru
    _
  // Predicated region
  $region30: #{_lambda_.9} parent=0 // pred_check
    _
  $region31: #{_lambda_.9} parent=0 // pred_check_branch
    %361 = sbr.rel (0) target = $region33
  $region32: #{_lambda_.9} parent=0 // pred_region
    _
  $region33: #{_lambda_.9} parent=0 // pred_fallthru
    _

// kernel: _lambda_.10
$region0: #{_lambda_.10}
  #allocation0 [shape = 'u32[]', space=smem, size = 0x4, offset = 0x4, fixed_abs, tag = 'smem constant byte address 0x4 - core index']
  #allocation1 [shape = 'u32[144,128]{1,0:T(1,128)}', space=vmem, size = 0x12000, scoped, tag = 'internal scratch']
  %s0 = inlined_call_operand.vmem [shape: f32[128,128], index: 0, kind: input, shape index: {}]
  %s1 = inlined_call_operand.vmem [shape: f32[1,128], index: 1, kind: input, shape index: {}]
  %s2 = inlined_call_operand.vmem [shape: f32[1,128], index: 2, kind: input, shape index: {}]
  %s3 = inlined_call_operand.vmem [shape: f32[128,128], index: 3, kind: output, shape index: {}]
  %s4 = sld [smem:[#allocation0]]
  $region22: #{_lambda_.10} parent=0
    _
  %s6 = ssub.s32 1, %s4
  %s7 = scalar_select 0, %s6, %s4
  // Predicated region
  $region2: #{_lambda_.10} parent=0 // pred_check
    _
  $region3: #{_lambda_.10} parent=0 // pred_check_branch
    %9 = sbr.rel (0) target = $region5
  $region4: #{_lambda_.10} parent=0 // pred_region
    _
  $region5: #{_lambda_.10} parent=0 // pred_fallthru
    _
  // Predicated region
  $region6: #{_lambda_.10} parent=0 // pred_check
    _
  $region7: #{_lambda_.10} parent=0 // pred_check_branch
    %11 = sbr.rel (0) target = $region9
  $region8: #{_lambda_.10} parent=0 // pred_region
    _
  $region9: #{_lambda_.10} parent=0 // pred_fallthru
    _
  // Predicated region
  $region10: #{_lambda_.10} parent=0 // pred_check
    _
  $region11: #{_lambda_.10} parent=0 // pred_check_branch
    %13 = sbr.rel (0) target = $region13
  $region12: #{_lambda_.10} parent=0 // pred_region
    _
  $region13: #{_lambda_.10} parent=0 // pred_fallthru
    _
  %v14 = vld [vmem:[%s0] sm:$0xff]
  %v15 = vld [vmem:[%s0 + $0x8] sm:$0xff]
  %v16 = vld [vmem:[%s0 + $0x10] sm:$0xff]
  %v17 = vld [vmem:[%s0 + $0x18] sm:$0xff]
  %v18 = vld [vmem:[%s0 + $0x20] sm:$0xff]
  %v19 = vld [vmem:[%s0 + $0x28] sm:$0xff]
  %v20 = vld [vmem:[%s0 + $0x30] sm:$0xff]
  %v21 = vld [vmem:[%s0 + $0x38] sm:$0xff]
  %v22 = vld [vmem:[%s0 + $0x40] sm:$0xff]
  %v23 = vld [vmem:[%s0 + $0x48] sm:$0xff]
  %v24 = vld [vmem:[%s0 + $0x50] sm:$0xff]
  %v25 = vld [vmem:[%s0 + $0x58] sm:$0xff]
  %v26 = vld [vmem:[%s0 + $0x60] sm:$0xff]
  %v27 = vld [vmem:[%s0 + $0x68] sm:$0xff]
  %v28 = vld [vmem:[%s0 + $0x70] sm:$0xff]
  %v29 = vld [vmem:[%s0 + $0x78] sm:$0xff]
  %v30 = vld [vmem:[%s1] sm:$0x1]
  %v32 = vlaneseq
  %v33 = vshrl.u32 %v32, 7
  %v34 = vsub.s32 0, %v33
  %v35 = vrot.slane %v30, %v34
  %v37 = vmul.f32 %v14, %v35
  %v38 = vmul.f32 %v15, %v35
  %v39 = vmul.f32 %v16, %v35
  %v40 = vmul.f32 %v17, %v35
  %v41 = vmul.f32 %v18, %v35
  %v42 = vmul.f32 %v19, %v35
  %v43 = vmul.f32 %v20, %v35
  %v44 = vmul.f32 %v21, %v35
  %v45 = vmul.f32 %v22, %v35
  %v46 = vmul.f32 %v23, %v35
  %v47 = vmul.f32 %v24, %v35
  %v48 = vmul.f32 %v25, %v35
  %v49 = vmul.f32 %v26, %v35
  %v50 = vmul.f32 %v27, %v35
  %v51 = vmul.f32 %v28, %v35
  %v52 = vmul.f32 %v29, %v35
  %v53 = vld [vmem:[%s2] sm:$0x1]
  %v55 = vlaneseq
  %v56 = vshrl.u32 %v55, 7
  %v57 = vsub.s32 0, %v56
  %v58 = vrot.slane %v53, %v57
  %v60 = vadd.f32 %v37, %v58
  %v61 = vadd.f32 %v38, %v58
  %v62 = vadd.f32 %v39, %v58
  %v63 = vadd.f32 %v40, %v58
  %v64 = vadd.f32 %v41, %v58
  %v65 = vadd.f32 %v42, %v58
  %v66 = vadd.f32 %v43, %v58
  %v67 = vadd.f32 %v44, %v58
  %v68 = vadd.f32 %v45, %v58
  %v69 = vadd.f32 %v46, %v58
  %v70 = vadd.f32 %v47, %v58
  %v71 = vadd.f32 %v48, %v58
  %v72 = vadd.f32 %v49, %v58
  %v73 = vadd.f32 %v50, %v58
  %v74 = vadd.f32 %v51, %v58
  %v75 = vadd.f32 %v52, %v58
  %vm76 = vcmp.ge.f32.partialorder %v60, 0.0
  %vm77 = vcmp.ge.f32.partialorder %v61, 0.0
  %vm78 = vcmp.ge.f32.partialorder %v62, 0.0
  %vm79 = vcmp.ge.f32.partialorder %v63, 0.0
  %vm80 = vcmp.ge.f32.partialorder %v64, 0.0
  %vm81 = vcmp.ge.f32.partialorder %v65, 0.0
  %vm82 = vcmp.ge.f32.partialorder %v66, 0.0
  %vm83 = vcmp.ge.f32.partialorder %v67, 0.0
  %vm84 = vcmp.ge.f32.partialorder %v68, 0.0
  %vm85 = vcmp.ge.f32.partialorder %v69, 0.0
  %vm86 = vcmp.ge.f32.partialorder %v70, 0.0
  %vm87 = vcmp.ge.f32.partialorder %v71, 0.0
  %vm88 = vcmp.ge.f32.partialorder %v72, 0.0
  %vm89 = vcmp.ge.f32.partialorder %v73, 0.0
  %vm90 = vcmp.ge.f32.partialorder %v74, 0.0
  %vm91 = vcmp.ge.f32.partialorder %v75, 0.0
  %v92 = vmul.f32 %v60, 0.2
  %v93 = vmul.f32 %v61, 0.2
  %v94 = vmul.f32 %v62, 0.2
  %v95 = vmul.f32 %v63, 0.2
  %v96 = vmul.f32 %v64, 0.2
  %v97 = vmul.f32 %v65, 0.2
  %v98 = vmul.f32 %v66, 0.2
  %v99 = vmul.f32 %v67, 0.2
  %v100 = vmul.f32 %v68, 0.2
  %v101 = vmul.f32 %v69, 0.2
  %v102 = vmul.f32 %v70, 0.2
  %v103 = vmul.f32 %v71, 0.2
  %v104 = vmul.f32 %v72, 0.2
  %v105 = vmul.f32 %v73, 0.2
  %v106 = vmul.f32 %v74, 0.2
  %v107 = vmul.f32 %v75, 0.2
  %v108 = vsel %vm76, %v60, %v92
  %v109 = vsel %vm77, %v61, %v93
  %v110 = vsel %vm78, %v62, %v94
  %v111 = vsel %vm79, %v63, %v95
  %v112 = vsel %vm80, %v64, %v96
  %v113 = vsel %vm81, %v65, %v97
  %v114 = vsel %vm82, %v66, %v98
  %v115 = vsel %vm83, %v67, %v99
  %v116 = vsel %vm84, %v68, %v100
  %v117 = vsel %vm85, %v69, %v101
  %v118 = vsel %vm86, %v70, %v102
  %v119 = vsel %vm87, %v71, %v103
  %v120 = vsel %vm88, %v72, %v104
  %v121 = vsel %vm89, %v73, %v105
  %v122 = vsel %vm90, %v74, %v106
  %v123 = vsel %vm91, %v75, %v107
  %124 = vst [vmem:[%s3] sm:$0xff] %v108
  %125 = vst [vmem:[%s3 + $0x8] sm:$0xff] %v109
  %126 = vst [vmem:[%s3 + $0x10] sm:$0xff] %v110
  %127 = vst [vmem:[%s3 + $0x18] sm:$0xff] %v111
  %128 = vst [vmem:[%s3 + $0x20] sm:$0xff] %v112
  %129 = vst [vmem:[%s3 + $0x28] sm:$0xff] %v113
  %130 = vst [vmem:[%s3 + $0x30] sm:$0xff] %v114
  %131 = vst [vmem:[%s3 + $0x38] sm:$0xff] %v115
  %132 = vst [vmem:[%s3 + $0x40] sm:$0xff] %v116
  %133 = vst [vmem:[%s3 + $0x48] sm:$0xff] %v117
  %134 = vst [vmem:[%s3 + $0x50] sm:$0xff] %v118
  %135 = vst [vmem:[%s3 + $0x58] sm:$0xff] %v119
  %136 = vst [vmem:[%s3 + $0x60] sm:$0xff] %v120
  %137 = vst [vmem:[%s3 + $0x68] sm:$0xff] %v121
  %138 = vst [vmem:[%s3 + $0x70] sm:$0xff] %v122
  %139 = vst [vmem:[%s3 + $0x78] sm:$0xff] %v123
  // Predicated region
  $region14: #{_lambda_.10} parent=0 // pred_check
    _
  $region15: #{_lambda_.10} parent=0 // pred_check_branch
    %141 = sbr.rel (0) target = $region17
  $region16: #{_lambda_.10} parent=0 // pred_region
    _
  $region17: #{_lambda_.10} parent=0 // pred_fallthru
    _
  // Predicated region
  $region18: #{_lambda_.10} parent=0 // pred_check
    _
  $region19: #{_lambda_.10} parent=0 // pred_check_branch
    %143 = sbr.rel (0) target = $region21
  $region20: #{_lambda_.10} parent=0 // pred_region
    _
  $region21: #{_lambda_.10} parent=0 // pred_fallthru
    _

// kernel: _lambda_.12
$region0: #{_lambda_.12}
  #allocation0 [shape = 'u32[]', space=smem, size = 0x4, offset = 0x4, fixed_abs, tag = 'smem constant byte address 0x4 - core index']
  #allocation1 [shape = 'u32[144,128]{1,0:T(1,128)}', space=vmem, size = 0x12000, scoped, tag = 'internal scratch']
  %s0 = inlined_call_operand.vmem [shape: f32[32,128], index: 0, kind: input, shape index: {}]
  %s1 = inlined_call_operand.vmem [shape: f32[1,128], index: 1, kind: input, shape index: {}]
  %s2 = inlined_call_operand.vmem [shape: f32[1,128], index: 2, kind: input, shape index: {}]
  %s3 = inlined_call_operand.vmem [shape: f32[32,128], index: 3, kind: output, shape index: {}]
  %s4 = sld [smem:[#allocation0]]
  $region22: #{_lambda_.12} parent=0
    _
  %s6 = ssub.s32 1, %s4
  %s7 = scalar_select 0, %s6, %s4
  // Predicated region
  $region2: #{_lambda_.12} parent=0 // pred_check
    _
  $region3: #{_lambda_.12} parent=0 // pred_check_branch
    %9 = sbr.rel (0) target = $region5
  $region4: #{_lambda_.12} parent=0 // pred_region
    _
  $region5: #{_lambda_.12} parent=0 // pred_fallthru
    _
  // Predicated region
  $region6: #{_lambda_.12} parent=0 // pred_check
    _
  $region7: #{_lambda_.12} parent=0 // pred_check_branch
    %11 = sbr.rel (0) target = $region9
  $region8: #{_lambda_.12} parent=0 // pred_region
    _
  $region9: #{_lambda_.12} parent=0 // pred_fallthru
    _
  // Predicated region
  $region10: #{_lambda_.12} parent=0 // pred_check
    _
  $region11: #{_lambda_.12} parent=0 // pred_check_branch
    %13 = sbr.rel (0) target = $region13
  $region12: #{_lambda_.12} parent=0 // pred_region
    _
  $region13: #{_lambda_.12} parent=0 // pred_fallthru
    _
  %v14 = vld [vmem:[%s0] sm:$0xff]
  %v15 = vld [vmem:[%s0 + $0x8] sm:$0xff]
  %v16 = vld [vmem:[%s0 + $0x10] sm:$0xff]
  %v17 = vld [vmem:[%s0 + $0x18] sm:$0xff]
  %v18 = vld [vmem:[%s1] sm:$0x1]
  %v20 = vlaneseq
  %v21 = vshrl.u32 %v20, 7
  %v22 = vsub.s32 0, %v21
  %v23 = vrot.slane %v18, %v22
  %v25 = vmul.f32 %v14, %v23
  %v26 = vmul.f32 %v15, %v23
  %v27 = vmul.f32 %v16, %v23
  %v28 = vmul.f32 %v17, %v23
  %v29 = vld [vmem:[%s2] sm:$0x1]
  %v31 = vlaneseq
  %v32 = vshrl.u32 %v31, 7
  %v33 = vsub.s32 0, %v32
  %v34 = vrot.slane %v29, %v33
  %v36 = vadd.f32 %v25, %v34
  %v37 = vadd.f32 %v26, %v34
  %v38 = vadd.f32 %v27, %v34
  %v39 = vadd.f32 %v28, %v34
  %vm40 = vcmp.ge.f32.partialorder %v36, 0.0
  %vm41 = vcmp.ge.f32.partialorder %v37, 0.0
  %vm42 = vcmp.ge.f32.partialorder %v38, 0.0
  %vm43 = vcmp.ge.f32.partialorder %v39, 0.0
  %v44 = vmul.f32 %v36, 0.2
  %v45 = vmul.f32 %v37, 0.2
  %v46 = vmul.f32 %v38, 0.2
  %v47 = vmul.f32 %v39, 0.2
  %v48 = vsel %vm40, %v36, %v44
  %v49 = vsel %vm41, %v37, %v45
  %v50 = vsel %vm42, %v38, %v46
  %v51 = vsel %vm43, %v39, %v47
  %52 = vst [vmem:[%s3] sm:$0xff] %v48
  %53 = vst [vmem:[%s3 + $0x8] sm:$0xff] %v49
  %54 = vst [vmem:[%s3 + $0x10] sm:$0xff] %v50
  %55 = vst [vmem:[%s3 + $0x18] sm:$0xff] %v51
  // Predicated region
  $region14: #{_lambda_.12} parent=0 // pred_check
    _
  $region15: #{_lambda_.12} parent=0 // pred_check_branch
    %57 = sbr.rel (0) target = $region17
  $region16: #{_lambda_.12} parent=0 // pred_region
    _
  $region17: #{_lambda_.12} parent=0 // pred_fallthru
    _
  // Predicated region
  $region18: #{_lambda_.12} parent=0 // pred_check
    _
  $region19: #{_lambda_.12} parent=0 // pred_check_branch
    %59 = sbr.rel (0) target = $region21
  $region20: #{_lambda_.12} parent=0 // pred_region
    _
  $region21: #{_lambda_.12} parent=0 // pred_fallthru
    _

// kernel: _lambda_.11
$region0: #{_lambda_.11}
  #allocation0 [shape = 'u32[]', space=smem, size = 0x4, offset = 0x4, fixed_abs, tag = 'smem constant byte address 0x4 - core index']
  #allocation1 [shape = 'u32[144,128]{1,0:T(1,128)}', space=vmem, size = 0x12000, scoped, tag = 'internal scratch']
  #allocation2 [shape = 'f32[32,128]{1,0:T(8,128)}', space=vmem, size = 0x4000, scoped, tag = 'scratch operand']
  %s0 = inlined_call_operand.vmem [shape: f32[32,256], index: 0, kind: input, shape index: {}]
  %s1 = inlined_call_operand.vmem [shape: f32[256,128], index: 1, kind: input, shape index: {}]
  %s2 = inlined_call_operand.vmem [shape: f32[32,128], index: 2, kind: output, shape index: {0}]
  %s3 = inlined_call_operand.vmem [shape: f32[1,2,128], index: 3, kind: output, shape index: {1}]
  %4 = xla_tuple %s2, %s3
  %s5 = sld [smem:[#allocation0]]
  $region34: #{_lambda_.11} parent=0
    _
  %s7 = ssub.s32 1, %s5
  %s8 = scalar_select 0, %s7, %s5
  // Predicated region
  $region2: #{_lambda_.11} parent=0 // pred_check
    _
  $region3: #{_lambda_.11} parent=0 // pred_check_branch
    %10 = sbr.rel (0) target = $region5
  $region4: #{_lambda_.11} parent=0 // pred_region
    _
  $region5: #{_lambda_.11} parent=0 // pred_fallthru
    _
  // Predicated region
  $region6: #{_lambda_.11} parent=0 // pred_check
    _
  $region7: #{_lambda_.11} parent=0 // pred_check_branch
    %12 = sbr.rel (0) target = $region9
  $region8: #{_lambda_.11} parent=0 // pred_region
    _
  $region9: #{_lambda_.11} parent=0 // pred_fallthru
    _
  %p13 = scmp.eq.s32.totalorder 0, 0
  // Predicated region
  $region10: #{_lambda_.11} parent=0 // pred_check
    %p14 = pneg %p13
  $region11: #{_lambda_.11} parent=0 // pred_check_branch
    %16 = sbr.rel (%p14) target = $region13
  $region12: #{_lambda_.11} parent=0 // pred_region
    %17 = vst [vmem:[#allocation2] sm:$0xff] 0.0
    %18 = vst [vmem:[#allocation2 + $0x8] sm:$0xff] 0.0
    %19 = vst [vmem:[#allocation2 + $0x10] sm:$0xff] 0.0
    %20 = vst [vmem:[#allocation2 + $0x18] sm:$0xff] 0.0
  $region13: #{_lambda_.11} parent=0 // pred_fallthru
    _
  %v21 = vld [vmem:[#allocation2] sm:$0xff]
  %v22 = vld [vmem:[#allocation2 + $0x8] sm:$0xff]
  %v23 = vld [vmem:[#allocation2 + $0x10] sm:$0xff]
  %v24 = vld [vmem:[#allocation2 + $0x18] sm:$0xff]
  %v25 = vld [vmem:[%s0] sm:$0xff]
  %v26 = vld [vmem:[%s0 + $0x8] sm:$0xff]
  %v27 = vld [vmem:[%s0 + $0x10] sm:$0xff]
  %v28 = vld [vmem:[%s0 + $0x18] sm:$0xff]
  %v29 = vld [vmem:[%s0 + $0x20] sm:$0xff]
  %v30 = vld [vmem:[%s0 + $0x28] sm:$0xff]
  %v31 = vld [vmem:[%s0 + $0x30] sm:$0xff]
  %v32 = vld [vmem:[%s0 + $0x38] sm:$0xff]
  %v33 = vld [vmem:[%s1] sm:$0xff]
  %v34 = vld [vmem:[%s1 + $0x8] sm:$0xff]
  %v35 = vld [vmem:[%s1 + $0x10] sm:$0xff]
  %v36 = vld [vmem:[%s1 + $0x18] sm:$0xff]
  %v37 = vld [vmem:[%s1 + $0x20] sm:$0xff]
  %v38 = vld [vmem:[%s1 + $0x28] sm:$0xff]
  %v39 = vld [vmem:[%s1 + $0x30] sm:$0xff]
  %v40 = vld [vmem:[%s1 + $0x38] sm:$0xff]
  %v41 = vld [vmem:[%s1 + $0x40] sm:$0xff]
  %v42 = vld [vmem:[%s1 + $0x48] sm:$0xff]
  %v43 = vld [vmem:[%s1 + $0x50] sm:$0xff]
  %v44 = vld [vmem:[%s1 + $0x58] sm:$0xff]
  %v45 = vld [vmem:[%s1 + $0x60] sm:$0xff]
  %v46 = vld [vmem:[%s1 + $0x68] sm:$0xff]
  %v47 = vld [vmem:[%s1 + $0x70] sm:$0xff]
  %v48 = vld [vmem:[%s1 + $0x78] sm:$0xff]
  %v49 = vld [vmem:[%s1 + $0x80] sm:$0xff]
  %v50 = vld [vmem:[%s1 + $0x88] sm:$0xff]
  %v51 = vld [vmem:[%s1 + $0x90] sm:$0xff]
  %v52 = vld [vmem:[%s1 + $0x98] sm:$0xff]
  %v53 = vld [vmem:[%s1 + $0xa0] sm:$0xff]
  %v54 = vld [vmem:[%s1 + $0xa8] sm:$0xff]
  %v55 = vld [vmem:[%s1 + $0xb0] sm:$0xff]
  %v56 = vld [vmem:[%s1 + $0xb8] sm:$0xff]
  %v57 = vld [vmem:[%s1 + $0xc0] sm:$0xff]
  %v58 = vld [vmem:[%s1 + $0xc8] sm:$0xff]
  %v59 = vld [vmem:[%s1 + $0xd0] sm:$0xff]
  %v60 = vld [vmem:[%s1 + $0xd8] sm:$0xff]
  %v61 = vld [vmem:[%s1 + $0xe0] sm:$0xff]
  %v62 = vld [vmem:[%s1 + $0xe8] sm:$0xff]
  %v63 = vld [vmem:[%s1 + $0xf0] sm:$0xff]
  %v64 = vld [vmem:[%s1 + $0xf8] sm:$0xff]
  %65 = vmatprep.subr.mxu0 0.0
  %66 = vmatpush1.msra.mxu0 %v33
  %67 = vmatprep.subr.mxu0 0.0
  %68 = vmatpush1.msra.mxu0 %v34
  %69 = vmatprep.subr.mxu0 0.0
  %70 = vmatpush1.msra.mxu0 %v35
  %71 = vmatprep.subr.mxu0 0.0
  %72 = vmatpush1.msra.mxu0 %v36
  %73 = vmatprep.subr.mxu0 0.0
  %74 = vmatpush1.msra.mxu0 %v37
  %75 = vmatprep.subr.mxu0 0.0
  %76 = vmatpush1.msra.mxu0 %v38
  %77 = vmatprep.subr.mxu0 0.0
  %78 = vmatpush1.msra.mxu0 %v39
  %79 = vmatprep.subr.mxu0 0.0
  %80 = vmatpush1.msra.mxu0 %v40
  %81 = vmatprep.subr.mxu0 0.0
  %82 = vmatpush1.msra.mxu0 %v41
  %83 = vmatprep.subr.mxu0 0.0
  %84 = vmatpush1.msra.mxu0 %v42
  %85 = vmatprep.subr.mxu0 0.0
  %86 = vmatpush1.msra.mxu0 %v43
  %87 = vmatprep.subr.mxu0 0.0
  %88 = vmatpush1.msra.mxu0 %v44
  %89 = vmatprep.subr.mxu0 0.0
  %90 = vmatpush1.msra.mxu0 %v45
  %91 = vmatprep.subr.mxu0 0.0
  %92 = vmatpush1.msra.mxu0 %v46
  %93 = vmatprep.subr.mxu0 0.0
  %94 = vmatpush1.msra.mxu0 %v47
  %95 = vmatprep.subr.mxu0 0.0
  %96 = vmatpush1.msra.mxu0 %v48
  %97 = vmatprep.subr.mxu0 0.0
  %98 = vmatpush1.msra.mxu0 %v49
  %99 = vmatprep.subr.mxu0 0.0
  %100 = vmatpush1.msra.mxu0 %v50
  %101 = vmatprep.subr.mxu0 0.0
  %102 = vmatpush1.msra.mxu0 %v51
  %103 = vmatprep.subr.mxu0 0.0
  %104 = vmatpush1.msra.mxu0 %v52
  %105 = vmatprep.subr.mxu0 0.0
  %106 = vmatpush1.msra.mxu0 %v53
  %107 = vmatprep.subr.mxu0 0.0
  %108 = vmatpush1.msra.mxu0 %v54
  %109 = vmatprep.subr.mxu0 0.0
  %110 = vmatpush1.msra.mxu0 %v55
  %111 = vmatprep.subr.mxu0 0.0
  %112 = vmatpush1.msra.mxu0 %v56
  %113 = vmatprep.subr.mxu0 0.0
  %114 = vmatpush1.msra.mxu0 %v57
  %115 = vmatprep.subr.mxu0 0.0
  %116 = vmatpush1.msra.mxu0 %v58
  %117 = vmatprep.subr.mxu0 0.0
  %118 = vmatpush1.msra.mxu0 %v59
  %119 = vmatprep.subr.mxu0 0.0
  %120 = vmatpush1.msra.mxu0 %v60
  %121 = vmatprep.subr.mxu0 0.0
  %122 = vmatpush1.msra.mxu0 %v61
  %123 = vmatprep.subr.mxu0 0.0
  %124 = vmatpush1.msra.mxu0 %v62
  %125 = vmatprep.subr.mxu0 0.0
  %126 = vmatpush1.msra.mxu0 %v63
  %127 = vmatprep.subr.mxu0 0.0
  %128 = vmatpush1.msra.mxu0 %v64
  %129 = vmatprep.mubr.f32.mxu0 %v26
  %130 = vmatmul.mubr.f32.gmra.mrb[0].mxu0 %v25
  %v131 = vpop.f32.mrb[0].mxu0
  %v132 = vadd.f32 0.0, %v131
  %v133 = vpop.f32.mrb[0].mxu0
  %134 = vmatprep.mubr.f32.mxu0 %v28
  %135 = vmatmul.mubr.f32.gmra.mrb[0].mxu0 %v27
  %v136 = vpop.f32.mrb[0].mxu0
  %v137 = vadd.f32 0.0, %v136
  %v138 = vpop.f32.mrb[0].mxu0
  %139 = vmatprep.mubr.f32.mxu0 %v30
  %140 = vmatmul.mubr.f32.gmra.mrb[0].mxu0 %v29
  %v141 = vpop.f32.mrb[0].mxu0
  %v142 = vadd.f32 0.0, %v141
  %v143 = vpop.f32.mrb[0].mxu0
  %144 = vmatprep.mubr.f32.mxu0 %v32
  %145 = vmatmul.mubr.f32.gmra.mrb[0].mxu0 %v31
  %v146 = vpop.f32.mrb[0].mxu0
  %v147 = vadd.f32 0.0, %v146
  %v148 = vpop.f32.mrb[0].mxu0
  %149 = vdwg.mxu0
  %v150 = vadd.f32 %v21, %v132
  %v151 = vadd.f32 %v22, %v137
  %v152 = vadd.f32 %v23, %v142
  %v153 = vadd.f32 %v24, %v147
  %154 = vst [vmem:[#allocation2] sm:$0xff] %v150
  %155 = vst [vmem:[#allocation2 + $0x8] sm:$0xff] %v151
  %156 = vst [vmem:[#allocation2 + $0x10] sm:$0xff] %v152
  %157 = vst [vmem:[#allocation2 + $0x18] sm:$0xff] %v153
  // Predicated region
  $region14: #{_lambda_.11} parent=0 // pred_check
    %p158 = pneg %p13
  $region15: #{_lambda_.11} parent=0 // pred_check_branch
    %160 = sbr.rel (%p158) target = $region17
  $region16: #{_lambda_.11} parent=0 // pred_region
    %v161 = vld [vmem:[#allocation2] sm:$0xff]
    %v162 = vld [vmem:[#allocation2 + $0x8] sm:$0xff]
    %v163 = vld [vmem:[#allocation2 + $0x10] sm:$0xff]
    %v164 = vld [vmem:[#allocation2 + $0x18] sm:$0xff]
    %165 = vst [vmem:[%s2] sm:$0xff] %v161
    %166 = vst [vmem:[%s2 + $0x8] sm:$0xff] %v162
    %167 = vst [vmem:[%s2 + $0x10] sm:$0xff] %v163
    %168 = vst [vmem:[%s2 + $0x18] sm:$0xff] %v164
    %v169 = vadd.f32 %v161, %v162
    %v170 = vadd.f32 %v169, %v163
    %v171 = vadd.f32 %v170, %v164
    %v172 = vrot.slane %v171, 4
    %v173 = vadd.f32 %v171, %v172
    %v174 = vrot.slane %v173, 2
    %v175 = vadd.f32 %v173, %v174
    %v176 = vrot.slane %v175, 1
    %v177 = vadd.f32 %v175, %v176
    %v178 = vmul.f32 %v161, %v161
    %v179 = vmul.f32 %v162, %v162
    %v180 = vmul.f32 %v163, %v163
    %v181 = vmul.f32 %v164, %v164
    %v182 = vadd.f32 %v178, %v179
    %v183 = vadd.f32 %v182, %v180
    %v184 = vadd.f32 %v183, %v181
    %v185 = vrot.slane %v184, 4
    %v186 = vadd.f32 %v184, %v185
    %v187 = vrot.slane %v186, 2
    %v188 = vadd.f32 %v186, %v187
    %v189 = vrot.slane %v188, 1
    %v190 = vadd.f32 %v188, %v189
    %vm191 = vcmask 1040384
    %v192 = vsel %vm191, %v177, %v190
    %193 = vst [vmem:[%s3] sm:$0x3] %v192
  $region17: #{_lambda_.11} parent=0 // pred_fallthru
    _
  // Predicated region
  $region18: #{_lambda_.11} parent=0 // pred_check
    _
  $region19: #{_lambda_.11} parent=0 // pred_check_branch
    %195 = sbr.rel (0) target = $region21
  $region20: #{_lambda_.11} parent=0 // pred_region
    _
  $region21: #{_lambda_.11} parent=0 // pred_fallthru
    _
  // Predicated region
  $region22: #{_lambda_.11} parent=0 // pred_check
    _
  $region23: #{_lambda_.11} parent=0 // pred_check_branch
    %197 = sbr.rel (0) target = $region25
  $region24: #{_lambda_.11} parent=0 // pred_region
    _
  $region25: #{_lambda_.11} parent=0 // pred_fallthru
    _
  // Predicated region
  $region26: #{_lambda_.11} parent=0 // pred_check
    _
  $region27: #{_lambda_.11} parent=0 // pred_check_branch
    %199 = sbr.rel (0) target = $region29
  $region28: #{_lambda_.11} parent=0 // pred_region
    _
  $region29: #{_lambda_.11} parent=0 // pred_fallthru
    _
  // Predicated region
  $region30: #{_lambda_.11} parent=0 // pred_check
    _
  $region31: #{_lambda_.11} parent=0 // pred_check_branch
    %201 = sbr.rel (0) target = $region33
  $region32: #{_lambda_.11} parent=0 // pred_region
    _
  $region33: #{_lambda_.11} parent=0 // pred_fallthru
    _

// kernel: _lambda_.14
$region0: #{_lambda_.14}
  #allocation0 [shape = 'u32[]', space=smem, size = 0x4, offset = 0x4, fixed_abs, tag = 'smem constant byte address 0x4 - core index']
  #allocation1 [shape = 'u32[144,128]{1,0:T(1,128)}', space=vmem, size = 0x12000, scoped, tag = 'internal scratch']
  %s0 = inlined_call_operand.vmem [shape: f32[24,128], index: 0, kind: input, shape index: {}]
  %s1 = inlined_call_operand.vmem [shape: f32[1,128], index: 1, kind: input, shape index: {}]
  %s2 = inlined_call_operand.vmem [shape: f32[1,128], index: 2, kind: input, shape index: {}]
  %s3 = inlined_call_operand.vmem [shape: f32[24,128], index: 3, kind: output, shape index: {}]
  %s4 = sld [smem:[#allocation0]]
  $region22: #{_lambda_.14} parent=0
    _
  %s6 = ssub.s32 1, %s4
  %s7 = scalar_select 0, %s6, %s4
  // Predicated region
  $region2: #{_lambda_.14} parent=0 // pred_check
    _
  $region3: #{_lambda_.14} parent=0 // pred_check_branch
    %9 = sbr.rel (0) target = $region5
  $region4: #{_lambda_.14} parent=0 // pred_region
    _
  $region5: #{_lambda_.14} parent=0 // pred_fallthru
    _
  // Predicated region
  $region6: #{_lambda_.14} parent=0 // pred_check
    _
  $region7: #{_lambda_.14} parent=0 // pred_check_branch
    %11 = sbr.rel (0) target = $region9
  $region8: #{_lambda_.14} parent=0 // pred_region
    _
  $region9: #{_lambda_.14} parent=0 // pred_fallthru
    _
  // Predicated region
  $region10: #{_lambda_.14} parent=0 // pred_check
    _
  $region11: #{_lambda_.14} parent=0 // pred_check_branch
    %13 = sbr.rel (0) target = $region13
  $region12: #{_lambda_.14} parent=0 // pred_region
    _
  $region13: #{_lambda_.14} parent=0 // pred_fallthru
    _
  %v14 = vld [vmem:[%s0] sm:$0xff]
  %v15 = vld [vmem:[%s0 + $0x8] sm:$0xff]
  %v16 = vld [vmem:[%s0 + $0x10] sm:$0xff]
  %v17 = vld [vmem:[%s1] sm:$0x1]
  %v19 = vlaneseq
  %v20 = vshrl.u32 %v19, 7
  %v21 = vsub.s32 0, %v20
  %v22 = vrot.slane %v17, %v21
  %v24 = vmul.f32 %v14, %v22
  %v25 = vmul.f32 %v15, %v22
  %v26 = vmul.f32 %v16, %v22
  %v27 = vld [vmem:[%s2] sm:$0x1]
  %v29 = vlaneseq
  %v30 = vshrl.u32 %v29, 7
  %v31 = vsub.s32 0, %v30
  %v32 = vrot.slane %v27, %v31
  %v34 = vadd.f32 %v24, %v32
  %v35 = vadd.f32 %v25, %v32
  %v36 = vadd.f32 %v26, %v32
  %vm37 = vcmp.ge.f32.partialorder %v34, 0.0
  %vm38 = vcmp.ge.f32.partialorder %v35, 0.0
  %vm39 = vcmp.ge.f32.partialorder %v36, 0.0
  %v40 = vmul.f32 %v34, 0.2
  %v41 = vmul.f32 %v35, 0.2
  %v42 = vmul.f32 %v36, 0.2
  %v43 = vsel %vm37, %v34, %v40
  %v44 = vsel %vm38, %v35, %v41
  %v45 = vsel %vm39, %v36, %v42
  %46 = vst [vmem:[%s3] sm:$0xff] %v43
  %47 = vst [vmem:[%s3 + $0x8] sm:$0xff] %v44
  %48 = vst [vmem:[%s3 + $0x10] sm:$0xff] %v45
  // Predicated region
  $region14: #{_lambda_.14} parent=0 // pred_check
    _
  $region15: #{_lambda_.14} parent=0 // pred_check_branch
    %50 = sbr.rel (0) target = $region17
  $region16: #{_lambda_.14} parent=0 // pred_region
    _
  $region17: #{_lambda_.14} parent=0 // pred_fallthru
    _
  // Predicated region
  $region18: #{_lambda_.14} parent=0 // pred_check
    _
  $region19: #{_lambda_.14} parent=0 // pred_check_branch
    %52 = sbr.rel (0) target = $region21
  $region20: #{_lambda_.14} parent=0 // pred_region
    _
  $region21: #{_lambda_.14} parent=0 // pred_fallthru
    _

// kernel: _lambda_.13
$region0: #{_lambda_.13}
  #allocation0 [shape = 'u32[]', space=smem, size = 0x4, offset = 0x4, fixed_abs, tag = 'smem constant byte address 0x4 - core index']
  #allocation1 [shape = 'u32[144,128]{1,0:T(1,128)}', space=vmem, size = 0x12000, scoped, tag = 'internal scratch']
  #allocation2 [shape = 'f32[24,128]{1,0:T(8,128)}', space=vmem, size = 0x3000, scoped, tag = 'scratch operand']
  %s0 = inlined_call_operand.vmem [shape: f32[24,512], index: 0, kind: input, shape index: {}]
  %s1 = inlined_call_operand.vmem [shape: f32[512,128], index: 1, kind: input, shape index: {}]
  %s2 = inlined_call_operand.vmem [shape: f32[24,128], index: 2, kind: output, shape index: {0}]
  %s3 = inlined_call_operand.vmem [shape: f32[1,2,128], index: 3, kind: output, shape index: {1}]
  %4 = xla_tuple %s2, %s3
  %s5 = sld [smem:[#allocation0]]
  $region34: #{_lambda_.13} parent=0
    _
  %s7 = ssub.s32 1, %s5
  %s8 = scalar_select 0, %s7, %s5
  // Predicated region
  $region2: #{_lambda_.13} parent=0 // pred_check
    _
  $region3: #{_lambda_.13} parent=0 // pred_check_branch
    %10 = sbr.rel (0) target = $region5
  $region4: #{_lambda_.13} parent=0 // pred_region
    _
  $region5: #{_lambda_.13} parent=0 // pred_fallthru
    _
  // Predicated region
  $region6: #{_lambda_.13} parent=0 // pred_check
    _
  $region7: #{_lambda_.13} parent=0 // pred_check_branch
    %12 = sbr.rel (0) target = $region9
  $region8: #{_lambda_.13} parent=0 // pred_region
    _
  $region9: #{_lambda_.13} parent=0 // pred_fallthru
    _
  %p13 = scmp.eq.s32.totalorder 0, 0
  // Predicated region
  $region10: #{_lambda_.13} parent=0 // pred_check
    %p14 = pneg %p13
  $region11: #{_lambda_.13} parent=0 // pred_check_branch
    %16 = sbr.rel (%p14) target = $region13
  $region12: #{_lambda_.13} parent=0 // pred_region
    %17 = vst [vmem:[#allocation2] sm:$0xff] 0.0
    %18 = vst [vmem:[#allocation2 + $0x8] sm:$0xff] 0.0
    %19 = vst [vmem:[#allocation2 + $0x10] sm:$0xff] 0.0
  $region13: #{_lambda_.13} parent=0 // pred_fallthru
    _
  %v20 = vld [vmem:[#allocation2] sm:$0xff]
  %v21 = vld [vmem:[#allocation2 + $0x8] sm:$0xff]
  %v22 = vld [vmem:[#allocation2 + $0x10] sm:$0xff]
  %v23 = vld [vmem:[%s0] sm:$0xff]
  %v24 = vld [vmem:[%s0 + $0x8] sm:$0xff]
  %v25 = vld [vmem:[%s0 + $0x10] sm:$0xff]
  %v26 = vld [vmem:[%s0 + $0x18] sm:$0xff]
  %v27 = vld [vmem:[%s0 + $0x20] sm:$0xff]
  %v28 = vld [vmem:[%s0 + $0x28] sm:$0xff]
  %v29 = vld [vmem:[%s0 + $0x30] sm:$0xff]
  %v30 = vld [vmem:[%s0 + $0x38] sm:$0xff]
  %v31 = vld [vmem:[%s0 + $0x40] sm:$0xff]
  %v32 = vld [vmem:[%s0 + $0x48] sm:$0xff]
  %v33 = vld [vmem:[%s0 + $0x50] sm:$0xff]
  %v34 = vld [vmem:[%s0 + $0x58] sm:$0xff]
  %v35 = vld [vmem:[%s1] sm:$0xff]
  %v36 = vld [vmem:[%s1 + $0x8] sm:$0xff]
  %v37 = vld [vmem:[%s1 + $0x10] sm:$0xff]
  %v38 = vld [vmem:[%s1 + $0x18] sm:$0xff]
  %v39 = vld [vmem:[%s1 + $0x20] sm:$0xff]
  %v40 = vld [vmem:[%s1 + $0x28] sm:$0xff]
  %v41 = vld [vmem:[%s1 + $0x30] sm:$0xff]
  %v42 = vld [vmem:[%s1 + $0x38] sm:$0xff]
  %v43 = vld [vmem:[%s1 + $0x40] sm:$0xff]
  %v44 = vld [vmem:[%s1 + $0x48] sm:$0xff]
  %v45 = vld [vmem:[%s1 + $0x50] sm:$0xff]
  %v46 = vld [vmem:[%s1 + $0x58] sm:$0xff]
  %v47 = vld [vmem:[%s1 + $0x60] sm:$0xff]
  %v48 = vld [vmem:[%s1 + $0x68] sm:$0xff]
  %v49 = vld [vmem:[%s1 + $0x70] sm:$0xff]
  %v50 = vld [vmem:[%s1 + $0x78] sm:$0xff]
  %v51 = vld [vmem:[%s1 + $0x80] sm:$0xff]
  %v52 = vld [vmem:[%s1 + $0x88] sm:$0xff]
  %v53 = vld [vmem:[%s1 + $0x90] sm:$0xff]
  %v54 = vld [vmem:[%s1 + $0x98] sm:$0xff]
  %v55 = vld [vmem:[%s1 + $0xa0] sm:$0xff]
  %v56 = vld [vmem:[%s1 + $0xa8] sm:$0xff]
  %v57 = vld [vmem:[%s1 + $0xb0] sm:$0xff]
  %v58 = vld [vmem:[%s1 + $0xb8] sm:$0xff]
  %v59 = vld [vmem:[%s1 + $0xc0] sm:$0xff]
  %v60 = vld [vmem:[%s1 + $0xc8] sm:$0xff]
  %v61 = vld [vmem:[%s1 + $0xd0] sm:$0xff]
  %v62 = vld [vmem:[%s1 + $0xd8] sm:$0xff]
  %v63 = vld [vmem:[%s1 + $0xe0] sm:$0xff]
  %v64 = vld [vmem:[%s1 + $0xe8] sm:$0xff]
  %v65 = vld [vmem:[%s1 + $0xf0] sm:$0xff]
  %v66 = vld [vmem:[%s1 + $0xf8] sm:$0xff]
  %v67 = vld [vmem:[%s1 + $0x100] sm:$0xff]
  %v68 = vld [vmem:[%s1 + $0x108] sm:$0xff]
  %v69 = vld [vmem:[%s1 + $0x110] sm:$0xff]
  %v70 = vld [vmem:[%s1 + $0x118] sm:$0xff]
  %v71 = vld [vmem:[%s1 + $0x120] sm:$0xff]
  %v72 = vld [vmem:[%s1 + $0x128] sm:$0xff]
  %v73 = vld [vmem:[%s1 + $0x130] sm:$0xff]
  %v74 = vld [vmem:[%s1 + $0x138] sm:$0xff]
  %v75 = vld [vmem:[%s1 + $0x140] sm:$0xff]
  %v76 = vld [vmem:[%s1 + $0x148] sm:$0xff]
  %v77 = vld [vmem:[%s1 + $0x150] sm:$0xff]
  %v78 = vld [vmem:[%s1 + $0x158] sm:$0xff]
  %v79 = vld [vmem:[%s1 + $0x160] sm:$0xff]
  %v80 = vld [vmem:[%s1 + $0x168] sm:$0xff]
  %v81 = vld [vmem:[%s1 + $0x170] sm:$0xff]
  %v82 = vld [vmem:[%s1 + $0x178] sm:$0xff]
  %v83 = vld [vmem:[%s1 + $0x180] sm:$0xff]
  %v84 = vld [vmem:[%s1 + $0x188] sm:$0xff]
  %v85 = vld [vmem:[%s1 + $0x190] sm:$0xff]
  %v86 = vld [vmem:[%s1 + $0x198] sm:$0xff]
  %v87 = vld [vmem:[%s1 + $0x1a0] sm:$0xff]
  %v88 = vld [vmem:[%s1 + $0x1a8] sm:$0xff]
  %v89 = vld [vmem:[%s1 + $0x1b0] sm:$0xff]
  %v90 = vld [vmem:[%s1 + $0x1b8] sm:$0xff]
  %v91 = vld [vmem:[%s1 + $0x1c0] sm:$0xff]
  %v92 = vld [vmem:[%s1 + $0x1c8] sm:$0xff]
  %v93 = vld [vmem:[%s1 + $0x1d0] sm:$0xff]
  %v94 = vld [vmem:[%s1 + $0x1d8] sm:$0xff]
  %v95 = vld [vmem:[%s1 + $0x1e0] sm:$0xff]
  %v96 = vld [vmem:[%s1 + $0x1e8] sm:$0xff]
  %v97 = vld [vmem:[%s1 + $0x1f0] sm:$0xff]
  %v98 = vld [vmem:[%s1 + $0x1f8] sm:$0xff]
  %99 = vmatprep.subr.mxu0 0.0
  %100 = vmatpush1.msra.mxu0 %v35
  %101 = vmatprep.subr.mxu0 0.0
  %102 = vmatpush1.msra.mxu0 %v36
  %103 = vmatprep.subr.mxu0 0.0
  %104 = vmatpush1.msra.mxu0 %v37
  %105 = vmatprep.subr.mxu0 0.0
  %106 = vmatpush1.msra.mxu0 %v38
  %107 = vmatprep.subr.mxu0 0.0
  %108 = vmatpush1.msra.mxu0 %v39
  %109 = vmatprep.subr.mxu0 0.0
  %110 = vmatpush1.msra.mxu0 %v40
  %111 = vmatprep.subr.mxu0 0.0
  %112 = vmatpush1.msra.mxu0 %v41
  %113 = vmatprep.subr.mxu0 0.0
  %114 = vmatpush1.msra.mxu0 %v42
  %115 = vmatprep.subr.mxu0 0.0
  %116 = vmatpush1.msra.mxu0 %v43
  %117 = vmatprep.subr.mxu0 0.0
  %118 = vmatpush1.msra.mxu0 %v44
  %119 = vmatprep.subr.mxu0 0.0
  %120 = vmatpush1.msra.mxu0 %v45
  %121 = vmatprep.subr.mxu0 0.0
  %122 = vmatpush1.msra.mxu0 %v46
  %123 = vmatprep.subr.mxu0 0.0
  %124 = vmatpush1.msra.mxu0 %v47
  %125 = vmatprep.subr.mxu0 0.0
  %126 = vmatpush1.msra.mxu0 %v48
  %127 = vmatprep.subr.mxu0 0.0
  %128 = vmatpush1.msra.mxu0 %v49
  %129 = vmatprep.subr.mxu0 0.0
  %130 = vmatpush1.msra.mxu0 %v50
  %131 = vmatprep.subr.mxu0 0.0
  %132 = vmatpush1.msra.mxu0 %v51
  %133 = vmatprep.subr.mxu0 0.0
  %134 = vmatpush1.msra.mxu0 %v52
  %135 = vmatprep.subr.mxu0 0.0
  %136 = vmatpush1.msra.mxu0 %v53
  %137 = vmatprep.subr.mxu0 0.0
  %138 = vmatpush1.msra.mxu0 %v54
  %139 = vmatprep.subr.mxu0 0.0
  %140 = vmatpush1.msra.mxu0 %v55
  %141 = vmatprep.subr.mxu0 0.0
  %142 = vmatpush1.msra.mxu0 %v56
  %143 = vmatprep.subr.mxu0 0.0
  %144 = vmatpush1.msra.mxu0 %v57
  %145 = vmatprep.subr.mxu0 0.0
  %146 = vmatpush1.msra.mxu0 %v58
  %147 = vmatprep.subr.mxu0 0.0
  %148 = vmatpush1.msra.mxu0 %v59
  %149 = vmatprep.subr.mxu0 0.0
  %150 = vmatpush1.msra.mxu0 %v60
  %151 = vmatprep.subr.mxu0 0.0
  %152 = vmatpush1.msra.mxu0 %v61
  %153 = vmatprep.subr.mxu0 0.0
  %154 = vmatpush1.msra.mxu0 %v62
  %155 = vmatprep.subr.mxu0 0.0
  %156 = vmatpush1.msra.mxu0 %v63
  %157 = vmatprep.subr.mxu0 0.0
  %158 = vmatpush1.msra.mxu0 %v64
  %159 = vmatprep.subr.mxu0 0.0
  %160 = vmatpush1.msra.mxu0 %v65
  %161 = vmatprep.subr.mxu0 0.0
  %162 = vmatpush1.msra.mxu0 %v66
  %163 = vmatprep.mubr.f32.mxu0 %v24
  %164 = vmatmul.mubr.f32.gmra.mrb[0].mxu0 %v23
  %v165 = vpop.f32.mrb[0].mxu0
  %v166 = vadd.f32 0.0, %v165
  %v167 = vpop.f32.mrb[0].mxu0
  %168 = vmatprep.mubr.f32.mxu0 %v28
  %169 = vmatmul.mubr.f32.gmra.mrb[0].mxu0 %v27
  %v170 = vpop.f32.mrb[0].mxu0
  %v171 = vadd.f32 0.0, %v170
  %v172 = vpop.f32.mrb[0].mxu0
  %173 = vmatprep.mubr.f32.mxu0 %v32
  %174 = vmatmul.mubr.f32.gmra.mrb[0].mxu0 %v31
  %v175 = vpop.f32.mrb[0].mxu0
  %v176 = vadd.f32 0.0, %v175
  %v177 = vpop.f32.mrb[0].mxu0
  %178 = vdwg.mxu0
  %179 = vmatprep.subr.mxu0 0.0
  %180 = vmatpush1.msra.mxu0 %v67
  %181 = vmatprep.subr.mxu0 0.0
  %182 = vmatpush1.msra.mxu0 %v68
  %183 = vmatprep.subr.mxu0 0.0
  %184 = vmatpush1.msra.mxu0 %v69
  %185 = vmatprep.subr.mxu0 0.0
  %186 = vmatpush1.msra.mxu0 %v70
  %187 = vmatprep.subr.mxu0 0.0
  %188 = vmatpush1.msra.mxu0 %v71
  %189 = vmatprep.subr.mxu0 0.0
  %190 = vmatpush1.msra.mxu0 %v72
  %191 = vmatprep.subr.mxu0 0.0
  %192 = vmatpush1.msra.mxu0 %v73
  %193 = vmatprep.subr.mxu0 0.0
  %194 = vmatpush1.msra.mxu0 %v74
  %195 = vmatprep.subr.mxu0 0.0
  %196 = vmatpush1.msra.mxu0 %v75
  %197 = vmatprep.subr.mxu0 0.0
  %198 = vmatpush1.msra.mxu0 %v76
  %199 = vmatprep.subr.mxu0 0.0
  %200 = vmatpush1.msra.mxu0 %v77
  %201 = vmatprep.subr.mxu0 0.0
  %202 = vmatpush1.msra.mxu0 %v78
  %203 = vmatprep.subr.mxu0 0.0
  %204 = vmatpush1.msra.mxu0 %v79
  %205 = vmatprep.subr.mxu0 0.0
  %206 = vmatpush1.msra.mxu0 %v80
  %207 = vmatprep.subr.mxu0 0.0
  %208 = vmatpush1.msra.mxu0 %v81
  %209 = vmatprep.subr.mxu0 0.0
  %210 = vmatpush1.msra.mxu0 %v82
  %211 = vmatprep.subr.mxu0 0.0
  %212 = vmatpush1.msra.mxu0 %v83
  %213 = vmatprep.subr.mxu0 0.0
  %214 = vmatpush1.msra.mxu0 %v84
  %215 = vmatprep.subr.mxu0 0.0
  %216 = vmatpush1.msra.mxu0 %v85
  %217 = vmatprep.subr.mxu0 0.0
  %218 = vmatpush1.msra.mxu0 %v86
  %219 = vmatprep.subr.mxu0 0.0
  %220 = vmatpush1.msra.mxu0 %v87
  %221 = vmatprep.subr.mxu0 0.0
  %222 = vmatpush1.msra.mxu0 %v88
  %223 = vmatprep.subr.mxu0 0.0
  %224 = vmatpush1.msra.mxu0 %v89
  %225 = vmatprep.subr.mxu0 0.0
  %226 = vmatpush1.msra.mxu0 %v90
  %227 = vmatprep.subr.mxu0 0.0
  %228 = vmatpush1.msra.mxu0 %v91
  %229 = vmatprep.subr.mxu0 0.0
  %230 = vmatpush1.msra.mxu0 %v92
  %231 = vmatprep.subr.mxu0 0.0
  %232 = vmatpush1.msra.mxu0 %v93
  %233 = vmatprep.subr.mxu0 0.0
  %234 = vmatpush1.msra.mxu0 %v94
  %235 = vmatprep.subr.mxu0 0.0
  %236 = vmatpush1.msra.mxu0 %v95
  %237 = vmatprep.subr.mxu0 0.0
  %238 = vmatpush1.msra.mxu0 %v96
  %239 = vmatprep.subr.mxu0 0.0
  %240 = vmatpush1.msra.mxu0 %v97
  %241 = vmatprep.subr.mxu0 0.0
  %242 = vmatpush1.msra.mxu0 %v98
  %243 = vmatprep.mubr.f32.mxu0 %v26
  %244 = vmatmul.mubr.f32.gmra.mrb[0].mxu0 %v25
  %v245 = vpop.f32.mrb[0].mxu0
  %v246 = vadd.f32 %v166, %v245
  %v247 = vpop.f32.mrb[0].mxu0
  %248 = vmatprep.mubr.f32.mxu0 %v30
  %249 = vmatmul.mubr.f32.gmra.mrb[0].mxu0 %v29
  %v250 = vpop.f32.mrb[0].mxu0
  %v251 = vadd.f32 %v171, %v250
  %v252 = vpop.f32.mrb[0].mxu0
  %253 = vmatprep.mubr.f32.mxu0 %v34
  %254 = vmatmul.mubr.f32.gmra.mrb[0].mxu0 %v33
  %v255 = vpop.f32.mrb[0].mxu0
  %v256 = vadd.f32 %v176, %v255
  %v257 = vpop.f32.mrb[0].mxu0
  %258 = vdwg.mxu0
  %v259 = vadd.f32 %v20, %v246
  %v260 = vadd.f32 %v21, %v251
  %v261 = vadd.f32 %v22, %v256
  %262 = vst [vmem:[#allocation2] sm:$0xff] %v259
  %263 = vst [vmem:[#allocation2 + $0x8] sm:$0xff] %v260
  %264 = vst [vmem:[#allocation2 + $0x10] sm:$0xff] %v261
  // Predicated region
  $region14: #{_lambda_.13} parent=0 // pred_check
    %p265 = pneg %p13
  $region15: #{_lambda_.13} parent=0 // pred_check_branch
    %267 = sbr.rel (%p265) target = $region17
  $region16: #{_lambda_.13} parent=0 // pred_region
    %v268 = vld [vmem:[#allocation2] sm:$0xff]
    %v269 = vld [vmem:[#allocation2 + $0x8] sm:$0xff]
    %v270 = vld [vmem:[#allocation2 + $0x10] sm:$0xff]
    %271 = vst [vmem:[%s2] sm:$0xff] %v268
    %272 = vst [vmem:[%s2 + $0x8] sm:$0xff] %v269
    %273 = vst [vmem:[%s2 + $0x10] sm:$0xff] %v270
    %v274 = vadd.f32 %v268, %v269
    %v275 = vadd.f32 %v274, %v270
    %v276 = vrot.slane %v275, 4
    %v277 = vadd.f32 %v275, %v276
    %v278 = vrot.slane %v277, 2
    %v279 = vadd.f32 %v277, %v278
    %v280 = vrot.slane %v279, 1
    %v281 = vadd.f32 %v279, %v280
    %v282 = vmul.f32 %v268, %v268
    %v283 = vmul.f32 %v269, %v269
    %v284 = vmul.f32 %v270, %v270
    %v285 = vadd.f32 %v282, %v283
    %v286 = vadd.f32 %v285, %v284
    %v287 = vrot.slane %v286, 4
    %v288 = vadd.f32 %v286, %v287
    %v289 = vrot.slane %v288, 2
    %v290 = vadd.f32 %v288, %v289
    %v291 = vrot.slane %v290, 1
    %v292 = vadd.f32 %v290, %v291
    %vm293 = vcmask 1040384
    %v294 = vsel %vm293, %v281, %v292
    %295 = vst [vmem:[%s3] sm:$0x3] %v294
  $region17: #{_lambda_.13} parent=0 // pred_fallthru
    _
  // Predicated region
  $region18: #{_lambda_.13} parent=0 // pred_check
    _
  $region19: #{_lambda_.13} parent=0 // pred_check_branch
    %297 = sbr.rel (0) target = $region21
  $region20: #{_lambda_.13} parent=0 // pred_region
    _
  $region21: #{_lambda_.13} parent=0 // pred_fallthru
    _
  // Predicated region
  $region22: #{_lambda_.13} parent=0 // pred_check
    _
  $region23: #{_lambda_.13} parent=0 // pred_check_branch
    %299 = sbr.rel (0) target = $region25
  $region24: #{_lambda_.13} parent=0 // pred_region
    _
  $region25: #{_lambda_.13} parent=0 // pred_fallthru
    _
  // Predicated region
  $region26: #{_lambda_.13} parent=0 // pred_check
    _
  $region27: #{_lambda_.13} parent=0 // pred_check_branch
    %301 = sbr.rel (0) target = $region29
  $region28: #{_lambda_.13} parent=0 // pred_region
    _
  $region29: #{_lambda_.13} parent=0 // pred_fallthru
    _
  // Predicated region
  $region30: #{_lambda_.13} parent=0 // pred_check
    _
  $region31: #{_lambda_.13} parent=0 // pred_check_branch
    %303 = sbr.rel (0) target = $region33
  $region32: #{_lambda_.13} parent=0 // pred_region
    _
  $region33: #{_lambda_.13} parent=0 // pred_fallthru
    _

// kernel: _lambda_.15
$region0: #{_lambda_.15}
  #allocation0 [shape = 'u32[]', space=smem, size = 0x4, offset = 0x4, fixed_abs, tag = 'smem constant byte address 0x4 - core index']
  #allocation1 [shape = 'u32[144,128]{1,0:T(1,128)}', space=vmem, size = 0x12000, scoped, tag = 'internal scratch']
  #allocation2 [shape = 'f32[8,128]{1,0:T(8,128)}', space=vmem, size = 0x1000, scoped, tag = 'scratch operand']
  %s0 = inlined_call_operand.vmem [shape: f32[8,1024], index: 0, kind: input, shape index: {}]
  %s1 = inlined_call_operand.vmem [shape: f32[1024,128], index: 1, kind: input, shape index: {}]
  %s2 = inlined_call_operand.vmem [shape: f32[1,128], index: 2, kind: input, shape index: {}]
  %s3 = inlined_call_operand.vmem [shape: f32[8,128], index: 3, kind: output, shape index: {}]
  %s4 = sld [smem:[#allocation0]]
  $region53: #{_lambda_.15} parent=0
    _
  %s6 = ssub.s32 1, %s4
  %s7 = scalar_select 0, %s6, %s4
  loop: start=0, step=1, limit=4
  $region2: #{_lambda_.15} parent=0 // loop_pre_header
    _
  $region3: #{_lambda_.15} parent=0 // loop_header
    %s9 = sphi 0, %s13
    %p10 = scmp.ge.s32.totalorder %s9, 4
    %s16 = sphi 0, %s28
    %s17 = sphi 0, %s24
    %s18 = sphi 0, %s16
    %s19 = sphi 0, %s17
    %s20 = sphi 0, %s18
    %s21 = sphi 0, %s19
    %s33 = sphi 0, %s35
    %s36 = sphi 0, %s33
    %s37 = sphi 0, %s36
    %s53 = sphi 0, %s37
    %s59 = sphi 0, %s61
    %s62 = sphi 0, %s59
    %s63 = sphi 0, %s62
    %s79 = sphi 0, %s63
    %s83 = sphi 0, %s83
    %s85 = sphi 0, %s83
    %s86 = sphi 0, %s85
    %s100 = sphi 0, %s86
    %s106 = sphi 0, %s108
    %s109 = sphi 0, %s106
    %s110 = sphi 0, %s109
    %s126 = sphi 0, %s110
  $region4: #{_lambda_.15} parent=0 // loop_header_branch
    %12 = sbr.rel (%p10) target = $region8
  $region5: #{_lambda_.15} parent=0 // loop_body
    %s14 = ssub.s32 %s9, 1
    %s15 = ssub.s32 %s9, 2
    %s22 = sadd.s32 1, %s17
    %p23 = scmp.ge.s32.totalorder %s22, 2
    %s24 = scalar_select %p23, 0, %s22
    %s25 = sadd.s32 1, %s16
    %s26 = scalar_select %p23, %s25, %s16
    %p27 = scmp.ge.s32.totalorder %s26, 1
    %s28 = scalar_select %p27, 0, %s26
    %s29 = ssub.s32 %s16, %s28
    %s30 = ssub.s32 %s17, %s24
    %s31 = sor.u32 %s29, %s30
    %p32 = scmp.eq.s32.totalorder %s31, 0
    %s34 = sadd.s32 %s33, 1
    %s35 = scalar_select %p32, %s33, %s34
    %p38 = pneg %p32
    %p39 = scmp.eq.s32.totalorder %s9, 1
    %p40 = por %p38, %p39
    %p41 = scmp.ne.s32.totalorder %s33, %s36
    %p42 = scmp.eq.s32.totalorder %s9, 0
    %p43 = por %p41, %p42
    %p44 = scmp.ne.s32.totalorder %s33, %s36
    %p45 = scmp.eq.s32.totalorder %s14, 1
    %p46 = por %p44, %p45
    %p47 = scmp.ne.s32.totalorder %s36, %s37
    %p48 = scmp.eq.s32.totalorder %s14, 0
    %p49 = por %p47, %p48
    %p50 = scmp.ne.s32.totalorder %s36, %s37
    %p51 = scmp.eq.s32.totalorder %s15, 1
    %p52 = por %p50, %p51
    %p54 = scmp.ne.s32.totalorder %s37, %s53
    %p55 = scmp.eq.s32.totalorder %s15, 0
    %p56 = por %p54, %p55
    %s57 = ssub.s32 %s17, %s24
    %p58 = scmp.eq.s32.totalorder %s57, 0
    %s60 = sadd.s32 %s59, 1
    %s61 = scalar_select %p58, %s59, %s60
    %p64 = pneg %p58
    %p65 = scmp.eq.s32.totalorder %s9, 1
    %p66 = por %p64, %p65
    %p67 = scmp.ne.s32.totalorder %s59, %s62
    %p68 = scmp.eq.s32.totalorder %s9, 0
    %p69 = por %p67, %p68
    %p70 = scmp.ne.s32.totalorder %s59, %s62
    %p71 = scmp.eq.s32.totalorder %s14, 1
    %p72 = por %p70, %p71
    %p73 = scmp.ne.s32.totalorder %s62, %s63
    %p74 = scmp.eq.s32.totalorder %s14, 0
    %p75 = por %p73, %p74
    %p76 = scmp.ne.s32.totalorder %s62, %s63
    %p77 = scmp.eq.s32.totalorder %s15, 1
    %p78 = por %p76, %p77
    %p80 = scmp.ne.s32.totalorder %s63, %s79
    %p81 = scmp.eq.s32.totalorder %s15, 0
    %p82 = por %p80, %p81
    %s84 = sadd.s32 %s83, 1
    %p87 = scmp.eq.s32.totalorder %s9, 1
    %p88 = scmp.ne.s32.totalorder %s83, %s85
    %p89 = scmp.eq.s32.totalorder %s9, 0
    %p90 = por %p88, %p89
    %p91 = scmp.ne.s32.totalorder %s83, %s85
    %p92 = scmp.eq.s32.totalorder %s14, 1
    %p93 = por %p91, %p92
    %p94 = scmp.ne.s32.totalorder %s85, %s86
    %p95 = scmp.eq.s32.totalorder %s14, 0
    %p96 = por %p94, %p95
    %p97 = scmp.ne.s32.totalorder %s85, %s86
    %p98 = scmp.eq.s32.totalorder %s15, 1
    %p99 = por %p97, %p98
    %p101 = scmp.ne.s32.totalorder %s86, %s100
    %p102 = scmp.eq.s32.totalorder %s15, 0
    %p103 = por %p101, %p102
    %s104 = ssub.s32 %s16, %s28
    %p105 = scmp.eq.s32.totalorder %s104, 0
    %s107 = sadd.s32 %s106, 1
    %s108 = scalar_select %p105, %s106, %s107
    %p111 = pneg %p105
    %p112 = scmp.eq.s32.totalorder %s9, 1
    %p113 = por %p111, %p112
    %p114 = scmp.ne.s32.totalorder %s106, %s109
    %p115 = scmp.eq.s32.totalorder %s9, 0
    %p116 = por %p114, %p115
    %p117 = scmp.ne.s32.totalorder %s106, %s109
    %p118 = scmp.eq.s32.totalorder %s14, 1
    %p119 = por %p117, %p118
    %p120 = scmp.ne.s32.totalorder %s109, %s110
    %p121 = scmp.eq.s32.totalorder %s14, 0
    %p122 = por %p120, %p121
    %p123 = scmp.ne.s32.totalorder %s109, %s110
    %p124 = scmp.eq.s32.totalorder %s15, 1
    %p125 = por %p123, %p124
    %p127 = scmp.ne.s32.totalorder %s110, %s126
    %p128 = scmp.eq.s32.totalorder %s15, 0
    %p129 = por %p127, %p128
    %p130 = scmp.le.s32.totalorder 1, %s9
    %p131 = scmp.lt.s32.totalorder %s9, 3
    %p132 = pnand %p130, %p131
    %p133 = pneg %p132
    // Predicated region
    $region9: #{_lambda_.15} parent=5 // pred_check
      _
    $region10: #{_lambda_.15} parent=5 // pred_check_branch
      %135 = sbr.rel (%p132) target = $region12
    $region11: #{_lambda_.15} parent=5 // pred_region
      %s136 = ssub.s32 %s9, 1
      // Predicated region
      $region13: #{_lambda_.15} parent=11 // pred_check
        %p137 = pneg %p96
      $region14: #{_lambda_.15} parent=11 // pred_check_branch
        %139 = sbr.rel (%p137) target = $region16
      $region15: #{_lambda_.15} parent=11 // pred_region
        _
      $region16: #{_lambda_.15} parent=11 // pred_fallthru
        _
    $region12: #{_lambda_.15} parent=5 // pred_fallthru
      _
    %p140 = scmp.lt.s32.totalorder %s9, 2
    // Predicated region
    $region17: #{_lambda_.15} parent=5 // pred_check
      %p141 = pneg %p140
    $region18: #{_lambda_.15} parent=5 // pred_check_branch
      %143 = sbr.rel (%p141) target = $region20
    $region19: #{_lambda_.15} parent=5 // pred_region
      // Predicated region
      $region21: #{_lambda_.15} parent=19 // pred_check
        %p144 = pneg %p43
      $region22: #{_lambda_.15} parent=19 // pred_check_branch
        %146 = sbr.rel (%p144) target = $region24
      $region23: #{_lambda_.15} parent=19 // pred_region
        %s147 = smul.u32 4, %s17
        %p148 = scmp.lt.s32.totalorder %s16, 0
        %s149 = scalar_select %p148, %s16, 0
        %p150 = scmp.lt.s32.totalorder %s147, 7
        %s151 = scalar_select %p150, %s147, 7
        %s152 = smul.addr %s149, 8
        %s153 = sadd.s32 %s151, %s152
        %s154 = smul.addr %s153, 8
        %s155 = scalar_lea.vmem %s0, %s154
        %s156 = smul.u32 4, %s17
      $region24: #{_lambda_.15} parent=19 // pred_fallthru
        _
      // Predicated region
      $region25: #{_lambda_.15} parent=19 // pred_check
        %p157 = pneg %p69
      $region26: #{_lambda_.15} parent=19 // pred_check_branch
        %159 = sbr.rel (%p157) target = $region28
      $region27: #{_lambda_.15} parent=19 // pred_region
        %s160 = smul.u32 64, %s17
        %p161 = scmp.lt.s32.totalorder %s160, 127
        %s162 = scalar_select %p161, %s160, 127
        %s163 = smul.addr %s162, 8
        %s164 = scalar_lea.vmem %s1, %s163
        %s165 = smul.u32 64, %s17
      $region28: #{_lambda_.15} parent=19 // pred_fallthru
        _
    $region20: #{_lambda_.15} parent=5 // pred_fallthru
      _
    %p166 = scmp.le.s32.totalorder 1, %s9
    %p167 = scmp.lt.s32.totalorder %s9, 3
    %p168 = pnand %p166, %p167
    %p169 = pneg %p168
    // Predicated region
    $region29: #{_lambda_.15} parent=5 // pred_check
      _
    $region30: #{_lambda_.15} parent=5 // pred_check_branch
      %171 = sbr.rel (%p168) target = $region32
    $region31: #{_lambda_.15} parent=5 // pred_region
      %s172 = ssub.s32 %s9, 1
      %s173 = smul.u32 4, %s19
      %p174 = scmp.lt.s32.totalorder %s18, 0
      %s175 = scalar_select %p174, %s18, 0
      %p176 = scmp.lt.s32.totalorder %s173, 7
      %s177 = scalar_select %p176, %s173, 7
      %s178 = smul.addr %s175, 8
      %s179 = sadd.s32 %s177, %s178
      %s180 = smul.addr %s179, 8
      %s181 = scalar_lea.vmem %s0, %s180
      %p182 = pneg %p49
      %p183 = pneg %p46
      %s184 = smul.u32 64, %s19
      %p185 = scmp.lt.s32.totalorder %s184, 127
      %s186 = scalar_select %p185, %s184, 127
      %s187 = smul.addr %s186, 8
      %s188 = scalar_lea.vmem %s1, %s187
      %p189 = pneg %p75
      %p190 = pneg %p72
      %p191 = pneg %p96
      %p192 = pneg %p93
      %p193 = pneg %p122
      %p194 = pneg %p119
      %p195 = scmp.lt.s32.totalorder %s18, 0
      %s196 = scalar_select %p195, %s18, 0
      %s197 = smul.addr %s196, 8
      %s198 = scalar_lea.vmem %s3, %s197
      %s199 = smul.u32 4, %s19
      %p200 = scmp.lt.s32.totalorder %s18, 0
      %s201 = scalar_select %p200, %s18, 0
      %p202 = scmp.lt.s32.totalorder %s199, 7
      %s203 = scalar_select %p202, %s199, 7
      %s204 = smul.addr %s201, 8
      %s205 = sadd.s32 %s203, %s204
      %s206 = smul.addr %s205, 8
      %s207 = scalar_lea.vmem %s0, %s206
      %s208 = smul.u32 4, %s19
      %s209 = smul.u32 64, %s19
      %p210 = scmp.lt.s32.totalorder %s209, 127
      %s211 = scalar_select %p210, %s209, 127
      %s212 = smul.addr %s211, 8
      %s213 = scalar_lea.vmem %s1, %s212
      %s214 = smul.u32 64, %s19
      %p215 = scmp.lt.s32.totalorder %s18, 0
      %s216 = scalar_select %p215, %s18, 0
      %s217 = smul.addr %s216, 8
      %s218 = scalar_lea.vmem %s3, %s217
      %p219 = scmp.eq.s32.totalorder %s19, 0
      // Predicated region
      $region33: #{_lambda_.15} parent=31 // pred_check
        %p220 = pneg %p219
      $region34: #{_lambda_.15} parent=31 // pred_check_branch
        %222 = sbr.rel (%p220) target = $region36
      $region35: #{_lambda_.15} parent=31 // pred_region
        %223 = vst [vmem:[#allocation2] sm:$0xff] 0.0
      $region36: #{_lambda_.15} parent=31 // pred_fallthru
        _
      %v224 = vld [vmem:[#allocation2] sm:$0xff]
      %v225 = vld [vmem:[%s207] sm:$0xff]
      %v226 = vld [vmem:[%s207 + $0x8] sm:$0xff]
      %v227 = vld [vmem:[%s207 + $0x10] sm:$0xff]
      %v228 = vld [vmem:[%s207 + $0x18] sm:$0xff]
      %v229 = vld [vmem:[%s213] sm:$0xff]
      %v230 = vld [vmem:[%s213 + $0x8] sm:$0xff]
      %v231 = vld [vmem:[%s213 + $0x10] sm:$0xff]
      %v232 = vld [vmem:[%s213 + $0x18] sm:$0xff]
      %v233 = vld [vmem:[%s213 + $0x20] sm:$0xff]
      %v234 = vld [vmem:[%s213 + $0x28] sm:$0xff]
      %v235 = vld [vmem:[%s213 + $0x30] sm:$0xff]
      %v236 = vld [vmem:[%s213 + $0x38] sm:$0xff]
      %v237 = vld [vmem:[%s213 + $0x40] sm:$0xff]
      %v238 = vld [vmem:[%s213 + $0x48] sm:$0xff]
      %v239 = vld [vmem:[%s213 + $0x50] sm:$0xff]
      %v240 = vld [vmem:[%s213 + $0x58] sm:$0xff]
      %v241 = vld [vmem:[%s213 + $0x60] sm:$0xff]
      %v242 = vld [vmem:[%s213 + $0x68] sm:$0xff]
      %v243 = vld [vmem:[%s213 + $0x70] sm:$0xff]
      %v244 = vld [vmem:[%s213 + $0x78] sm:$0xff]
      %v245 = vld [vmem:[%s213 + $0x80] sm:$0xff]
      %v246 = vld [vmem:[%s213 + $0x88] sm:$0xff]
      %v247 = vld [vmem:[%s213 + $0x90] sm:$0xff]
      %v248 = vld [vmem:[%s213 + $0x98] sm:$0xff]
      %v249 = vld [vmem:[%s213 + $0xa0] sm:$0xff]
      %v250 = vld [vmem:[%s213 + $0xa8] sm:$0xff]
      %v251 = vld [vmem:[%s213 + $0xb0] sm:$0xff]
      %v252 = vld [vmem:[%s213 + $0xb8] sm:$0xff]
      %v253 = vld [vmem:[%s213 + $0xc0] sm:$0xff]
      %v254 = vld [vmem:[%s213 + $0xc8] sm:$0xff]
      %v255 = vld [vmem:[%s213 + $0xd0] sm:$0xff]
      %v256 = vld [vmem:[%s213 + $0xd8] sm:$0xff]
      %v257 = vld [vmem:[%s213 + $0xe0] sm:$0xff]
      %v258 = vld [vmem:[%s213 + $0xe8] sm:$0xff]
      %v259 = vld [vmem:[%s213 + $0xf0] sm:$0xff]
      %v260 = vld [vmem:[%s213 + $0xf8] sm:$0xff]
      %v261 = vld [vmem:[%s213 + $0x100] sm:$0xff]
      %v262 = vld [vmem:[%s213 + $0x108] sm:$0xff]
      %v263 = vld [vmem:[%s213 + $0x110] sm:$0xff]
      %v264 = vld [vmem:[%s213 + $0x118] sm:$0xff]
      %v265 = vld [vmem:[%s213 + $0x120] sm:$0xff]
      %v266 = vld [vmem:[%s213 + $0x128] sm:$0xff]
      %v267 = vld [vmem:[%s213 + $0x130] sm:$0xff]
      %v268 = vld [vmem:[%s213 + $0x138] sm:$0xff]
      %v269 = vld [vmem:[%s213 + $0x140] sm:$0xff]
      %v270 = vld [vmem:[%s213 + $0x148] sm:$0xff]
      %v271 = vld [vmem:[%s213 + $0x150] sm:$0xff]
      %v272 = vld [vmem:[%s213 + $0x158] sm:$0xff]
      %v273 = vld [vmem:[%s213 + $0x160] sm:$0xff]
      %v274 = vld [vmem:[%s213 + $0x168] sm:$0xff]
      %v275 = vld [vmem:[%s213 + $0x170] sm:$0xff]
      %v276 = vld [vmem:[%s213 + $0x178] sm:$0xff]
      %v277 = vld [vmem:[%s213 + $0x180] sm:$0xff]
      %v278 = vld [vmem:[%s213 + $0x188] sm:$0xff]
      %v279 = vld [vmem:[%s213 + $0x190] sm:$0xff]
      %v280 = vld [vmem:[%s213 + $0x198] sm:$0xff]
      %v281 = vld [vmem:[%s213 + $0x1a0] sm:$0xff]
      %v282 = vld [vmem:[%s213 + $0x1a8] sm:$0xff]
      %v283 = vld [vmem:[%s213 + $0x1b0] sm:$0xff]
      %v284 = vld [vmem:[%s213 + $0x1b8] sm:$0xff]
      %v285 = vld [vmem:[%s213 + $0x1c0] sm:$0xff]
      %v286 = vld [vmem:[%s213 + $0x1c8] sm:$0xff]
      %v287 = vld [vmem:[%s213 + $0x1d0] sm:$0xff]
      %v288 = vld [vmem:[%s213 + $0x1d8] sm:$0xff]
      %v289 = vld [vmem:[%s213 + $0x1e0] sm:$0xff]
      %v290 = vld [vmem:[%s213 + $0x1e8] sm:$0xff]
      %v291 = vld [vmem:[%s213 + $0x1f0] sm:$0xff]
      %v292 = vld [vmem:[%s213 + $0x1f8] sm:$0xff]
      %293 = vmatprep.subr.mxu0 0.0
      %294 = vmatpush1.msra.mxu0 %v229
      %295 = vmatprep.subr.mxu0 0.0
      %296 = vmatpush1.msra.mxu0 %v230
      %297 = vmatprep.subr.mxu0 0.0
      %298 = vmatpush1.msra.mxu0 %v231
      %299 = vmatprep.subr.mxu0 0.0
      %300 = vmatpush1.msra.mxu0 %v232
      %301 = vmatprep.subr.mxu0 0.0
      %302 = vmatpush1.msra.mxu0 %v233
      %303 = vmatprep.subr.mxu0 0.0
      %304 = vmatpush1.msra.mxu0 %v234
      %305 = vmatprep.subr.mxu0 0.0
      %306 = vmatpush1.msra.mxu0 %v235
      %307 = vmatprep.subr.mxu0 0.0
      %308 = vmatpush1.msra.mxu0 %v236
      %309 = vmatprep.subr.mxu0 0.0
      %310 = vmatpush1.msra.mxu0 %v237
      %311 = vmatprep.subr.mxu0 0.0
      %312 = vmatpush1.msra.mxu0 %v238
      %313 = vmatprep.subr.mxu0 0.0
      %314 = vmatpush1.msra.mxu0 %v239
      %315 = vmatprep.subr.mxu0 0.0
      %316 = vmatpush1.msra.mxu0 %v240
      %317 = vmatprep.subr.mxu0 0.0
      %318 = vmatpush1.msra.mxu0 %v241
      %319 = vmatprep.subr.mxu0 0.0
      %320 = vmatpush1.msra.mxu0 %v242
      %321 = vmatprep.subr.mxu0 0.0
      %322 = vmatpush1.msra.mxu0 %v243
      %323 = vmatprep.subr.mxu0 0.0
      %324 = vmatpush1.msra.mxu0 %v244
      %325 = vmatprep.subr.mxu0 0.0
      %326 = vmatpush1.msra.mxu0 %v245
      %327 = vmatprep.subr.mxu0 0.0
      %328 = vmatpush1.msra.mxu0 %v246
      %329 = vmatprep.subr.mxu0 0.0
      %330 = vmatpush1.msra.mxu0 %v247
      %331 = vmatprep.subr.mxu0 0.0
      %332 = vmatpush1.msra.mxu0 %v248
      %333 = vmatprep.subr.mxu0 0.0
      %334 = vmatpush1.msra.mxu0 %v249
      %335 = vmatprep.subr.mxu0 0.0
      %336 = vmatpush1.msra.mxu0 %v250
      %337 = vmatprep.subr.mxu0 0.0
      %338 = vmatpush1.msra.mxu0 %v251
      %339 = vmatprep.subr.mxu0 0.0
      %340 = vmatpush1.msra.mxu0 %v252
      %341 = vmatprep.subr.mxu0 0.0
      %342 = vmatpush1.msra.mxu0 %v253
      %343 = vmatprep.subr.mxu0 0.0
      %344 = vmatpush1.msra.mxu0 %v254
      %345 = vmatprep.subr.mxu0 0.0
      %346 = vmatpush1.msra.mxu0 %v255
      %347 = vmatprep.subr.mxu0 0.0
      %348 = vmatpush1.msra.mxu0 %v256
      %349 = vmatprep.subr.mxu0 0.0
      %350 = vmatpush1.msra.mxu0 %v257
      %351 = vmatprep.subr.mxu0 0.0
      %352 = vmatpush1.msra.mxu0 %v258
      %353 = vmatprep.subr.mxu0 0.0
      %354 = vmatpush1.msra.mxu0 %v259
      %355 = vmatprep.subr.mxu0 0.0
      %356 = vmatpush1.msra.mxu0 %v260
      %357 = vmatprep.mubr.f32.mxu0 %v226
      %358 = vmatmul.mubr.f32.gmra.mrb[0].mxu0 %v225
      %v359 = vpop.f32.mrb[0].mxu0
      %v360 = vadd.f32 0.0, %v359
      %v361 = vpop.f32.mrb[0].mxu0
      %362 = vdwg.mxu0
      %363 = vmatprep.subr.mxu0 0.0
      %364 = vmatpush1.msra.mxu0 %v261
      %365 = vmatprep.subr.mxu0 0.0
      %366 = vmatpush1.msra.mxu0 %v262
      %367 = vmatprep.subr.mxu0 0.0
      %368 = vmatpush1.msra.mxu0 %v263
      %369 = vmatprep.subr.mxu0 0.0
      %370 = vmatpush1.msra.mxu0 %v264
      %371 = vmatprep.subr.mxu0 0.0
      %372 = vmatpush1.msra.mxu0 %v265
      %373 = vmatprep.subr.mxu0 0.0
      %374 = vmatpush1.msra.mxu0 %v266
      %375 = vmatprep.subr.mxu0 0.0
      %376 = vmatpush1.msra.mxu0 %v267
      %377 = vmatprep.subr.mxu0 0.0
      %378 = vmatpush1.msra.mxu0 %v268
      %379 = vmatprep.subr.mxu0 0.0
      %380 = vmatpush1.msra.mxu0 %v269
      %381 = vmatprep.subr.mxu0 0.0
      %382 = vmatpush1.msra.mxu0 %v270
      %383 = vmatprep.subr.mxu0 0.0
      %384 = vmatpush1.msra.mxu0 %v271
      %385 = vmatprep.subr.mxu0 0.0
      %386 = vmatpush1.msra.mxu0 %v272
      %387 = vmatprep.subr.mxu0 0.0
      %388 = vmatpush1.msra.mxu0 %v273
      %389 = vmatprep.subr.mxu0 0.0
      %390 = vmatpush1.msra.mxu0 %v274
      %391 = vmatprep.subr.mxu0 0.0
      %392 = vmatpush1.msra.mxu0 %v275
      %393 = vmatprep.subr.mxu0 0.0
      %394 = vmatpush1.msra.mxu0 %v276
      %395 = vmatprep.subr.mxu0 0.0
      %396 = vmatpush1.msra.mxu0 %v277
      %397 = vmatprep.subr.mxu0 0.0
      %398 = vmatpush1.msra.mxu0 %v278
      %399 = vmatprep.subr.mxu0 0.0
      %400 = vmatpush1.msra.mxu0 %v279
      %401 = vmatprep.subr.mxu0 0.0
      %402 = vmatpush1.msra.mxu0 %v280
      %403 = vmatprep.subr.mxu0 0.0
      %404 = vmatpush1.msra.mxu0 %v281
      %405 = vmatprep.subr.mxu0 0.0
      %406 = vmatpush1.msra.mxu0 %v282
      %407 = vmatprep.subr.mxu0 0.0
      %408 = vmatpush1.msra.mxu0 %v283
      %409 = vmatprep.subr.mxu0 0.0
      %410 = vmatpush1.msra.mxu0 %v284
      %411 = vmatprep.subr.mxu0 0.0
      %412 = vmatpush1.msra.mxu0 %v285
      %413 = vmatprep.subr.mxu0 0.0
      %414 = vmatpush1.msra.mxu0 %v286
      %415 = vmatprep.subr.mxu0 0.0
      %416 = vmatpush1.msra.mxu0 %v287
      %417 = vmatprep.subr.mxu0 0.0
      %418 = vmatpush1.msra.mxu0 %v288
      %419 = vmatprep.subr.mxu0 0.0
      %420 = vmatpush1.msra.mxu0 %v289
      %421 = vmatprep.subr.mxu0 0.0
      %422 = vmatpush1.msra.mxu0 %v290
      %423 = vmatprep.subr.mxu0 0.0
      %424 = vmatpush1.msra.mxu0 %v291
      %425 = vmatprep.subr.mxu0 0.0
      %426 = vmatpush1.msra.mxu0 %v292
      %427 = vmatprep.mubr.f32.mxu0 %v228
      %428 = vmatmul.mubr.f32.gmra.mrb[0].mxu0 %v227
      %v429 = vpop.f32.mrb[0].mxu0
      %v430 = vadd.f32 %v360, %v429
      %v431 = vpop.f32.mrb[0].mxu0
      %432 = vdwg.mxu0
      %v433 = vadd.f32 %v224, %v430
      %434 = vst [vmem:[#allocation2] sm:$0xff] %v433
      %p435 = scmp.eq.s32.totalorder %s19, 1
      // Predicated region
      $region37: #{_lambda_.15} parent=31 // pred_check
        %p436 = pneg %p435
      $region38: #{_lambda_.15} parent=31 // pred_check_branch
        %438 = sbr.rel (%p436) target = $region40
      $region39: #{_lambda_.15} parent=31 // pred_region
        %v439 = vld [vmem:[#allocation2] sm:$0xff]
        %v440 = vld [vmem:[%s2] sm:$0x1]
        %v442 = vlaneseq
        %v443 = vshrl.u32 %v442, 7
        %v444 = vsub.s32 0, %v443
        %v445 = vrot.slane %v440, %v444
        %v447 = vadd.f32 %v439, %v445
        %448 = vst [vmem:[%s218] sm:$0xff] %v447
      $region40: #{_lambda_.15} parent=31 // pred_fallthru
        _
      %p449 = scmp.lt.s32.totalorder %s18, 0
      %s450 = scalar_select %p449, %s18, 0
      %s451 = smul.addr %s450, 8
      %s452 = scalar_lea.vmem %s3, %s451
      // Predicated region
      $region41: #{_lambda_.15} parent=31 // pred_check
        %p453 = pneg %p119
      $region42: #{_lambda_.15} parent=31 // pred_check_branch
        %455 = sbr.rel (%p453) target = $region44
      $region43: #{_lambda_.15} parent=31 // pred_region
        _
      $region44: #{_lambda_.15} parent=31 // pred_fallthru
        _
      // Predicated region
      $region45: #{_lambda_.15} parent=31 // pred_check
        %p456 = pneg %p119
      $region46: #{_lambda_.15} parent=31 // pred_check_branch
        %458 = sbr.rel (%p456) target = $region48
      $region47: #{_lambda_.15} parent=31 // pred_region
        %p459 = scmp.lt.s32.totalorder %s18, 0
        %s460 = scalar_select %p459, %s18, 0
        %s461 = smul.addr %s460, 8
        %s462 = scalar_lea.vmem %s3, %s461
      $region48: #{_lambda_.15} parent=31 // pred_fallthru
        _
    $region32: #{_lambda_.15} parent=5 // pred_fallthru
      _
    %p463 = scmp.le.s32.totalorder 2, %s9
    // Predicated region
    $region49: #{_lambda_.15} parent=5 // pred_check
      %p464 = pneg %p463
    $region50: #{_lambda_.15} parent=5 // pred_check_branch
      %466 = sbr.rel (%p464) target = $region52
    $region51: #{_lambda_.15} parent=5 // pred_region
      %s467 = ssub.s32 %s9, 2
    $region52: #{_lambda_.15} parent=5 // pred_fallthru
      _
  $region6: #{_lambda_.15} parent=0 // loop_footer
    %s13 = sadd.s32 1, %s9
  $region7: #{_lambda_.15} parent=0 // loop_footer_branch
    %8 = sbr.rel target = $region3
  $region8: #{_lambda_.15} parent=0 // loop_exit
    _

</llo_original>
